<compile_context>
chip_gen: v6e
topology: v6e:2x2x1
jax: 0.10.0
libtpu: 0.0.40
codegen_flags: <defaults>
</compile_context>

<pallas_src>
import functools

import jax
import jax.numpy as jnp
from jax.experimental import pallas as pl
from jax.experimental.pallas import tpu as pltpu


# ----------------------------------------------------------------------------
# Single fused per-sample kernel
# ----------------------------------------------------------------------------
def fused_kernel(p_ref, sw_ref, sb_ref, ew_ref, eb_ref,
                 dw_ref, db_ref, s1w_ref, s1b_ref, s2w_ref, s2b_ref,
                 phw_ref, phb_ref, f1w_ref, f1b_ref, f2w_ref, f2b_ref,
                 o_ref, pad_ref, *, H, W):
    C = dw_ref.shape[-1]
    bf16 = jnp.bfloat16

    # ---- stem conv (im2col matmul) + SiLU --------------------------------
    p = p_ref[0]                                                # (H*W, Kp) f32
    s = jnp.dot(p.astype(bf16), sw_ref[...],
                preferred_element_type=jnp.float32) + sb_ref[...]
    s = s * jax.nn.sigmoid(s)                                   # SiLU, f32

    # ---- MBConv expand 1x1 + SiLU ----------------------------------------
    e = jnp.dot(s.astype(bf16), ew_ref[...],
                preferred_element_type=jnp.float32) + eb_ref[...]
    e = e * jax.nn.sigmoid(e)                                   # (H*W, C) f32

    # ---- depthwise 3x3 + SiLU (halo kept entirely in VMEM scratch) -------
    pad_ref[...] = jnp.zeros_like(pad_ref)
    pad_ref[pl.ds(1, H), pl.ds(1, W), :] = e.reshape(H, W, C)
    xp = pad_ref[...]                                           # (H+2, W+2, C)
    w = dw_ref[...]
    # Hoist the 3 W-shifted (sublane-axis) views out of the 9-tap loop;
    # the inner slices are then major-axis (H) only.
    xw = [xp[:, kw:kw + W, :] for kw in range(3)]
    acc = jnp.zeros((H, W, C), jnp.float32)
    for kh in range(3):
        for kw in range(3):
            acc = acc + xw[kw][kh:kh + H, :, :] * w[kh, kw, :]
    acc = acc + db_ref[...]
    acc = acc * jax.nn.sigmoid(acc)                             # SiLU, f32

    # ---- squeeze-excite (intermediates never leave VMEM) -----------------
    flat = acc.reshape(H * W, C)
    pooled = jnp.mean(flat, axis=0, keepdims=True)              # (1, C)
    g = jnp.dot(pooled, s1w_ref[...],
                preferred_element_type=jnp.float32) + s1b_ref[...]
    g = g * jax.nn.sigmoid(g)                                   # SiLU
    g = jnp.dot(g, s2w_ref[...],
                preferred_element_type=jnp.float32) + s2b_ref[...]
    g = jax.nn.sigmoid(g)                                       # gates (1, C)
    y = flat * g                                                # channel scale

    # ---- fused (project @ head) 1x1 + SiLU -> GAP ------------------------
    f = jnp.dot(y.astype(bf16), phw_ref[...],
                preferred_element_type=jnp.float32) + phb_ref[...]
    f = f * jax.nn.sigmoid(f)                                   # (H*W, F)
    feat = jnp.mean(f, axis=0, keepdims=True)                   # GAP -> (1, F)

    # ---- classifier: fc1 + ReLU -> fc2 (lane-dense padded classes) -------
    h = jnp.dot(feat.astype(bf16), f1w_ref[...],
                preferred_element_type=jnp.float32) + f1b_ref[...]
    h = jnp.maximum(h, 0.0)
    logits = jnp.dot(h.astype(bf16), f2w_ref[...],
                     preferred_element_type=jnp.float32) + f2b_ref[...]
    o_ref[...] = logits[None].astype(o_ref.dtype)               # (1, 1, Npad)


def fused_efficientnet(patches, kp, *, H, W, num_classes):
    N, M, K = patches.shape
    C1 = kp["stem_w"].shape[1]
    C2 = kp["exp_w"].shape[1]
    Cr = kp["se1_w"].shape[1]
    F = kp["ph_w"].shape[1]
    Hd = kp["fc1_w"].shape[1]
    Npad = kp["fc2_w"].shape[1]

    def rep(shape):
        return pl.BlockSpec(shape, lambda n, _s=shape: (0,) * len(_s))

    out = pl.pallas_call(
        functools.partial(fused_kernel, H=H, W=W),
        out_shape=jax.ShapeDtypeStruct((N, 1, Npad), jnp.float32),
        grid=(N,),
        in_specs=[
            pl.BlockSpec((1, M, K), lambda n: (n, 0, 0)),   # per-sample patches
            rep((K, C1)), rep((1, C1)),                      # stem
            rep((C1, C2)), rep((1, C2)),                     # expand
            rep((3, 3, C2)), rep((1, C2)),                   # depthwise
            rep((C2, Cr)), rep((1, Cr)),                     # SE fc1
            rep((Cr, C2)), rep((1, C2)),                     # SE fc2
            rep((C2, F)), rep((1, F)),                       # fused proj@head
            rep((F, Hd)), rep((1, Hd)),                      # classifier fc1
            rep((Hd, Npad)), rep((1, Npad)),                 # classifier fc2
        ],
        out_specs=pl.BlockSpec((1, 1, Npad), lambda n: (n, 0, 0)),
        scratch_shapes=[pltpu.VMEM((H + 2, W + 2, C2), jnp.float32)],
        compiler_params=pltpu.CompilerParams(
            dimension_semantics=("parallel",)),
    )(patches,
      kp["stem_w"], kp["stem_b"],
      kp["exp_w"], kp["exp_b"],
      kp["dw_w"], kp["dw_b"],
      kp["se1_w"], kp["se1_b"],
      kp["se2_w"], kp["se2_b"],
      kp["ph_w"], kp["ph_b"],
      kp["fc1_w"], kp["fc1_b"],
      kp["fc2_w"], kp["fc2_b"])
    return out.reshape(N, Npad)[:, :num_classes]


# ----------------------------------------------------------------------------
# Parameter construction (deterministic, synthetic) and kernel-ready prep
# ----------------------------------------------------------------------------
def init_params(key, c_in=3, num_classes=10):
    dims = dict(stem=16, expand=64, se_red=16, proj=32, feat=128, hidden=512)

    def nrm(k, shape, fan_in):
        return (jax.random.normal(k, shape, jnp.float32) /
                jnp.sqrt(fan_in)).astype(jnp.float32)

    keys = jax.random.split(key, 12)
    p = {}
    # Stem 3x3 s2 conv, im2col-ready (kh*kw*Cin, Cout); BN folded into bias.
    p["stem_w"] = nrm(keys[0], (3 * 3 * c_in, dims["stem"]), 3 * 3 * c_in)
    p["stem_b"] = jnp.zeros((dims["stem"],), jnp.float32)
    p["exp_w"] = nrm(keys[1], (dims["stem"], dims["expand"]), dims["stem"])
    p["exp_b"] = jnp.zeros((dims["expand"],), jnp.float32)
    p["dw_w"] = nrm(keys[2], (3, 3, dims["expand"]), 9)
    p["dw_b"] = jnp.zeros((dims["expand"],), jnp.float32)
    p["se1_w"] = nrm(keys[3], (dims["expand"], dims["se_red"]), dims["expand"])
    p["se1_b"] = jnp.zeros((dims["se_red"],), jnp.float32)
    p["se2_w"] = nrm(keys[4], (dims["se_red"], dims["expand"]), dims["se_red"])
    p["se2_b"] = jnp.zeros((dims["expand"],), jnp.float32)
    p["proj_w"] = nrm(keys[5], (dims["expand"], dims["proj"]), dims["expand"])
    p["proj_b"] = jnp.zeros((dims["proj"],), jnp.float32)
    p["head_w"] = nrm(keys[6], (dims["proj"], dims["feat"]), dims["proj"])
    p["head_b"] = jnp.zeros((dims["feat"],), jnp.float32)
    # classifier: Dropout -> Linear(feat,512) -> ReLU -> Dropout -> Linear(512,nc)
    p["fc1_w"] = nrm(keys[7], (dims["feat"], dims["hidden"]), dims["feat"])
    p["fc1_b"] = nrm(keys[8], (dims["hidden"],), dims["feat"])
    p["fc2_w"] = nrm(keys[9], (dims["hidden"], num_classes), dims["hidden"])
    p["fc2_b"] = nrm(keys[10], (num_classes,), dims["hidden"])
    return p


def prepare_params(p):
    """One-time prep: fold proj@head, pad K and classes, cast MXU weights bf16."""
    bf = jnp.bfloat16
    k_raw = p["stem_w"].shape[0]
    kp = ((k_raw + 7) // 8) * 8                                  # 27 -> 32
    stem_w = jnp.pad(p["stem_w"], ((0, kp - k_raw), (0, 0)))
    # project 1x1 (linear) followed by head 1x1 (before its SiLU) fold exactly.
    ph_w = p["proj_w"] @ p["head_w"]                             # (64, 128)
    ph_b = p["proj_b"] @ p["head_w"] + p["head_b"]               # (128,)
    nc = p["fc2_w"].shape[1]
    npad = max(128, ((nc + 127) // 128) * 128)                   # lane-dense logits
    fc2_w = jnp.pad(p["fc2_w"], ((0, 0), (0, npad - nc)))
    fc2_b = jnp.pad(p["fc2_b"], (0, npad - nc))
    return dict(
        stem_w=stem_w.astype(bf), stem_b=p["stem_b"].reshape(1, -1),
        exp_w=p["exp_w"].astype(bf), exp_b=p["exp_b"].reshape(1, -1),
        dw_w=p["dw_w"], dw_b=p["dw_b"].reshape(1, -1),
        se1_w=p["se1_w"], se1_b=p["se1_b"].reshape(1, -1),
        se2_w=p["se2_w"], se2_b=p["se2_b"].reshape(1, -1),
        ph_w=ph_w.astype(bf), ph_b=ph_b.reshape(1, -1),
        fc1_w=p["fc1_w"].astype(bf), fc1_b=p["fc1_b"].reshape(1, -1),
        fc2_w=fc2_w.astype(bf), fc2_b=fc2_b.reshape(1, -1),
    )


# ----------------------------------------------------------------------------
# Forward pass (EfficientNetClassifier.forward) — one fused Pallas kernel
# ----------------------------------------------------------------------------
def efficientnet_classifier_forward(kp, x_nchw, *, num_classes=10):
    x = x_nchw.astype(jnp.float32)
    # Stem patch gather (3x3, stride 2, pad 1) fused with the NCHW->NHWC
    # transpose into a single XLA op (channel-major (c, kh, kw) feature order).
    patches = jax.lax.conv_general_dilated_patches(
        x, filter_shape=(3, 3), window_strides=(2, 2),
        padding=((1, 1), (1, 1)),
        dimension_numbers=("NCHW", "OIHW", "NHWC"),
        precision=jax.lax.Precision.HIGHEST)                     # (N,Ho,Wo,27)
    N, Ho, Wo, K = patches.shape
    kpad = kp["stem_w"].shape[0]                                 # 32
    patches = jnp.pad(patches.reshape(N, Ho * Wo, K),
                      ((0, 0), (0, 0), (0, kpad - K)))
    return fused_efficientnet(patches, kp, H=Ho, W=Wo, num_classes=num_classes)


if __name__ == "__main__":
    key = jax.random.PRNGKey(0)
    pkey, xkey = jax.random.split(key)
    params = init_params(pkey, c_in=3, num_classes=10)
    kparams = prepare_params(params)                 # fold/pad/cast once
    # PyTorch-style NCHW input, small shapes.
    x = jax.random.normal(xkey, (2, 3, 32, 32), jnp.float32)

    fwd = jax.jit(functools.partial(efficientnet_classifier_forward, kparams,
                                    num_classes=10))
    out = fwd(x)
    jax.block_until_ready(out)
    assert out.shape == (2, 10) and out.dtype == jnp.float32
    assert bool(jnp.all(jnp.isfinite(out)))
    print("KERNEL_OK")
</pallas_src>

<mosaic_0001>
module attributes {stable_mosaic.version = 11 : i64} {
  func.func @fused_kernel(%arg0: i32, %arg1: memref<1x256x32xf32, #tpu.memory_space<vmem>>, %arg2: memref<32x16xbf16, #tpu.memory_space<vmem>>, %arg3: memref<1x16xf32, #tpu.memory_space<vmem>>, %arg4: memref<16x64xbf16, #tpu.memory_space<vmem>>, %arg5: memref<1x64xf32, #tpu.memory_space<vmem>>, %arg6: memref<3x3x64xf32, #tpu.memory_space<vmem>>, %arg7: memref<1x64xf32, #tpu.memory_space<vmem>>, %arg8: memref<64x16xf32, #tpu.memory_space<vmem>>, %arg9: memref<1x16xf32, #tpu.memory_space<vmem>>, %arg10: memref<16x64xf32, #tpu.memory_space<vmem>>, %arg11: memref<1x64xf32, #tpu.memory_space<vmem>>, %arg12: memref<64x128xbf16, #tpu.memory_space<vmem>>, %arg13: memref<1x128xf32, #tpu.memory_space<vmem>>, %arg14: memref<128x512xbf16, #tpu.memory_space<vmem>>, %arg15: memref<1x512xf32, #tpu.memory_space<vmem>>, %arg16: memref<512x128xbf16, #tpu.memory_space<vmem>>, %arg17: memref<1x128xf32, #tpu.memory_space<vmem>>, %arg18: memref<1x1x128xf32, #tpu.memory_space<vmem>>, %arg19: memref<18x18x64xf32, #tpu.memory_space<vmem>>) attributes {dimension_semantics = [#tpu.dimension_semantics<parallel>], iteration_bounds = array<i64: 2>, scalar_prefetch = 0 : i64, scratch_operands = 1 : i64, tpu.core_type = #tpu.core_type<tc>, window_params = [{transform_indices = @transform_0, window_bounds = array<i64: 1, 256, 32>}, {pipeline_mode = #tpu.pipeline_mode<synchronous>, transform_indices = @transform_1, window_bounds = array<i64: 32, 16>}, {pipeline_mode = #tpu.pipeline_mode<synchronous>, transform_indices = @transform_2, window_bounds = array<i64: 1, 16>}, {pipeline_mode = #tpu.pipeline_mode<synchronous>, transform_indices = @transform_3, window_bounds = array<i64: 16, 64>}, {pipeline_mode = #tpu.pipeline_mode<synchronous>, transform_indices = @transform_4, window_bounds = array<i64: 1, 64>}, {pipeline_mode = #tpu.pipeline_mode<synchronous>, transform_indices = @transform_5, window_bounds = array<i64: 3, 3, 64>}, {pipeline_mode = #tpu.pipeline_mode<synchronous>, transform_indices = @transform_6, window_bounds = array<i64: 1, 64>}, {pipeline_mode = #tpu.pipeline_mode<synchronous>, transform_indices = @transform_7, window_bounds = array<i64: 64, 16>}, {pipeline_mode = #tpu.pipeline_mode<synchronous>, transform_indices = @transform_8, window_bounds = array<i64: 1, 16>}, {pipeline_mode = #tpu.pipeline_mode<synchronous>, transform_indices = @transform_9, window_bounds = array<i64: 16, 64>}, {pipeline_mode = #tpu.pipeline_mode<synchronous>, transform_indices = @transform_10, window_bounds = array<i64: 1, 64>}, {pipeline_mode = #tpu.pipeline_mode<synchronous>, transform_indices = @transform_11, window_bounds = array<i64: 64, 128>}, {pipeline_mode = #tpu.pipeline_mode<synchronous>, transform_indices = @transform_12, window_bounds = array<i64: 1, 128>}, {pipeline_mode = #tpu.pipeline_mode<synchronous>, transform_indices = @transform_13, window_bounds = array<i64: 128, 512>}, {pipeline_mode = #tpu.pipeline_mode<synchronous>, transform_indices = @transform_14, window_bounds = array<i64: 1, 512>}, {pipeline_mode = #tpu.pipeline_mode<synchronous>, transform_indices = @transform_15, window_bounds = array<i64: 512, 128>}, {pipeline_mode = #tpu.pipeline_mode<synchronous>, transform_indices = @transform_16, window_bounds = array<i64: 1, 128>}, {transform_indices = @transform_17, window_bounds = array<i64: 1, 1, 128>}]} {
    %c0 = arith.constant 0 : index
    %c0_0 = arith.constant 0 : index
    %c0_1 = arith.constant 0 : index
    %0 = vector.load %arg1[%c0, %c0_0, %c0_1] : memref<1x256x32xf32, #tpu.memory_space<vmem>>, vector<1x256x32xf32>
    %1 = vector.shape_cast %0 : vector<1x256x32xf32> to vector<256x32xf32>
    %2 = arith.truncf %1 : vector<256x32xf32> to vector<256x32xbf16>
    %c0_2 = arith.constant 0 : index
    %c0_3 = arith.constant 0 : index
    %3 = vector.load %arg2[%c0_2, %c0_3] : memref<32x16xbf16, #tpu.memory_space<vmem>>, vector<32x16xbf16>
    %cst = arith.constant dense<0.000000e+00> : vector<256x16xf32>
    %4 = tpu.matmul %2, %3, %cst {dimension_numbers = #tpu.dot_dimension_numbers<[1], [0], [0], [1], [0, 0, 1, 1], [], []>} : vector<256x32xbf16>, vector<32x16xbf16>, vector<256x16xf32> -> vector<256x16xf32>
    %c0_4 = arith.constant 0 : index
    %c0_5 = arith.constant 0 : index
    %5 = vector.load %arg3[%c0_4, %c0_5] : memref<1x16xf32, #tpu.memory_space<vmem>>, vector<1x16xf32>
    %6 = vector.broadcast %5 : vector<1x16xf32> to vector<256x16xf32>
    %7 = arith.addf %4, %6 : vector<256x16xf32>
    %8 = arith.negf %7 : vector<256x16xf32>
    %9 = math.exp %8 : vector<256x16xf32>
    %cst_6 = arith.constant 1.000000e+00 : f32
    %10 = vector.broadcast %cst_6 : f32 to vector<256x16xf32>
    %11 = arith.addf %10, %9 : vector<256x16xf32>
    %12 = arith.divf %10, %11 : vector<256x16xf32>
    %13 = arith.mulf %7, %12 : vector<256x16xf32>
    %14 = arith.truncf %13 : vector<256x16xf32> to vector<256x16xbf16>
    %c0_7 = arith.constant 0 : index
    %c0_8 = arith.constant 0 : index
    %15 = vector.load %arg4[%c0_7, %c0_8] : memref<16x64xbf16, #tpu.memory_space<vmem>>, vector<16x64xbf16>
    %cst_9 = arith.constant dense<0.000000e+00> : vector<256x64xf32>
    %16 = tpu.matmul %14, %15, %cst_9 {dimension_numbers = #tpu.dot_dimension_numbers<[1], [0], [0], [1], [0, 0, 1, 1], [], []>} : vector<256x16xbf16>, vector<16x64xbf16>, vector<256x64xf32> -> vector<256x64xf32>
    %c0_10 = arith.constant 0 : index
    %c0_11 = arith.constant 0 : index
    %17 = vector.load %arg5[%c0_10, %c0_11] : memref<1x64xf32, #tpu.memory_space<vmem>>, vector<1x64xf32>
    %18 = vector.broadcast %17 : vector<1x64xf32> to vector<256x64xf32>
    %19 = arith.addf %16, %18 : vector<256x64xf32>
    %20 = arith.negf %19 : vector<256x64xf32>
    %21 = math.exp %20 : vector<256x64xf32>
    %cst_12 = arith.constant 1.000000e+00 : f32
    %22 = vector.broadcast %cst_12 : f32 to vector<256x64xf32>
    %23 = arith.addf %22, %21 : vector<256x64xf32>
    %24 = arith.divf %22, %23 : vector<256x64xf32>
    %25 = arith.mulf %19, %24 : vector<256x64xf32>
    %cst_13 = arith.constant 0.000000e+00 : f32
    %26 = vector.broadcast %cst_13 : f32 to vector<18x18x64xf32>
    %c0_14 = arith.constant 0 : index
    %c0_15 = arith.constant 0 : index
    %c0_16 = arith.constant 0 : index
    %27 = vector.load %arg19[%c0_14, %c0_15, %c0_16] : memref<18x18x64xf32, #tpu.memory_space<vmem>>, vector<18x18x64xf32>
    tpu.vector_store %arg19[%c0_14, %c0_15, %c0_16], %26 {strides = array<i32>} : memref<18x18x64xf32, #tpu.memory_space<vmem>>, vector<18x18x64xf32>,
    %28 = vector.shape_cast %25 : vector<256x64xf32> to vector<16x16x64xf32>
    %c1 = arith.constant 1 : index
    %c1_17 = arith.constant 1 : index
    %c0_18 = arith.constant 0 : index
    %29 = vector.load %arg19[%c1, %c1_17, %c0_18] : memref<18x18x64xf32, #tpu.memory_space<vmem>>, vector<16x16x64xf32>
    tpu.vector_store %arg19[%c1, %c1_17, %c0_18], %28 {strides = array<i32>} : memref<18x18x64xf32, #tpu.memory_space<vmem>>, vector<16x16x64xf32>,
    %c0_19 = arith.constant 0 : index
    %c0_20 = arith.constant 0 : index
    %c0_21 = arith.constant 0 : index
    %30 = vector.load %arg19[%c0_19, %c0_20, %c0_21] : memref<18x18x64xf32, #tpu.memory_space<vmem>>, vector<18x18x64xf32>
    %c0_22 = arith.constant 0 : index
    %c0_23 = arith.constant 0 : index
    %c0_24 = arith.constant 0 : index
    %31 = vector.load %arg6[%c0_22, %c0_23, %c0_24] : memref<3x3x64xf32, #tpu.memory_space<vmem>>, vector<3x3x64xf32>
    %32 = vector.extract_strided_slice %30 {offsets = [0, 0, 0], sizes = [18, 16, 64], strides = [1, 1, 1]} : vector<18x18x64xf32> to vector<18x16x64xf32>
    %33 = vector.extract_strided_slice %30 {offsets = [0, 1, 0], sizes = [18, 16, 64], strides = [1, 1, 1]} : vector<18x18x64xf32> to vector<18x16x64xf32>
    %34 = vector.extract_strided_slice %30 {offsets = [0, 2, 0], sizes = [18, 16, 64], strides = [1, 1, 1]} : vector<18x18x64xf32> to vector<18x16x64xf32>
    %cst_25 = arith.constant 0.000000e+00 : f32
    %35 = vector.broadcast %cst_25 : f32 to vector<16x16x64xf32>
    %36 = vector.extract_strided_slice %32 {offsets = [0, 0, 0], sizes = [16, 16, 64], strides = [1, 1, 1]} : vector<18x16x64xf32> to vector<16x16x64xf32>
    %37 = vector.extract_strided_slice %31 {offsets = [0, 0, 0], sizes = [1, 1, 64], strides = [1, 1, 1]} : vector<3x3x64xf32> to vector<1x1x64xf32>
    %38 = vector.shape_cast %37 : vector<1x1x64xf32> to vector<64xf32>
    %39 = vector.shape_cast %38 : vector<64xf32> to vector<1x1x64xf32>
    %40 = vector.broadcast %39 : vector<1x1x64xf32> to vector<16x16x64xf32>
    %41 = arith.mulf %36, %40 : vector<16x16x64xf32>
    %42 = arith.addf %35, %41 : vector<16x16x64xf32>
    %43 = vector.extract_strided_slice %33 {offsets = [0, 0, 0], sizes = [16, 16, 64], strides = [1, 1, 1]} : vector<18x16x64xf32> to vector<16x16x64xf32>
    %44 = vector.extract_strided_slice %31 {offsets = [0, 1, 0], sizes = [1, 1, 64], strides = [1, 1, 1]} : vector<3x3x64xf32> to vector<1x1x64xf32>
    %45 = vector.shape_cast %44 : vector<1x1x64xf32> to vector<64xf32>
    %46 = vector.shape_cast %45 : vector<64xf32> to vector<1x1x64xf32>
    %47 = vector.broadcast %46 : vector<1x1x64xf32> to vector<16x16x64xf32>
    %48 = arith.mulf %43, %47 : vector<16x16x64xf32>
    %49 = arith.addf %42, %48 : vector<16x16x64xf32>
    %50 = vector.extract_strided_slice %34 {offsets = [0, 0, 0], sizes = [16, 16, 64], strides = [1, 1, 1]} : vector<18x16x64xf32> to vector<16x16x64xf32>
    %51 = vector.extract_strided_slice %31 {offsets = [0, 2, 0], sizes = [1, 1, 64], strides = [1, 1, 1]} : vector<3x3x64xf32> to vector<1x1x64xf32>
    %52 = vector.shape_cast %51 : vector<1x1x64xf32> to vector<64xf32>
    %53 = vector.shape_cast %52 : vector<64xf32> to vector<1x1x64xf32>
    %54 = vector.broadcast %53 : vector<1x1x64xf32> to vector<16x16x64xf32>
    %55 = arith.mulf %50, %54 : vector<16x16x64xf32>
    %56 = arith.addf %49, %55 : vector<16x16x64xf32>
    %57 = vector.extract_strided_slice %32 {offsets = [1, 0, 0], sizes = [16, 16, 64], strides = [1, 1, 1]} : vector<18x16x64xf32> to vector<16x16x64xf32>
    %58 = vector.extract_strided_slice %31 {offsets = [1, 0, 0], sizes = [1, 1, 64], strides = [1, 1, 1]} : vector<3x3x64xf32> to vector<1x1x64xf32>
    %59 = vector.shape_cast %58 : vector<1x1x64xf32> to vector<64xf32>
    %60 = vector.shape_cast %59 : vector<64xf32> to vector<1x1x64xf32>
    %61 = vector.broadcast %60 : vector<1x1x64xf32> to vector<16x16x64xf32>
    %62 = arith.mulf %57, %61 : vector<16x16x64xf32>
    %63 = arith.addf %56, %62 : vector<16x16x64xf32>
    %64 = vector.extract_strided_slice %33 {offsets = [1, 0, 0], sizes = [16, 16, 64], strides = [1, 1, 1]} : vector<18x16x64xf32> to vector<16x16x64xf32>
    %65 = vector.extract_strided_slice %31 {offsets = [1, 1, 0], sizes = [1, 1, 64], strides = [1, 1, 1]} : vector<3x3x64xf32> to vector<1x1x64xf32>
    %66 = vector.shape_cast %65 : vector<1x1x64xf32> to vector<64xf32>
    %67 = vector.shape_cast %66 : vector<64xf32> to vector<1x1x64xf32>
    %68 = vector.broadcast %67 : vector<1x1x64xf32> to vector<16x16x64xf32>
    %69 = arith.mulf %64, %68 : vector<16x16x64xf32>
    %70 = arith.addf %63, %69 : vector<16x16x64xf32>
    %71 = vector.extract_strided_slice %34 {offsets = [1, 0, 0], sizes = [16, 16, 64], strides = [1, 1, 1]} : vector<18x16x64xf32> to vector<16x16x64xf32>
    %72 = vector.extract_strided_slice %31 {offsets = [1, 2, 0], sizes = [1, 1, 64], strides = [1, 1, 1]} : vector<3x3x64xf32> to vector<1x1x64xf32>
    %73 = vector.shape_cast %72 : vector<1x1x64xf32> to vector<64xf32>
    %74 = vector.shape_cast %73 : vector<64xf32> to vector<1x1x64xf32>
    %75 = vector.broadcast %74 : vector<1x1x64xf32> to vector<16x16x64xf32>
    %76 = arith.mulf %71, %75 : vector<16x16x64xf32>
    %77 = arith.addf %70, %76 : vector<16x16x64xf32>
    %78 = vector.extract_strided_slice %32 {offsets = [2, 0, 0], sizes = [16, 16, 64], strides = [1, 1, 1]} : vector<18x16x64xf32> to vector<16x16x64xf32>
    %79 = vector.extract_strided_slice %31 {offsets = [2, 0, 0], sizes = [1, 1, 64], strides = [1, 1, 1]} : vector<3x3x64xf32> to vector<1x1x64xf32>
    %80 = vector.shape_cast %79 : vector<1x1x64xf32> to vector<64xf32>
    %81 = vector.shape_cast %80 : vector<64xf32> to vector<1x1x64xf32>
    %82 = vector.broadcast %81 : vector<1x1x64xf32> to vector<16x16x64xf32>
    %83 = arith.mulf %78, %82 : vector<16x16x64xf32>
    %84 = arith.addf %77, %83 : vector<16x16x64xf32>
    %85 = vector.extract_strided_slice %33 {offsets = [2, 0, 0], sizes = [16, 16, 64], strides = [1, 1, 1]} : vector<18x16x64xf32> to vector<16x16x64xf32>
    %86 = vector.extract_strided_slice %31 {offsets = [2, 1, 0], sizes = [1, 1, 64], strides = [1, 1, 1]} : vector<3x3x64xf32> to vector<1x1x64xf32>
    %87 = vector.shape_cast %86 : vector<1x1x64xf32> to vector<64xf32>
    %88 = vector.shape_cast %87 : vector<64xf32> to vector<1x1x64xf32>
    %89 = vector.broadcast %88 : vector<1x1x64xf32> to vector<16x16x64xf32>
    %90 = arith.mulf %85, %89 : vector<16x16x64xf32>
    %91 = arith.addf %84, %90 : vector<16x16x64xf32>
    %92 = vector.extract_strided_slice %34 {offsets = [2, 0, 0], sizes = [16, 16, 64], strides = [1, 1, 1]} : vector<18x16x64xf32> to vector<16x16x64xf32>
    %93 = vector.extract_strided_slice %31 {offsets = [2, 2, 0], sizes = [1, 1, 64], strides = [1, 1, 1]} : vector<3x3x64xf32> to vector<1x1x64xf32>
    %94 = vector.shape_cast %93 : vector<1x1x64xf32> to vector<64xf32>
    %95 = vector.shape_cast %94 : vector<64xf32> to vector<1x1x64xf32>
    %96 = vector.broadcast %95 : vector<1x1x64xf32> to vector<16x16x64xf32>
    %97 = arith.mulf %92, %96 : vector<16x16x64xf32>
    %98 = arith.addf %91, %97 : vector<16x16x64xf32>
    %c0_26 = arith.constant 0 : index
    %c0_27 = arith.constant 0 : index
    %99 = vector.load %arg7[%c0_26, %c0_27] : memref<1x64xf32, #tpu.memory_space<vmem>>, vector<1x64xf32>
    %100 = vector.shape_cast %99 : vector<1x64xf32> to vector<1x1x64xf32>
    %101 = vector.broadcast %100 : vector<1x1x64xf32> to vector<16x16x64xf32>
    %102 = arith.addf %98, %101 : vector<16x16x64xf32>
    %103 = arith.negf %102 : vector<16x16x64xf32>
    %104 = math.exp %103 : vector<16x16x64xf32>
    %cst_28 = arith.constant 1.000000e+00 : f32
    %105 = vector.broadcast %cst_28 : f32 to vector<16x16x64xf32>
    %106 = arith.addf %105, %104 : vector<16x16x64xf32>
    %107 = arith.divf %105, %106 : vector<16x16x64xf32>
    %108 = arith.mulf %102, %107 : vector<16x16x64xf32>
    %109 = vector.shape_cast %108 : vector<16x16x64xf32> to vector<256x64xf32>
    %cst_29 = arith.constant dense<0.000000e+00> : vector<64xf32>
    %110 = vector.multi_reduction <add>, %109, %cst_29 [0] : vector<256x64xf32> to vector<64xf32>
    %111 = vector.shape_cast %110 : vector<64xf32> to vector<1x64xf32>
    %cst_30 = arith.constant 2.560000e+02 : f32
    %112 = vector.broadcast %cst_30 : f32 to vector<1x64xf32>
    %113 = arith.divf %111, %112 : vector<1x64xf32>
    %c0_31 = arith.constant 0 : index
    %c0_32 = arith.constant 0 : index
    %114 = vector.load %arg8[%c0_31, %c0_32] : memref<64x16xf32, #tpu.memory_space<vmem>>, vector<64x16xf32>
    %cst_33 = arith.constant dense<0.000000e+00> : vector<1x16xf32>
    %115 = tpu.matmul %113, %114, %cst_33 {dimension_numbers = #tpu.dot_dimension_numbers<[1], [0], [0], [1], [0, 0, 1, 1], [], []>} : vector<1x64xf32>, vector<64x16xf32>, vector<1x16xf32> -> vector<1x16xf32>
    %c0_34 = arith.constant 0 : index
    %c0_35 = arith.constant 0 : index
    %116 = vector.load %arg9[%c0_34, %c0_35] : memref<1x16xf32, #tpu.memory_space<vmem>>, vector<1x16xf32>
    %117 = arith.addf %115, %116 : vector<1x16xf32>
    %118 = arith.negf %117 : vector<1x16xf32>
    %119 = math.exp %118 : vector<1x16xf32>
    %cst_36 = arith.constant 1.000000e+00 : f32
    %120 = vector.broadcast %cst_36 : f32 to vector<1x16xf32>
    %121 = arith.addf %120, %119 : vector<1x16xf32>
    %122 = arith.divf %120, %121 : vector<1x16xf32>
    %123 = arith.mulf %117, %122 : vector<1x16xf32>
    %c0_37 = arith.constant 0 : index
    %c0_38 = arith.constant 0 : index
    %124 = vector.load %arg10[%c0_37, %c0_38] : memref<16x64xf32, #tpu.memory_space<vmem>>, vector<16x64xf32>
    %cst_39 = arith.constant dense<0.000000e+00> : vector<1x64xf32>
    %125 = tpu.matmul %123, %124, %cst_39 {dimension_numbers = #tpu.dot_dimension_numbers<[1], [0], [0], [1], [0, 0, 1, 1], [], []>} : vector<1x16xf32>, vector<16x64xf32>, vector<1x64xf32> -> vector<1x64xf32>
    %c0_40 = arith.constant 0 : index
    %c0_41 = arith.constant 0 : index
    %126 = vector.load %arg11[%c0_40, %c0_41] : memref<1x64xf32, #tpu.memory_space<vmem>>, vector<1x64xf32>
    %127 = arith.addf %125, %126 : vector<1x64xf32>
    %128 = arith.negf %127 : vector<1x64xf32>
    %129 = math.exp %128 : vector<1x64xf32>
    %cst_42 = arith.constant 1.000000e+00 : f32
    %130 = vector.broadcast %cst_42 : f32 to vector<1x64xf32>
    %131 = arith.addf %130, %129 : vector<1x64xf32>
    %132 = arith.divf %130, %131 : vector<1x64xf32>
    %133 = vector.broadcast %132 : vector<1x64xf32> to vector<256x64xf32>
    %134 = arith.mulf %109, %133 : vector<256x64xf32>
    %135 = arith.truncf %134 : vector<256x64xf32> to vector<256x64xbf16>
    %c0_43 = arith.constant 0 : index
    %c0_44 = arith.constant 0 : index
    %136 = vector.load %arg12[%c0_43, %c0_44] : memref<64x128xbf16, #tpu.memory_space<vmem>>, vector<64x128xbf16>
    %cst_45 = arith.constant dense<0.000000e+00> : vector<256x128xf32>
    %137 = tpu.matmul %135, %136, %cst_45 {dimension_numbers = #tpu.dot_dimension_numbers<[1], [0], [0], [1], [0, 0, 1, 1], [], []>} : vector<256x64xbf16>, vector<64x128xbf16>, vector<256x128xf32> -> vector<256x128xf32>
    %c0_46 = arith.constant 0 : index
    %c0_47 = arith.constant 0 : index
    %138 = vector.load %arg13[%c0_46, %c0_47] : memref<1x128xf32, #tpu.memory_space<vmem>>, vector<1x128xf32>
    %139 = vector.broadcast %138 : vector<1x128xf32> to vector<256x128xf32>
    %140 = arith.addf %137, %139 : vector<256x128xf32>
    %141 = arith.negf %140 : vector<256x128xf32>
    %142 = math.exp %141 : vector<256x128xf32>
    %cst_48 = arith.constant 1.000000e+00 : f32
    %143 = vector.broadcast %cst_48 : f32 to vector<256x128xf32>
    %144 = arith.addf %143, %142 : vector<256x128xf32>
    %145 = arith.divf %143, %144 : vector<256x128xf32>
    %146 = arith.mulf %140, %145 : vector<256x128xf32>
    %cst_49 = arith.constant dense<0.000000e+00> : vector<128xf32>
    %147 = vector.multi_reduction <add>, %146, %cst_49 [0] : vector<256x128xf32> to vector<128xf32>
    %148 = vector.shape_cast %147 : vector<128xf32> to vector<1x128xf32>
    %cst_50 = arith.constant 2.560000e+02 : f32
    %149 = vector.broadcast %cst_50 : f32 to vector<1x128xf32>
    %150 = arith.divf %148, %149 : vector<1x128xf32>
    %151 = arith.truncf %150 : vector<1x128xf32> to vector<1x128xbf16>
    %c0_51 = arith.constant 0 : index
    %c0_52 = arith.constant 0 : index
    %152 = vector.load %arg14[%c0_51, %c0_52] : memref<128x512xbf16, #tpu.memory_space<vmem>>, vector<128x512xbf16>
    %cst_53 = arith.constant dense<0.000000e+00> : vector<1x512xf32>
    %153 = tpu.matmul %151, %152, %cst_53 {dimension_numbers = #tpu.dot_dimension_numbers<[1], [0], [0], [1], [0, 0, 1, 1], [], []>} : vector<1x128xbf16>, vector<128x512xbf16>, vector<1x512xf32> -> vector<1x512xf32>
    %c0_54 = arith.constant 0 : index
    %c0_55 = arith.constant 0 : index
    %154 = vector.load %arg15[%c0_54, %c0_55] : memref<1x512xf32, #tpu.memory_space<vmem>>, vector<1x512xf32>
    %155 = arith.addf %153, %154 : vector<1x512xf32>
    %cst_56 = arith.constant 0.000000e+00 : f32
    %156 = vector.broadcast %cst_56 : f32 to vector<1x512xf32>
    %157 = arith.maximumf %155, %156 : vector<1x512xf32>
    %158 = arith.truncf %157 : vector<1x512xf32> to vector<1x512xbf16>
    %c0_57 = arith.constant 0 : index
    %c0_58 = arith.constant 0 : index
    %159 = vector.load %arg16[%c0_57, %c0_58] : memref<512x128xbf16, #tpu.memory_space<vmem>>, vector<512x128xbf16>
    %cst_59 = arith.constant dense<0.000000e+00> : vector<1x128xf32>
    %160 = tpu.matmul %158, %159, %cst_59 {dimension_numbers = #tpu.dot_dimension_numbers<[1], [0], [0], [1], [0, 0, 1, 1], [], []>} : vector<1x512xbf16>, vector<512x128xbf16>, vector<1x128xf32> -> vector<1x128xf32>
    %c0_60 = arith.constant 0 : index
    %c0_61 = arith.constant 0 : index
    %161 = vector.load %arg17[%c0_60, %c0_61] : memref<1x128xf32, #tpu.memory_space<vmem>>, vector<1x128xf32>
    %162 = arith.addf %160, %161 : vector<1x128xf32>
    %163 = vector.shape_cast %162 : vector<1x128xf32> to vector<1x1x128xf32>
    %c0_62 = arith.constant 0 : index
    %c0_63 = arith.constant 0 : index
    %c0_64 = arith.constant 0 : index
    %164 = vector.load %arg18[%c0_62, %c0_63, %c0_64] : memref<1x1x128xf32, #tpu.memory_space<vmem>>, vector<1x1x128xf32>
    tpu.vector_store %arg18[%c0_62, %c0_63, %c0_64], %163 {strides = array<i32>} : memref<1x1x128xf32, #tpu.memory_space<vmem>>, vector<1x1x128xf32>,
    return
  }
  func.func @transform_0(%arg0: i32) -> (i32, i32, i32) {
    %c0_i32 = arith.constant 0 : i32
    %c0_i32_0 = arith.constant 0 : i32
    %c0_i32_1 = arith.constant 0 : i32
    return %arg0, %c0_i32, %c0_i32_0 : i32, i32, i32
  }
  func.func @transform_1(%arg0: i32) -> (i32, i32) {
    %c0_i32 = arith.constant 0 : i32
    %c0_i32_0 = arith.constant 0 : i32
    %c0_i32_1 = arith.constant 0 : i32
    return %c0_i32, %c0_i32_0 : i32, i32
  }
  func.func @transform_2(%arg0: i32) -> (i32, i32) {
    %c0_i32 = arith.constant 0 : i32
    %c0_i32_0 = arith.constant 0 : i32
    %c0_i32_1 = arith.constant 0 : i32
    return %c0_i32, %c0_i32_0 : i32, i32
  }
  func.func @transform_3(%arg0: i32) -> (i32, i32) {
    %c0_i32 = arith.constant 0 : i32
    %c0_i32_0 = arith.constant 0 : i32
    %c0_i32_1 = arith.constant 0 : i32
    return %c0_i32, %c0_i32_0 : i32, i32
  }
  func.func @transform_4(%arg0: i32) -> (i32, i32) {
    %c0_i32 = arith.constant 0 : i32
    %c0_i32_0 = arith.constant 0 : i32
    %c0_i32_1 = arith.constant 0 : i32
    return %c0_i32, %c0_i32_0 : i32, i32
  }
  func.func @transform_5(%arg0: i32) -> (i32, i32, i32) {
    %c0_i32 = arith.constant 0 : i32
    %c0_i32_0 = arith.constant 0 : i32
    %c0_i32_1 = arith.constant 0 : i32
    %c0_i32_2 = arith.constant 0 : i32
    return %c0_i32, %c0_i32_0, %c0_i32_1 : i32, i32, i32
  }
  func.func @transform_6(%arg0: i32) -> (i32, i32) {
    %c0_i32 = arith.constant 0 : i32
    %c0_i32_0 = arith.constant 0 : i32
    %c0_i32_1 = arith.constant 0 : i32
    return %c0_i32, %c0_i32_0 : i32, i32
  }
  func.func @transform_7(%arg0: i32) -> (i32, i32) {
    %c0_i32 = arith.constant 0 : i32
    %c0_i32_0 = arith.constant 0 : i32
    %c0_i32_1 = arith.constant 0 : i32
    return %c0_i32, %c0_i32_0 : i32, i32
  }
  func.func @transform_8(%arg0: i32) -> (i32, i32) {
    %c0_i32 = arith.constant 0 : i32
    %c0_i32_0 = arith.constant 0 : i32
    %c0_i32_1 = arith.constant 0 : i32
    return %c0_i32, %c0_i32_0 : i32, i32
  }
  func.func @transform_9(%arg0: i32) -> (i32, i32) {
    %c0_i32 = arith.constant 0 : i32
    %c0_i32_0 = arith.constant 0 : i32
    %c0_i32_1 = arith.constant 0 : i32
    return %c0_i32, %c0_i32_0 : i32, i32
  }
  func.func @transform_10(%arg0: i32) -> (i32, i32) {
    %c0_i32 = arith.constant 0 : i32
    %c0_i32_0 = arith.constant 0 : i32
    %c0_i32_1 = arith.constant 0 : i32
    return %c0_i32, %c0_i32_0 : i32, i32
  }
  func.func @transform_11(%arg0: i32) -> (i32, i32) {
    %c0_i32 = arith.constant 0 : i32
    %c0_i32_0 = arith.constant 0 : i32
    %c0_i32_1 = arith.constant 0 : i32
    return %c0_i32, %c0_i32_0 : i32, i32
  }
  func.func @transform_12(%arg0: i32) -> (i32, i32) {
    %c0_i32 = arith.constant 0 : i32
    %c0_i32_0 = arith.constant 0 : i32
    %c0_i32_1 = arith.constant 0 : i32
    return %c0_i32, %c0_i32_0 : i32, i32
  }
  func.func @transform_13(%arg0: i32) -> (i32, i32) {
    %c0_i32 = arith.constant 0 : i32
    %c0_i32_0 = arith.constant 0 : i32
    %c0_i32_1 = arith.constant 0 : i32
    return %c0_i32, %c0_i32_0 : i32, i32
  }
  func.func @transform_14(%arg0: i32) -> (i32, i32) {
    %c0_i32 = arith.constant 0 : i32
    %c0_i32_0 = arith.constant 0 : i32
    %c0_i32_1 = arith.constant 0 : i32
    return %c0_i32, %c0_i32_0 : i32, i32
  }
  func.func @transform_15(%arg0: i32) -> (i32, i32) {
    %c0_i32 = arith.constant 0 : i32
    %c0_i32_0 = arith.constant 0 : i32
    %c0_i32_1 = arith.constant 0 : i32
    return %c0_i32, %c0_i32_0 : i32, i32
  }
  func.func @transform_16(%arg0: i32) -> (i32, i32) {
    %c0_i32 = arith.constant 0 : i32
    %c0_i32_0 = arith.constant 0 : i32
    %c0_i32_1 = arith.constant 0 : i32
    return %c0_i32, %c0_i32_0 : i32, i32
  }
  func.func @transform_17(%arg0: i32) -> (i32, i32, i32) {
    %c0_i32 = arith.constant 0 : i32
    %c0_i32_0 = arith.constant 0 : i32
    %c0_i32_1 = arith.constant 0 : i32
    return %arg0, %c0_i32, %c0_i32_0 : i32, i32, i32
  }
}

</mosaic_0001>

<llo_original>
// kernel: efficientnet_classifier_forward.1
$region0: #{efficientnet_classifier_forward.1}
  #allocation0 [shape = 'u32[]', space=smem, size = 0x4, offset = 0x4, fixed_abs, tag = 'smem constant byte address 0x4 - core index']
  #allocation1 [shape = 'u32[144,128]{1,0:T(1,128)}', space=vmem, size = 0x12000, scoped, tag = 'internal scratch']
  #allocation2 [shape = 'f32[18,18,64]{2,1,0:T(8,128)}', space=vmem, size = 0x36000, scoped, tag = 'scratch operand']
  %s0 = inlined_call_operand.vmem [shape: f32[2,256,32], index: 0, kind: input, shape index: {}]
  %s1 = inlined_call_operand.vmem [shape: bf16[32,16], index: 1, kind: input, shape index: {}]
  %s2 = inlined_call_operand.vmem [shape: f32[1,16], index: 2, kind: input, shape index: {}, may-alias: {2,8}]
  %s3 = inlined_call_operand.vmem [shape: bf16[16,64], index: 3, kind: input, shape index: {}]
  %s4 = inlined_call_operand.vmem [shape: f32[1,64], index: 4, kind: input, shape index: {}, may-alias: {4,6,10}]
  %s5 = inlined_call_operand.vmem [shape: f32[3,3,64], index: 5, kind: input, shape index: {}]
  %s6 = inlined_call_operand.vmem [shape: f32[1,64], index: 6, kind: input, shape index: {}, may-alias: {4,6,10}]
  %s7 = inlined_call_operand.vmem [shape: f32[64,16], index: 7, kind: input, shape index: {}]
  %s8 = inlined_call_operand.vmem [shape: f32[1,16], index: 8, kind: input, shape index: {}, may-alias: {2,8}]
  %s9 = inlined_call_operand.vmem [shape: f32[16,64], index: 9, kind: input, shape index: {}]
  %s10 = inlined_call_operand.vmem [shape: f32[1,64], index: 10, kind: input, shape index: {}, may-alias: {4,6,10}]
  %s11 = inlined_call_operand.vmem [shape: bf16[64,128], index: 11, kind: input, shape index: {}]
  %s12 = inlined_call_operand.vmem [shape: f32[1,128], index: 12, kind: input, shape index: {}]
  %s13 = inlined_call_operand.vmem [shape: bf16[128,512], index: 13, kind: input, shape index: {}]
  %s14 = inlined_call_operand.vmem [shape: f32[1,512], index: 14, kind: input, shape index: {}]
  %s15 = inlined_call_operand.vmem [shape: bf16[512,128], index: 15, kind: input, shape index: {}]
  %s16 = inlined_call_operand.vmem [shape: f32[1,128], index: 16, kind: input, shape index: {}]
  %s17 = inlined_call_operand.hbm [shape: f32[2,1,128], index: 17, kind: output, shape index: {}]
  %s18 = sld [smem:[#allocation0]]
  $region101: #{efficientnet_classifier_forward.1} parent=0
    _
  %s20 = ssub.s32 1, %s18
  %s21 = scalar_select 0, %s20, %s18
  $region1: #{efficientnet_classifier_forward.1} parent=0
    #allocation3 [shape = 'u8[1024]{0}', space=vmem, size = 0x400, scoped, tag = 'output window, operand 0']
    #allocation4 [shape = 's32[2]{0}', space=sflag, size = 0x8, scoped, tag = 'scoped memory for efficientnet_classifier_forward.1']
    %22 = vsyncpa [#allocation4], 0
    %s23 = scalar_lea.sflag [#allocation4], 1
    %24 = vsyncpa %s23, 0
    loop: start=0, step=1, limit=4
    $region2: #{efficientnet_classifier_forward.1} parent=1 // loop_pre_header
      _
    $region3: #{efficientnet_classifier_forward.1} parent=1 // loop_header
      %s26 = sphi 0, %s30
      %p27 = scmp.ge.s32.totalorder %s26, 4
      %s36 = sphi 0, %s38
      %s39 = sphi 0, %s36
      %s40 = sphi 0, %s39
      %s56 = sphi 0, %s40
      %s60 = sphi 0, %s60
      %s62 = sphi 0, %s60
      %s63 = sphi 0, %s62
      %s77 = sphi 0, %s63
      %s81 = sphi 0, %s81
      %s83 = sphi 0, %s81
      %s84 = sphi 0, %s83
      %s98 = sphi 0, %s84
      %s102 = sphi 0, %s102
      %s104 = sphi 0, %s102
      %s105 = sphi 0, %s104
      %s119 = sphi 0, %s105
      %s123 = sphi 0, %s123
      %s125 = sphi 0, %s123
      %s126 = sphi 0, %s125
      %s140 = sphi 0, %s126
      %s144 = sphi 0, %s144
      %s146 = sphi 0, %s144
      %s147 = sphi 0, %s146
      %s161 = sphi 0, %s147
      %s165 = sphi 0, %s165
      %s167 = sphi 0, %s165
      %s168 = sphi 0, %s167
      %s182 = sphi 0, %s168
      %s186 = sphi 0, %s186
      %s188 = sphi 0, %s186
      %s189 = sphi 0, %s188
      %s203 = sphi 0, %s189
      %s207 = sphi 0, %s207
      %s209 = sphi 0, %s207
      %s210 = sphi 0, %s209
      %s224 = sphi 0, %s210
      %s228 = sphi 0, %s228
      %s230 = sphi 0, %s228
      %s231 = sphi 0, %s230
      %s245 = sphi 0, %s231
      %s249 = sphi 0, %s249
      %s251 = sphi 0, %s249
      %s252 = sphi 0, %s251
      %s266 = sphi 0, %s252
      %s270 = sphi 0, %s270
      %s272 = sphi 0, %s270
      %s273 = sphi 0, %s272
      %s287 = sphi 0, %s273
      %s291 = sphi 0, %s291
      %s293 = sphi 0, %s291
      %s294 = sphi 0, %s293
      %s308 = sphi 0, %s294
      %s312 = sphi 0, %s312
      %s314 = sphi 0, %s312
      %s315 = sphi 0, %s314
      %s329 = sphi 0, %s315
      %s333 = sphi 0, %s333
      %s335 = sphi 0, %s333
      %s336 = sphi 0, %s335
      %s350 = sphi 0, %s336
      %s354 = sphi 0, %s354
      %s356 = sphi 0, %s354
      %s357 = sphi 0, %s356
      %s371 = sphi 0, %s357
      %s375 = sphi 0, %s375
      %s377 = sphi 0, %s375
      %s378 = sphi 0, %s377
      %s392 = sphi 0, %s378
      %s398 = sphi 0, %s400
      %s401 = sphi 0, %s398
      %s402 = sphi 0, %s401
      %s418 = sphi 0, %s402
    $region4: #{efficientnet_classifier_forward.1} parent=1 // loop_header_branch
      %29 = sbr.rel (%p27) target = $region8
    $region5: #{efficientnet_classifier_forward.1} parent=1 // loop_body
      %s31 = ssub.s32 %s26, 1
      %s32 = ssub.s32 %s26, 2
      %s33 = sadd.s32 %s26, 1
      %s34 = ssub.s32 %s26, %s33
      %p35 = scmp.eq.s32.totalorder %s34, 0
      %s37 = sadd.s32 %s36, 1
      %s38 = scalar_select %p35, %s36, %s37
      %p41 = pneg %p35
      %p42 = scmp.eq.s32.totalorder %s26, 1
      %p43 = por %p41, %p42
      %p44 = scmp.ne.s32.totalorder %s36, %s39
      %p45 = scmp.eq.s32.totalorder %s26, 0
      %p46 = por %p44, %p45
      %p47 = scmp.ne.s32.totalorder %s36, %s39
      %p48 = scmp.eq.s32.totalorder %s31, 1
      %p49 = por %p47, %p48
      %p50 = scmp.ne.s32.totalorder %s39, %s40
      %p51 = scmp.eq.s32.totalorder %s31, 0
      %p52 = por %p50, %p51
      %p53 = scmp.ne.s32.totalorder %s39, %s40
      %p54 = scmp.eq.s32.totalorder %s32, 1
      %p55 = por %p53, %p54
      %p57 = scmp.ne.s32.totalorder %s40, %s56
      %p58 = scmp.eq.s32.totalorder %s32, 0
      %p59 = por %p57, %p58
      %s61 = sadd.s32 %s60, 1
      %p64 = scmp.eq.s32.totalorder %s26, 1
      %p65 = scmp.ne.s32.totalorder %s60, %s62
      %p66 = scmp.eq.s32.totalorder %s26, 0
      %p67 = por %p65, %p66
      %p68 = scmp.ne.s32.totalorder %s60, %s62
      %p69 = scmp.eq.s32.totalorder %s31, 1
      %p70 = por %p68, %p69
      %p71 = scmp.ne.s32.totalorder %s62, %s63
      %p72 = scmp.eq.s32.totalorder %s31, 0
      %p73 = por %p71, %p72
      %p74 = scmp.ne.s32.totalorder %s62, %s63
      %p75 = scmp.eq.s32.totalorder %s32, 1
      %p76 = por %p74, %p75
      %p78 = scmp.ne.s32.totalorder %s63, %s77
      %p79 = scmp.eq.s32.totalorder %s32, 0
      %p80 = por %p78, %p79
      %s82 = sadd.s32 %s81, 1
      %p85 = scmp.eq.s32.totalorder %s26, 1
      %p86 = scmp.ne.s32.totalorder %s81, %s83
      %p87 = scmp.eq.s32.totalorder %s26, 0
      %p88 = por %p86, %p87
      %p89 = scmp.ne.s32.totalorder %s81, %s83
      %p90 = scmp.eq.s32.totalorder %s31, 1
      %p91 = por %p89, %p90
      %p92 = scmp.ne.s32.totalorder %s83, %s84
      %p93 = scmp.eq.s32.totalorder %s31, 0
      %p94 = por %p92, %p93
      %p95 = scmp.ne.s32.totalorder %s83, %s84
      %p96 = scmp.eq.s32.totalorder %s32, 1
      %p97 = por %p95, %p96
      %p99 = scmp.ne.s32.totalorder %s84, %s98
      %p100 = scmp.eq.s32.totalorder %s32, 0
      %p101 = por %p99, %p100
      %s103 = sadd.s32 %s102, 1
      %p106 = scmp.eq.s32.totalorder %s26, 1
      %p107 = scmp.ne.s32.totalorder %s102, %s104
      %p108 = scmp.eq.s32.totalorder %s26, 0
      %p109 = por %p107, %p108
      %p110 = scmp.ne.s32.totalorder %s102, %s104
      %p111 = scmp.eq.s32.totalorder %s31, 1
      %p112 = por %p110, %p111
      %p113 = scmp.ne.s32.totalorder %s104, %s105
      %p114 = scmp.eq.s32.totalorder %s31, 0
      %p115 = por %p113, %p114
      %p116 = scmp.ne.s32.totalorder %s104, %s105
      %p117 = scmp.eq.s32.totalorder %s32, 1
      %p118 = por %p116, %p117
      %p120 = scmp.ne.s32.totalorder %s105, %s119
      %p121 = scmp.eq.s32.totalorder %s32, 0
      %p122 = por %p120, %p121
      %s124 = sadd.s32 %s123, 1
      %p127 = scmp.eq.s32.totalorder %s26, 1
      %p128 = scmp.ne.s32.totalorder %s123, %s125
      %p129 = scmp.eq.s32.totalorder %s26, 0
      %p130 = por %p128, %p129
      %p131 = scmp.ne.s32.totalorder %s123, %s125
      %p132 = scmp.eq.s32.totalorder %s31, 1
      %p133 = por %p131, %p132
      %p134 = scmp.ne.s32.totalorder %s125, %s126
      %p135 = scmp.eq.s32.totalorder %s31, 0
      %p136 = por %p134, %p135
      %p137 = scmp.ne.s32.totalorder %s125, %s126
      %p138 = scmp.eq.s32.totalorder %s32, 1
      %p139 = por %p137, %p138
      %p141 = scmp.ne.s32.totalorder %s126, %s140
      %p142 = scmp.eq.s32.totalorder %s32, 0
      %p143 = por %p141, %p142
      %s145 = sadd.s32 %s144, 1
      %p148 = scmp.eq.s32.totalorder %s26, 1
      %p149 = scmp.ne.s32.totalorder %s144, %s146
      %p150 = scmp.eq.s32.totalorder %s26, 0
      %p151 = por %p149, %p150
      %p152 = scmp.ne.s32.totalorder %s144, %s146
      %p153 = scmp.eq.s32.totalorder %s31, 1
      %p154 = por %p152, %p153
      %p155 = scmp.ne.s32.totalorder %s146, %s147
      %p156 = scmp.eq.s32.totalorder %s31, 0
      %p157 = por %p155, %p156
      %p158 = scmp.ne.s32.totalorder %s146, %s147
      %p159 = scmp.eq.s32.totalorder %s32, 1
      %p160 = por %p158, %p159
      %p162 = scmp.ne.s32.totalorder %s147, %s161
      %p163 = scmp.eq.s32.totalorder %s32, 0
      %p164 = por %p162, %p163
      %s166 = sadd.s32 %s165, 1
      %p169 = scmp.eq.s32.totalorder %s26, 1
      %p170 = scmp.ne.s32.totalorder %s165, %s167
      %p171 = scmp.eq.s32.totalorder %s26, 0
      %p172 = por %p170, %p171
      %p173 = scmp.ne.s32.totalorder %s165, %s167
      %p174 = scmp.eq.s32.totalorder %s31, 1
      %p175 = por %p173, %p174
      %p176 = scmp.ne.s32.totalorder %s167, %s168
      %p177 = scmp.eq.s32.totalorder %s31, 0
      %p178 = por %p176, %p177
      %p179 = scmp.ne.s32.totalorder %s167, %s168
      %p180 = scmp.eq.s32.totalorder %s32, 1
      %p181 = por %p179, %p180
      %p183 = scmp.ne.s32.totalorder %s168, %s182
      %p184 = scmp.eq.s32.totalorder %s32, 0
      %p185 = por %p183, %p184
      %s187 = sadd.s32 %s186, 1
      %p190 = scmp.eq.s32.totalorder %s26, 1
      %p191 = scmp.ne.s32.totalorder %s186, %s188
      %p192 = scmp.eq.s32.totalorder %s26, 0
      %p193 = por %p191, %p192
      %p194 = scmp.ne.s32.totalorder %s186, %s188
      %p195 = scmp.eq.s32.totalorder %s31, 1
      %p196 = por %p194, %p195
      %p197 = scmp.ne.s32.totalorder %s188, %s189
      %p198 = scmp.eq.s32.totalorder %s31, 0
      %p199 = por %p197, %p198
      %p200 = scmp.ne.s32.totalorder %s188, %s189
      %p201 = scmp.eq.s32.totalorder %s32, 1
      %p202 = por %p200, %p201
      %p204 = scmp.ne.s32.totalorder %s189, %s203
      %p205 = scmp.eq.s32.totalorder %s32, 0
      %p206 = por %p204, %p205
      %s208 = sadd.s32 %s207, 1
      %p211 = scmp.eq.s32.totalorder %s26, 1
      %p212 = scmp.ne.s32.totalorder %s207, %s209
      %p213 = scmp.eq.s32.totalorder %s26, 0
      %p214 = por %p212, %p213
      %p215 = scmp.ne.s32.totalorder %s207, %s209
      %p216 = scmp.eq.s32.totalorder %s31, 1
      %p217 = por %p215, %p216
      %p218 = scmp.ne.s32.totalorder %s209, %s210
      %p219 = scmp.eq.s32.totalorder %s31, 0
      %p220 = por %p218, %p219
      %p221 = scmp.ne.s32.totalorder %s209, %s210
      %p222 = scmp.eq.s32.totalorder %s32, 1
      %p223 = por %p221, %p222
      %p225 = scmp.ne.s32.totalorder %s210, %s224
      %p226 = scmp.eq.s32.totalorder %s32, 0
      %p227 = por %p225, %p226
      %s229 = sadd.s32 %s228, 1
      %p232 = scmp.eq.s32.totalorder %s26, 1
      %p233 = scmp.ne.s32.totalorder %s228, %s230
      %p234 = scmp.eq.s32.totalorder %s26, 0
      %p235 = por %p233, %p234
      %p236 = scmp.ne.s32.totalorder %s228, %s230
      %p237 = scmp.eq.s32.totalorder %s31, 1
      %p238 = por %p236, %p237
      %p239 = scmp.ne.s32.totalorder %s230, %s231
      %p240 = scmp.eq.s32.totalorder %s31, 0
      %p241 = por %p239, %p240
      %p242 = scmp.ne.s32.totalorder %s230, %s231
      %p243 = scmp.eq.s32.totalorder %s32, 1
      %p244 = por %p242, %p243
      %p246 = scmp.ne.s32.totalorder %s231, %s245
      %p247 = scmp.eq.s32.totalorder %s32, 0
      %p248 = por %p246, %p247
      %s250 = sadd.s32 %s249, 1
      %p253 = scmp.eq.s32.totalorder %s26, 1
      %p254 = scmp.ne.s32.totalorder %s249, %s251
      %p255 = scmp.eq.s32.totalorder %s26, 0
      %p256 = por %p254, %p255
      %p257 = scmp.ne.s32.totalorder %s249, %s251
      %p258 = scmp.eq.s32.totalorder %s31, 1
      %p259 = por %p257, %p258
      %p260 = scmp.ne.s32.totalorder %s251, %s252
      %p261 = scmp.eq.s32.totalorder %s31, 0
      %p262 = por %p260, %p261
      %p263 = scmp.ne.s32.totalorder %s251, %s252
      %p264 = scmp.eq.s32.totalorder %s32, 1
      %p265 = por %p263, %p264
      %p267 = scmp.ne.s32.totalorder %s252, %s266
      %p268 = scmp.eq.s32.totalorder %s32, 0
      %p269 = por %p267, %p268
      %s271 = sadd.s32 %s270, 1
      %p274 = scmp.eq.s32.totalorder %s26, 1
      %p275 = scmp.ne.s32.totalorder %s270, %s272
      %p276 = scmp.eq.s32.totalorder %s26, 0
      %p277 = por %p275, %p276
      %p278 = scmp.ne.s32.totalorder %s270, %s272
      %p279 = scmp.eq.s32.totalorder %s31, 1
      %p280 = por %p278, %p279
      %p281 = scmp.ne.s32.totalorder %s272, %s273
      %p282 = scmp.eq.s32.totalorder %s31, 0
      %p283 = por %p281, %p282
      %p284 = scmp.ne.s32.totalorder %s272, %s273
      %p285 = scmp.eq.s32.totalorder %s32, 1
      %p286 = por %p284, %p285
      %p288 = scmp.ne.s32.totalorder %s273, %s287
      %p289 = scmp.eq.s32.totalorder %s32, 0
      %p290 = por %p288, %p289
      %s292 = sadd.s32 %s291, 1
      %p295 = scmp.eq.s32.totalorder %s26, 1
      %p296 = scmp.ne.s32.totalorder %s291, %s293
      %p297 = scmp.eq.s32.totalorder %s26, 0
      %p298 = por %p296, %p297
      %p299 = scmp.ne.s32.totalorder %s291, %s293
      %p300 = scmp.eq.s32.totalorder %s31, 1
      %p301 = por %p299, %p300
      %p302 = scmp.ne.s32.totalorder %s293, %s294
      %p303 = scmp.eq.s32.totalorder %s31, 0
      %p304 = por %p302, %p303
      %p305 = scmp.ne.s32.totalorder %s293, %s294
      %p306 = scmp.eq.s32.totalorder %s32, 1
      %p307 = por %p305, %p306
      %p309 = scmp.ne.s32.totalorder %s294, %s308
      %p310 = scmp.eq.s32.totalorder %s32, 0
      %p311 = por %p309, %p310
      %s313 = sadd.s32 %s312, 1
      %p316 = scmp.eq.s32.totalorder %s26, 1
      %p317 = scmp.ne.s32.totalorder %s312, %s314
      %p318 = scmp.eq.s32.totalorder %s26, 0
      %p319 = por %p317, %p318
      %p320 = scmp.ne.s32.totalorder %s312, %s314
      %p321 = scmp.eq.s32.totalorder %s31, 1
      %p322 = por %p320, %p321
      %p323 = scmp.ne.s32.totalorder %s314, %s315
      %p324 = scmp.eq.s32.totalorder %s31, 0
      %p325 = por %p323, %p324
      %p326 = scmp.ne.s32.totalorder %s314, %s315
      %p327 = scmp.eq.s32.totalorder %s32, 1
      %p328 = por %p326, %p327
      %p330 = scmp.ne.s32.totalorder %s315, %s329
      %p331 = scmp.eq.s32.totalorder %s32, 0
      %p332 = por %p330, %p331
      %s334 = sadd.s32 %s333, 1
      %p337 = scmp.eq.s32.totalorder %s26, 1
      %p338 = scmp.ne.s32.totalorder %s333, %s335
      %p339 = scmp.eq.s32.totalorder %s26, 0
      %p340 = por %p338, %p339
      %p341 = scmp.ne.s32.totalorder %s333, %s335
      %p342 = scmp.eq.s32.totalorder %s31, 1
      %p343 = por %p341, %p342
      %p344 = scmp.ne.s32.totalorder %s335, %s336
      %p345 = scmp.eq.s32.totalorder %s31, 0
      %p346 = por %p344, %p345
      %p347 = scmp.ne.s32.totalorder %s335, %s336
      %p348 = scmp.eq.s32.totalorder %s32, 1
      %p349 = por %p347, %p348
      %p351 = scmp.ne.s32.totalorder %s336, %s350
      %p352 = scmp.eq.s32.totalorder %s32, 0
      %p353 = por %p351, %p352
      %s355 = sadd.s32 %s354, 1
      %p358 = scmp.eq.s32.totalorder %s26, 1
      %p359 = scmp.ne.s32.totalorder %s354, %s356
      %p360 = scmp.eq.s32.totalorder %s26, 0
      %p361 = por %p359, %p360
      %p362 = scmp.ne.s32.totalorder %s354, %s356
      %p363 = scmp.eq.s32.totalorder %s31, 1
      %p364 = por %p362, %p363
      %p365 = scmp.ne.s32.totalorder %s356, %s357
      %p366 = scmp.eq.s32.totalorder %s31, 0
      %p367 = por %p365, %p366
      %p368 = scmp.ne.s32.totalorder %s356, %s357
      %p369 = scmp.eq.s32.totalorder %s32, 1
      %p370 = por %p368, %p369
      %p372 = scmp.ne.s32.totalorder %s357, %s371
      %p373 = scmp.eq.s32.totalorder %s32, 0
      %p374 = por %p372, %p373
      %s376 = sadd.s32 %s375, 1
      %p379 = scmp.eq.s32.totalorder %s26, 1
      %p380 = scmp.ne.s32.totalorder %s375, %s377
      %p381 = scmp.eq.s32.totalorder %s26, 0
      %p382 = por %p380, %p381
      %p383 = scmp.ne.s32.totalorder %s375, %s377
      %p384 = scmp.eq.s32.totalorder %s31, 1
      %p385 = por %p383, %p384
      %p386 = scmp.ne.s32.totalorder %s377, %s378
      %p387 = scmp.eq.s32.totalorder %s31, 0
      %p388 = por %p386, %p387
      %p389 = scmp.ne.s32.totalorder %s377, %s378
      %p390 = scmp.eq.s32.totalorder %s32, 1
      %p391 = por %p389, %p390
      %p393 = scmp.ne.s32.totalorder %s378, %s392
      %p394 = scmp.eq.s32.totalorder %s32, 0
      %p395 = por %p393, %p394
      %s396 = ssub.s32 %s26, %s33
      %p397 = scmp.eq.s32.totalorder %s396, 0
      %s399 = sadd.s32 %s398, 1
      %s400 = scalar_select %p397, %s398, %s399
      %p403 = pneg %p397
      %p404 = scmp.eq.s32.totalorder %s26, 1
      %p405 = por %p403, %p404
      %p406 = scmp.ne.s32.totalorder %s398, %s401
      %p407 = scmp.eq.s32.totalorder %s26, 0
      %p408 = por %p406, %p407
      %p409 = scmp.ne.s32.totalorder %s398, %s401
      %p410 = scmp.eq.s32.totalorder %s31, 1
      %p411 = por %p409, %p410
      %p412 = scmp.ne.s32.totalorder %s401, %s402
      %p413 = scmp.eq.s32.totalorder %s31, 0
      %p414 = por %p412, %p413
      %p415 = scmp.ne.s32.totalorder %s401, %s402
      %p416 = scmp.eq.s32.totalorder %s32, 1
      %p417 = por %p415, %p416
      %p419 = scmp.ne.s32.totalorder %s402, %s418
      %p420 = scmp.eq.s32.totalorder %s32, 0
      %p421 = por %p419, %p420
      %p422 = scmp.le.s32.totalorder 1, %s26
      %p423 = scmp.lt.s32.totalorder %s26, 3
      %p424 = pnand %p422, %p423
      %p425 = pneg %p424
      // Predicated region
      $region9: #{efficientnet_classifier_forward.1} parent=5 // pred_check
        _
      $region10: #{efficientnet_classifier_forward.1} parent=5 // pred_check_branch
        %427 = sbr.rel (%p424) target = $region12
      $region11: #{efficientnet_classifier_forward.1} parent=5 // pred_region
        %s428 = ssub.s32 %s26, 1
        // Predicated region
        $region13: #{efficientnet_classifier_forward.1} parent=11 // pred_check
          %p429 = pneg %p73
        $region14: #{efficientnet_classifier_forward.1} parent=11 // pred_check_branch
          %431 = sbr.rel (%p429) target = $region16
        $region15: #{efficientnet_classifier_forward.1} parent=11 // pred_region
          _
        $region16: #{efficientnet_classifier_forward.1} parent=11 // pred_fallthru
          _
        // Predicated region
        $region17: #{efficientnet_classifier_forward.1} parent=11 // pred_check
          %p432 = pneg %p94
        $region18: #{efficientnet_classifier_forward.1} parent=11 // pred_check_branch
          %434 = sbr.rel (%p432) target = $region20
        $region19: #{efficientnet_classifier_forward.1} parent=11 // pred_region
          _
        $region20: #{efficientnet_classifier_forward.1} parent=11 // pred_fallthru
          _
        // Predicated region
        $region21: #{efficientnet_classifier_forward.1} parent=11 // pred_check
          %p435 = pneg %p115
        $region22: #{efficientnet_classifier_forward.1} parent=11 // pred_check_branch
          %437 = sbr.rel (%p435) target = $region24
        $region23: #{efficientnet_classifier_forward.1} parent=11 // pred_region
          _
        $region24: #{efficientnet_classifier_forward.1} parent=11 // pred_fallthru
          _
        // Predicated region
        $region25: #{efficientnet_classifier_forward.1} parent=11 // pred_check
          %p438 = pneg %p136
        $region26: #{efficientnet_classifier_forward.1} parent=11 // pred_check_branch
          %440 = sbr.rel (%p438) target = $region28
        $region27: #{efficientnet_classifier_forward.1} parent=11 // pred_region
          _
        $region28: #{efficientnet_classifier_forward.1} parent=11 // pred_fallthru
          _
        // Predicated region
        $region29: #{efficientnet_classifier_forward.1} parent=11 // pred_check
          %p441 = pneg %p157
        $region30: #{efficientnet_classifier_forward.1} parent=11 // pred_check_branch
          %443 = sbr.rel (%p441) target = $region32
        $region31: #{efficientnet_classifier_forward.1} parent=11 // pred_region
          _
        $region32: #{efficientnet_classifier_forward.1} parent=11 // pred_fallthru
          _
        // Predicated region
        $region33: #{efficientnet_classifier_forward.1} parent=11 // pred_check
          %p444 = pneg %p178
        $region34: #{efficientnet_classifier_forward.1} parent=11 // pred_check_branch
          %446 = sbr.rel (%p444) target = $region36
        $region35: #{efficientnet_classifier_forward.1} parent=11 // pred_region
          _
        $region36: #{efficientnet_classifier_forward.1} parent=11 // pred_fallthru
          _
        // Predicated region
        $region37: #{efficientnet_classifier_forward.1} parent=11 // pred_check
          %p447 = pneg %p199
        $region38: #{efficientnet_classifier_forward.1} parent=11 // pred_check_branch
          %449 = sbr.rel (%p447) target = $region40
        $region39: #{efficientnet_classifier_forward.1} parent=11 // pred_region
          _
        $region40: #{efficientnet_classifier_forward.1} parent=11 // pred_fallthru
          _
        // Predicated region
        $region41: #{efficientnet_classifier_forward.1} parent=11 // pred_check
          %p450 = pneg %p220
        $region42: #{efficientnet_classifier_forward.1} parent=11 // pred_check_branch
          %452 = sbr.rel (%p450) target = $region44
        $region43: #{efficientnet_classifier_forward.1} parent=11 // pred_region
          _
        $region44: #{efficientnet_classifier_forward.1} parent=11 // pred_fallthru
          _
        // Predicated region
        $region45: #{efficientnet_classifier_forward.1} parent=11 // pred_check
          %p453 = pneg %p241
        $region46: #{efficientnet_classifier_forward.1} parent=11 // pred_check_branch
          %455 = sbr.rel (%p453) target = $region48
        $region47: #{efficientnet_classifier_forward.1} parent=11 // pred_region
          _
        $region48: #{efficientnet_classifier_forward.1} parent=11 // pred_fallthru
          _
        // Predicated region
        $region49: #{efficientnet_classifier_forward.1} parent=11 // pred_check
          %p456 = pneg %p262
        $region50: #{efficientnet_classifier_forward.1} parent=11 // pred_check_branch
          %458 = sbr.rel (%p456) target = $region52
        $region51: #{efficientnet_classifier_forward.1} parent=11 // pred_region
          _
        $region52: #{efficientnet_classifier_forward.1} parent=11 // pred_fallthru
          _
        // Predicated region
        $region53: #{efficientnet_classifier_forward.1} parent=11 // pred_check
          %p459 = pneg %p283
        $region54: #{efficientnet_classifier_forward.1} parent=11 // pred_check_branch
          %461 = sbr.rel (%p459) target = $region56
        $region55: #{efficientnet_classifier_forward.1} parent=11 // pred_region
          _
        $region56: #{efficientnet_classifier_forward.1} parent=11 // pred_fallthru
          _
        // Predicated region
        $region57: #{efficientnet_classifier_forward.1} parent=11 // pred_check
          %p462 = pneg %p304
        $region58: #{efficientnet_classifier_forward.1} parent=11 // pred_check_branch
          %464 = sbr.rel (%p462) target = $region60
        $region59: #{efficientnet_classifier_forward.1} parent=11 // pred_region
          _
        $region60: #{efficientnet_classifier_forward.1} parent=11 // pred_fallthru
          _
        // Predicated region
        $region61: #{efficientnet_classifier_forward.1} parent=11 // pred_check
          %p465 = pneg %p325
        $region62: #{efficientnet_classifier_forward.1} parent=11 // pred_check_branch
          %467 = sbr.rel (%p465) target = $region64
        $region63: #{efficientnet_classifier_forward.1} parent=11 // pred_region
          _
        $region64: #{efficientnet_classifier_forward.1} parent=11 // pred_fallthru
          _
        // Predicated region
        $region65: #{efficientnet_classifier_forward.1} parent=11 // pred_check
          %p468 = pneg %p346
        $region66: #{efficientnet_classifier_forward.1} parent=11 // pred_check_branch
          %470 = sbr.rel (%p468) target = $region68
        $region67: #{efficientnet_classifier_forward.1} parent=11 // pred_region
          _
        $region68: #{efficientnet_classifier_forward.1} parent=11 // pred_fallthru
          _
        // Predicated region
        $region69: #{efficientnet_classifier_forward.1} parent=11 // pred_check
          %p471 = pneg %p367
        $region70: #{efficientnet_classifier_forward.1} parent=11 // pred_check_branch
          %473 = sbr.rel (%p471) target = $region72
        $region71: #{efficientnet_classifier_forward.1} parent=11 // pred_region
          _
        $region72: #{efficientnet_classifier_forward.1} parent=11 // pred_fallthru
          _
        // Predicated region
        $region73: #{efficientnet_classifier_forward.1} parent=11 // pred_check
          %p474 = pneg %p388
        $region74: #{efficientnet_classifier_forward.1} parent=11 // pred_check_branch
          %476 = sbr.rel (%p474) target = $region76
        $region75: #{efficientnet_classifier_forward.1} parent=11 // pred_region
          _
        $region76: #{efficientnet_classifier_forward.1} parent=11 // pred_fallthru
          _
      $region12: #{efficientnet_classifier_forward.1} parent=5 // pred_fallthru
        _
      %p477 = scmp.lt.s32.totalorder %s26, 2
      // Predicated region
      $region77: #{efficientnet_classifier_forward.1} parent=5 // pred_check
        %p478 = pneg %p477
      $region78: #{efficientnet_classifier_forward.1} parent=5 // pred_check_branch
        %480 = sbr.rel (%p478) target = $region80
      $region79: #{efficientnet_classifier_forward.1} parent=5 // pred_region
        // Predicated region
        $region81: #{efficientnet_classifier_forward.1} parent=79 // pred_check
          %p481 = pneg %p46
        $region82: #{efficientnet_classifier_forward.1} parent=79 // pred_check_branch
          %483 = sbr.rel (%p481) target = $region84
        $region83: #{efficientnet_classifier_forward.1} parent=79 // pred_region
          %p484 = scmp.lt.s32.totalorder %s26, 1
          %s485 = scalar_select %p484, %s26, 1
          %s486 = smul.addr %s485, 32
          %s487 = smul.addr %s486, 8
          %s488 = scalar_lea.vmem %s0, %s487
        $region84: #{efficientnet_classifier_forward.1} parent=79 // pred_fallthru
          _
      $region80: #{efficientnet_classifier_forward.1} parent=5 // pred_fallthru
        _
      %p489 = scmp.le.s32.totalorder 1, %s26
      %p490 = scmp.lt.s32.totalorder %s26, 3
      %p491 = pnand %p489, %p490
      %p492 = pneg %p491
      // Predicated region
      $region85: #{efficientnet_classifier_forward.1} parent=5 // pred_check
        _
      $region86: #{efficientnet_classifier_forward.1} parent=5 // pred_check_branch
        %494 = sbr.rel (%p491) target = $region88
      $region87: #{efficientnet_classifier_forward.1} parent=5 // pred_region
        %s495 = ssub.s32 %s26, 1
        %p496 = scmp.lt.s32.totalorder %s31, 1
        %s497 = scalar_select %p496, %s31, 1
        %s498 = smul.addr %s497, 32
        %s499 = smul.addr %s498, 8
        %s500 = scalar_lea.vmem %s0, %s499
        %p501 = pneg %p52
        %p502 = pneg %p49
        %p503 = pneg %p73
        %p504 = pneg %p70
        %p505 = pneg %p94
        %p506 = pneg %p91
        %p507 = pneg %p115
        %p508 = pneg %p112
        %p509 = pneg %p136
        %p510 = pneg %p133
        %p511 = pneg %p157
        %p512 = pneg %p154
        %p513 = pneg %p178
        %p514 = pneg %p175
        %p515 = pneg %p199
        %p516 = pneg %p196
        %p517 = pneg %p220
        %p518 = pneg %p217
        %p519 = pneg %p241
        %p520 = pneg %p238
        %p521 = pneg %p262
        %p522 = pneg %p259
        %p523 = pneg %p283
        %p524 = pneg %p280
        %p525 = pneg %p304
        %p526 = pneg %p301
        %p527 = pneg %p325
        %p528 = pneg %p322
        %p529 = pneg %p346
        %p530 = pneg %p343
        %p531 = pneg %p367
        %p532 = pneg %p364
        %p533 = pneg %p388
        %p534 = pneg %p385
        %p535 = pneg %p414
        %p536 = pneg %p411
        %s537 = sand.u32 %s401, 1
        %s538 = scalar_lea.sflag [#allocation4], %s537
        %s539 = sand.u32 %s401, 1
        %s540 = scalar_lea.vmem [#allocation3], %s539
        %p541 = scmp.lt.s32.totalorder %s31, 1
        %s542 = scalar_select %p541, %s31, 1
        %s543 = smul.addr %s542, 32
        %s544 = smul.addr %s543, 8
        %s545 = scalar_lea.vmem %s0, %s544
        %v547 = vld [vmem:[%s545] sm:$0xff]
        %v548 = vld [vmem:[%s545 + $0x8] sm:$0xff]
        %v549 = vld [vmem:[%s545 + $0x10] sm:$0xff]
        %v550 = vld [vmem:[%s545 + $0x18] sm:$0xff]
        %v551 = vld [vmem:[%s545 + $0x20] sm:$0xff]
        %v552 = vld [vmem:[%s545 + $0x28] sm:$0xff]
        %v553 = vld [vmem:[%s545 + $0x30] sm:$0xff]
        %v554 = vld [vmem:[%s545 + $0x38] sm:$0xff]
        %v555 = vld [vmem:[%s545 + $0x40] sm:$0xff]
        %v556 = vld [vmem:[%s545 + $0x48] sm:$0xff]
        %v557 = vld [vmem:[%s545 + $0x50] sm:$0xff]
        %v558 = vld [vmem:[%s545 + $0x58] sm:$0xff]
        %v559 = vld [vmem:[%s545 + $0x60] sm:$0xff]
        %v560 = vld [vmem:[%s545 + $0x68] sm:$0xff]
        %v561 = vld [vmem:[%s545 + $0x70] sm:$0xff]
        %v562 = vld [vmem:[%s545 + $0x78] sm:$0xff]
        %v563 = vld [vmem:[%s545 + $0x80] sm:$0xff]
        %v564 = vld [vmem:[%s545 + $0x88] sm:$0xff]
        %v565 = vld [vmem:[%s545 + $0x90] sm:$0xff]
        %v566 = vld [vmem:[%s545 + $0x98] sm:$0xff]
        %v567 = vld [vmem:[%s545 + $0xa0] sm:$0xff]
        %v568 = vld [vmem:[%s545 + $0xa8] sm:$0xff]
        %v569 = vld [vmem:[%s545 + $0xb0] sm:$0xff]
        %v570 = vld [vmem:[%s545 + $0xb8] sm:$0xff]
        %v571 = vld [vmem:[%s545 + $0xc0] sm:$0xff]
        %v572 = vld [vmem:[%s545 + $0xc8] sm:$0xff]
        %v573 = vld [vmem:[%s545 + $0xd0] sm:$0xff]
        %v574 = vld [vmem:[%s545 + $0xd8] sm:$0xff]
        %v575 = vld [vmem:[%s545 + $0xe0] sm:$0xff]
        %v576 = vld [vmem:[%s545 + $0xe8] sm:$0xff]
        %v577 = vld [vmem:[%s545 + $0xf0] sm:$0xff]
        %v578 = vld [vmem:[%s545 + $0xf8] sm:$0xff]
        %v579 = vpack.c.bf16 %v548, %v547
        %v580 = vpack.c.bf16 %v550, %v549
        %v581 = vpack.c.bf16 %v552, %v551
        %v582 = vpack.c.bf16 %v554, %v553
        %v583 = vpack.c.bf16 %v556, %v555
        %v584 = vpack.c.bf16 %v558, %v557
        %v585 = vpack.c.bf16 %v560, %v559
        %v586 = vpack.c.bf16 %v562, %v561
        %v587 = vpack.c.bf16 %v564, %v563
        %v588 = vpack.c.bf16 %v566, %v565
        %v589 = vpack.c.bf16 %v568, %v567
        %v590 = vpack.c.bf16 %v570, %v569
        %v591 = vpack.c.bf16 %v572, %v571
        %v592 = vpack.c.bf16 %v574, %v573
        %v593 = vpack.c.bf16 %v576, %v575
        %v594 = vpack.c.bf16 %v578, %v577
        %v595 = vld [vmem:[%s1] sm:$0xf]
        %v596 = vld [vmem:[%s1 + $0x4] sm:$0xf]
        %v597 = vld [vmem:[%s1 + $0x8] sm:$0xf]
        %v598 = vld [vmem:[%s1 + $0xc] sm:$0xf]
        %v599 = vld [vmem:[%s2] sm:$0x1]
        %v601 = vlaneseq
        %v602 = vshrl.u32 %v601, 7
        %v603 = vsub.s32 0, %v602
        %v604 = vrot.slane %v599, %v603
        %v610 = vunpack.c.l.b16 %v595
        %v611 = vunpack.c.l.b16 %v596
        %v612 = vunpack.c.l.b16 %v597
        %v613 = vunpack.c.l.b16 %v598
        %v614 = vpack.c.b16 %v611, %v610
        %v615 = vpack.c.b16 %v613, %v612
        %vm618 = vcmask 261120
        %v620 = vsel %vm618, %v579, 0
        %v623 = vsel %vm618, %v580, 0
        %v626 = vsel %vm618, %v581, 0
        %v629 = vsel %vm618, %v582, 0
        %v632 = vsel %vm618, %v583, 0
        %v635 = vsel %vm618, %v584, 0
        %v638 = vsel %vm618, %v585, 0
        %v641 = vsel %vm618, %v586, 0
        %v644 = vsel %vm618, %v587, 0
        %v647 = vsel %vm618, %v588, 0
        %v650 = vsel %vm618, %v589, 0
        %v653 = vsel %vm618, %v590, 0
        %v656 = vsel %vm618, %v591, 0
        %v659 = vsel %vm618, %v592, 0
        %v662 = vsel %vm618, %v593, 0
        %v665 = vsel %vm618, %v594, 0
        %667 = vmatprep.subr.bf16.mxu0 0
        %668 = vmatpush1.bf16.msra.mxu0 0
        %669 = vmatprep.subr.bf16.mxu0 0
        %670 = vmatpush1.bf16.msra.mxu0 0
        %671 = vmatprep.subr.bf16.mxu0 0
        %672 = vmatpush1.bf16.msra.mxu0 0
        %673 = vmatprep.subr.bf16.mxu0 0
        %674 = vmatpush1.bf16.msra.mxu0 0
        %675 = vmatprep.subr.bf16.mxu0 0
        %676 = vmatpush1.bf16.msra.mxu0 0
        %677 = vmatprep.subr.bf16.mxu0 0
        %678 = vmatpush1.bf16.msra.mxu0 0
        %679 = vmatprep.subr.bf16.mxu0 0
        %680 = vmatpush1.bf16.msra.mxu0 %v615
        %681 = vmatprep.subr.bf16.mxu0 0
        %682 = vmatpush1.bf16.msra.mxu0 %v614
        %683 = vmatprep.subr.bf16.mxu0 0
        %684 = vmatpush2.bf16.msra.mxu0 0
        %685 = vmatprep.subr.bf16.mxu0 0
        %686 = vmatpush2.bf16.msra.mxu0 0
        %687 = vmatprep.subr.bf16.mxu0 0
        %688 = vmatpush2.bf16.msra.mxu0 0
        %689 = vmatprep.subr.bf16.mxu0 0
        %690 = vmatpush2.bf16.msra.mxu0 0
        %691 = vmatprep.subr.bf16.mxu0 0
        %692 = vmatpush2.bf16.msra.mxu0 0
        %693 = vmatprep.subr.bf16.mxu0 0
        %694 = vmatpush2.bf16.msra.mxu0 0
        %695 = vmatprep.subr.bf16.mxu0 0
        %696 = vmatpush2.bf16.msra.mxu0 0
        %697 = vmatprep.subr.bf16.mxu0 0
        %698 = vmatpush2.bf16.msra.mxu0 0
        %699 = vmatprep.mubr.bf16.mxu0 0
        %700 = vmatmul.mubr.bf16.gmra.mxu0 %v620
        %v701 = vpop.f32.mrf.mxu0
        %v702 = vadd.f32 %v604, %v701
        %v703 = vpop.f32.mrf.mxu0
        %v704 = vpop.f32.mrf.mxu0
        %v705 = vadd.f32 %v604, %v704
        %v706 = vpop.f32.mrf.mxu0
        %707 = vmatprep.mubr.bf16.mxu0 0
        %708 = vmatmul.mubr.bf16.gmra.mxu0 %v623
        %v709 = vpop.f32.mrf.mxu0
        %v710 = vadd.f32 %v604, %v709
        %v711 = vpop.f32.mrf.mxu0
        %v712 = vpop.f32.mrf.mxu0
        %v713 = vadd.f32 %v604, %v712
        %v714 = vpop.f32.mrf.mxu0
        %715 = vmatprep.mubr.bf16.mxu0 0
        %716 = vmatmul.mubr.bf16.gmra.mxu0 %v626
        %v717 = vpop.f32.mrf.mxu0
        %v718 = vadd.f32 %v604, %v717
        %v719 = vpop.f32.mrf.mxu0
        %v720 = vpop.f32.mrf.mxu0
        %v721 = vadd.f32 %v604, %v720
        %v722 = vpop.f32.mrf.mxu0
        %723 = vmatprep.mubr.bf16.mxu0 0
        %724 = vmatmul.mubr.bf16.gmra.mxu0 %v629
        %v725 = vpop.f32.mrf.mxu0
        %v726 = vadd.f32 %v604, %v725
        %v727 = vpop.f32.mrf.mxu0
        %v728 = vpop.f32.mrf.mxu0
        %v729 = vadd.f32 %v604, %v728
        %v730 = vpop.f32.mrf.mxu0
        %731 = vmatprep.mubr.bf16.mxu0 0
        %732 = vmatmul.mubr.bf16.gmra.mxu0 %v632
        %v733 = vpop.f32.mrf.mxu0
        %v734 = vadd.f32 %v604, %v733
        %v735 = vpop.f32.mrf.mxu0
        %v736 = vpop.f32.mrf.mxu0
        %v737 = vadd.f32 %v604, %v736
        %v738 = vpop.f32.mrf.mxu0
        %739 = vmatprep.mubr.bf16.mxu0 0
        %740 = vmatmul.mubr.bf16.gmra.mxu0 %v635
        %v741 = vpop.f32.mrf.mxu0
        %v742 = vadd.f32 %v604, %v741
        %v743 = vpop.f32.mrf.mxu0
        %v744 = vpop.f32.mrf.mxu0
        %v745 = vadd.f32 %v604, %v744
        %v746 = vpop.f32.mrf.mxu0
        %747 = vmatprep.mubr.bf16.mxu0 0
        %748 = vmatmul.mubr.bf16.gmra.mxu0 %v638
        %v749 = vpop.f32.mrf.mxu0
        %v750 = vadd.f32 %v604, %v749
        %v751 = vpop.f32.mrf.mxu0
        %v752 = vpop.f32.mrf.mxu0
        %v753 = vadd.f32 %v604, %v752
        %v754 = vpop.f32.mrf.mxu0
        %755 = vmatprep.mubr.bf16.mxu0 0
        %756 = vmatmul.mubr.bf16.gmra.mxu0 %v641
        %v757 = vpop.f32.mrf.mxu0
        %v758 = vadd.f32 %v604, %v757
        %v759 = vpop.f32.mrf.mxu0
        %v760 = vpop.f32.mrf.mxu0
        %v761 = vadd.f32 %v604, %v760
        %v762 = vpop.f32.mrf.mxu0
        %763 = vmatprep.mubr.bf16.mxu0 0
        %764 = vmatmul.mubr.bf16.gmra.mxu0 %v644
        %v765 = vpop.f32.mrf.mxu0
        %v766 = vadd.f32 %v604, %v765
        %v767 = vpop.f32.mrf.mxu0
        %v768 = vpop.f32.mrf.mxu0
        %v769 = vadd.f32 %v604, %v768
        %v770 = vpop.f32.mrf.mxu0
        %771 = vmatprep.mubr.bf16.mxu0 0
        %772 = vmatmul.mubr.bf16.gmra.mxu0 %v647
        %v773 = vpop.f32.mrf.mxu0
        %v774 = vadd.f32 %v604, %v773
        %v775 = vpop.f32.mrf.mxu0
        %v776 = vpop.f32.mrf.mxu0
        %v777 = vadd.f32 %v604, %v776
        %v778 = vpop.f32.mrf.mxu0
        %779 = vmatprep.mubr.bf16.mxu0 0
        %780 = vmatmul.mubr.bf16.gmra.mxu0 %v650
        %v781 = vpop.f32.mrf.mxu0
        %v782 = vadd.f32 %v604, %v781
        %v783 = vpop.f32.mrf.mxu0
        %v784 = vpop.f32.mrf.mxu0
        %v785 = vadd.f32 %v604, %v784
        %v786 = vpop.f32.mrf.mxu0
        %787 = vmatprep.mubr.bf16.mxu0 0
        %788 = vmatmul.mubr.bf16.gmra.mxu0 %v653
        %v789 = vpop.f32.mrf.mxu0
        %v790 = vadd.f32 %v604, %v789
        %v791 = vpop.f32.mrf.mxu0
        %v792 = vpop.f32.mrf.mxu0
        %v793 = vadd.f32 %v604, %v792
        %v794 = vpop.f32.mrf.mxu0
        %795 = vmatprep.mubr.bf16.mxu0 0
        %796 = vmatmul.mubr.bf16.gmra.mxu0 %v656
        %v797 = vpop.f32.mrf.mxu0
        %v798 = vadd.f32 %v604, %v797
        %v799 = vpop.f32.mrf.mxu0
        %v800 = vpop.f32.mrf.mxu0
        %v801 = vadd.f32 %v604, %v800
        %v802 = vpop.f32.mrf.mxu0
        %803 = vmatprep.mubr.bf16.mxu0 0
        %804 = vmatmul.mubr.bf16.gmra.mxu0 %v659
        %v805 = vpop.f32.mrf.mxu0
        %v806 = vadd.f32 %v604, %v805
        %v807 = vpop.f32.mrf.mxu0
        %v808 = vpop.f32.mrf.mxu0
        %v809 = vadd.f32 %v604, %v808
        %v810 = vpop.f32.mrf.mxu0
        %811 = vmatprep.mubr.bf16.mxu0 0
        %812 = vmatmul.mubr.bf16.gmra.mxu0 %v662
        %v813 = vpop.f32.mrf.mxu0
        %v814 = vadd.f32 %v604, %v813
        %v815 = vpop.f32.mrf.mxu0
        %v816 = vpop.f32.mrf.mxu0
        %v817 = vadd.f32 %v604, %v816
        %v818 = vpop.f32.mrf.mxu0
        %819 = vmatprep.mubr.bf16.mxu0 0
        %820 = vmatmul.mubr.bf16.gmra.mxu0 %v665
        %v821 = vpop.f32.mrf.mxu0
        %v822 = vadd.f32 %v604, %v821
        %v823 = vpop.f32.mrf.mxu0
        %v824 = vpop.f32.mrf.mxu0
        %v825 = vadd.f32 %v604, %v824
        %v826 = vpop.f32.mrf.mxu0
        %827 = vdwg.mxu0
        %v828 = vxor.u32 %v702, 2147483648
        %v829 = vxor.u32 %v705, 2147483648
        %v830 = vxor.u32 %v710, 2147483648
        %v831 = vxor.u32 %v713, 2147483648
        %v832 = vxor.u32 %v718, 2147483648
        %v833 = vxor.u32 %v721, 2147483648
        %v834 = vxor.u32 %v726, 2147483648
        %v835 = vxor.u32 %v729, 2147483648
        %v836 = vxor.u32 %v734, 2147483648
        %v837 = vxor.u32 %v737, 2147483648
        %v838 = vxor.u32 %v742, 2147483648
        %v839 = vxor.u32 %v745, 2147483648
        %v840 = vxor.u32 %v750, 2147483648
        %v841 = vxor.u32 %v753, 2147483648
        %v842 = vxor.u32 %v758, 2147483648
        %v843 = vxor.u32 %v761, 2147483648
        %v844 = vxor.u32 %v766, 2147483648
        %v845 = vxor.u32 %v769, 2147483648
        %v846 = vxor.u32 %v774, 2147483648
        %v847 = vxor.u32 %v777, 2147483648
        %v848 = vxor.u32 %v782, 2147483648
        %v849 = vxor.u32 %v785, 2147483648
        %v850 = vxor.u32 %v790, 2147483648
        %v851 = vxor.u32 %v793, 2147483648
        %v852 = vxor.u32 %v798, 2147483648
        %v853 = vxor.u32 %v801, 2147483648
        %v854 = vxor.u32 %v806, 2147483648
        %v855 = vxor.u32 %v809, 2147483648
        %v856 = vxor.u32 %v814, 2147483648
        %v857 = vxor.u32 %v817, 2147483648
        %v858 = vxor.u32 %v822, 2147483648
        %v859 = vxor.u32 %v825, 2147483648
        %v860 = vmul.f32 %v828, 1.442695
        %v861 = vpow.pop %v860
        %v862 = vmul.f32 %v829, 1.442695
        %v863 = vpow.pop %v862
        %v864 = vmul.f32 %v830, 1.442695
        %v865 = vpow.pop %v864
        %v866 = vmul.f32 %v831, 1.442695
        %v867 = vpow.pop %v866
        %v868 = vmul.f32 %v832, 1.442695
        %v869 = vpow.pop %v868
        %v870 = vmul.f32 %v833, 1.442695
        %v871 = vpow.pop %v870
        %v872 = vmul.f32 %v834, 1.442695
        %v873 = vpow.pop %v872
        %v874 = vmul.f32 %v835, 1.442695
        %v875 = vpow.pop %v874
        %v876 = vmul.f32 %v836, 1.442695
        %v877 = vpow.pop %v876
        %v878 = vmul.f32 %v837, 1.442695
        %v879 = vpow.pop %v878
        %v880 = vmul.f32 %v838, 1.442695
        %v881 = vpow.pop %v880
        %v882 = vmul.f32 %v839, 1.442695
        %v883 = vpow.pop %v882
        %v884 = vmul.f32 %v840, 1.442695
        %v885 = vpow.pop %v884
        %v886 = vmul.f32 %v841, 1.442695
        %v887 = vpow.pop %v886
        %v888 = vmul.f32 %v842, 1.442695
        %v889 = vpow.pop %v888
        %v890 = vmul.f32 %v843, 1.442695
        %v891 = vpow.pop %v890
        %v892 = vmul.f32 %v844, 1.442695
        %v893 = vpow.pop %v892
        %v894 = vmul.f32 %v845, 1.442695
        %v895 = vpow.pop %v894
        %v896 = vmul.f32 %v846, 1.442695
        %v897 = vpow.pop %v896
        %v898 = vmul.f32 %v847, 1.442695
        %v899 = vpow.pop %v898
        %v900 = vmul.f32 %v848, 1.442695
        %v901 = vpow.pop %v900
        %v902 = vmul.f32 %v849, 1.442695
        %v903 = vpow.pop %v902
        %v904 = vmul.f32 %v850, 1.442695
        %v905 = vpow.pop %v904
        %v906 = vmul.f32 %v851, 1.442695
        %v907 = vpow.pop %v906
        %v908 = vmul.f32 %v852, 1.442695
        %v909 = vpow.pop %v908
        %v910 = vmul.f32 %v853, 1.442695
        %v911 = vpow.pop %v910
        %v912 = vmul.f32 %v854, 1.442695
        %v913 = vpow.pop %v912
        %v914 = vmul.f32 %v855, 1.442695
        %v915 = vpow.pop %v914
        %v916 = vmul.f32 %v856, 1.442695
        %v917 = vpow.pop %v916
        %v918 = vmul.f32 %v857, 1.442695
        %v919 = vpow.pop %v918
        %v920 = vmul.f32 %v858, 1.442695
        %v921 = vpow.pop %v920
        %v922 = vmul.f32 %v859, 1.442695
        %v923 = vpow.pop %v922
        %v924 = vadd.f32 %v861, 1.0
        %v925 = vadd.f32 %v863, 1.0
        %v926 = vadd.f32 %v865, 1.0
        %v927 = vadd.f32 %v867, 1.0
        %v928 = vadd.f32 %v869, 1.0
        %v929 = vadd.f32 %v871, 1.0
        %v930 = vadd.f32 %v873, 1.0
        %v931 = vadd.f32 %v875, 1.0
        %v932 = vadd.f32 %v877, 1.0
        %v933 = vadd.f32 %v879, 1.0
        %v934 = vadd.f32 %v881, 1.0
        %v935 = vadd.f32 %v883, 1.0
        %v936 = vadd.f32 %v885, 1.0
        %v937 = vadd.f32 %v887, 1.0
        %v938 = vadd.f32 %v889, 1.0
        %v939 = vadd.f32 %v891, 1.0
        %v940 = vadd.f32 %v893, 1.0
        %v941 = vadd.f32 %v895, 1.0
        %v942 = vadd.f32 %v897, 1.0
        %v943 = vadd.f32 %v899, 1.0
        %v944 = vadd.f32 %v901, 1.0
        %v945 = vadd.f32 %v903, 1.0
        %v946 = vadd.f32 %v905, 1.0
        %v947 = vadd.f32 %v907, 1.0
        %v948 = vadd.f32 %v909, 1.0
        %v949 = vadd.f32 %v911, 1.0
        %v950 = vadd.f32 %v913, 1.0
        %v951 = vadd.f32 %v915, 1.0
        %v952 = vadd.f32 %v917, 1.0
        %v953 = vadd.f32 %v919, 1.0
        %v954 = vadd.f32 %v921, 1.0
        %v955 = vadd.f32 %v923, 1.0
        %v956 = vrcp.pop %v924
        %v957 = vmul.f32 1.0, %v956
        %v958 = vrcp.pop %v925
        %v959 = vmul.f32 1.0, %v958
        %v960 = vrcp.pop %v926
        %v961 = vmul.f32 1.0, %v960
        %v962 = vrcp.pop %v927
        %v963 = vmul.f32 1.0, %v962
        %v964 = vrcp.pop %v928
        %v965 = vmul.f32 1.0, %v964
        %v966 = vrcp.pop %v929
        %v967 = vmul.f32 1.0, %v966
        %v968 = vrcp.pop %v930
        %v969 = vmul.f32 1.0, %v968
        %v970 = vrcp.pop %v931
        %v971 = vmul.f32 1.0, %v970
        %v972 = vrcp.pop %v932
        %v973 = vmul.f32 1.0, %v972
        %v974 = vrcp.pop %v933
        %v975 = vmul.f32 1.0, %v974
        %v976 = vrcp.pop %v934
        %v977 = vmul.f32 1.0, %v976
        %v978 = vrcp.pop %v935
        %v979 = vmul.f32 1.0, %v978
        %v980 = vrcp.pop %v936
        %v981 = vmul.f32 1.0, %v980
        %v982 = vrcp.pop %v937
        %v983 = vmul.f32 1.0, %v982
        %v984 = vrcp.pop %v938
        %v985 = vmul.f32 1.0, %v984
        %v986 = vrcp.pop %v939
        %v987 = vmul.f32 1.0, %v986
        %v988 = vrcp.pop %v940
        %v989 = vmul.f32 1.0, %v988
        %v990 = vrcp.pop %v941
        %v991 = vmul.f32 1.0, %v990
        %v992 = vrcp.pop %v942
        %v993 = vmul.f32 1.0, %v992
        %v994 = vrcp.pop %v943
        %v995 = vmul.f32 1.0, %v994
        %v996 = vrcp.pop %v944
        %v997 = vmul.f32 1.0, %v996
        %v998 = vrcp.pop %v945
        %v999 = vmul.f32 1.0, %v998
        %v1000 = vrcp.pop %v946
        %v1001 = vmul.f32 1.0, %v1000
        %v1002 = vrcp.pop %v947
        %v1003 = vmul.f32 1.0, %v1002
        %v1004 = vrcp.pop %v948
        %v1005 = vmul.f32 1.0, %v1004
        %v1006 = vrcp.pop %v949
        %v1007 = vmul.f32 1.0, %v1006
        %v1008 = vrcp.pop %v950
        %v1009 = vmul.f32 1.0, %v1008
        %v1010 = vrcp.pop %v951
        %v1011 = vmul.f32 1.0, %v1010
        %v1012 = vrcp.pop %v952
        %v1013 = vmul.f32 1.0, %v1012
        %v1014 = vrcp.pop %v953
        %v1015 = vmul.f32 1.0, %v1014
        %v1016 = vrcp.pop %v954
        %v1017 = vmul.f32 1.0, %v1016
        %v1018 = vrcp.pop %v955
        %v1019 = vmul.f32 1.0, %v1018
        %v1020 = vmul.f32 %v702, %v957
        %v1021 = vmul.f32 %v705, %v959
        %v1022 = vmul.f32 %v710, %v961
        %v1023 = vmul.f32 %v713, %v963
        %v1024 = vmul.f32 %v718, %v965
        %v1025 = vmul.f32 %v721, %v967
        %v1026 = vmul.f32 %v726, %v969
        %v1027 = vmul.f32 %v729, %v971
        %v1028 = vmul.f32 %v734, %v973
        %v1029 = vmul.f32 %v737, %v975
        %v1030 = vmul.f32 %v742, %v977
        %v1031 = vmul.f32 %v745, %v979
        %v1032 = vmul.f32 %v750, %v981
        %v1033 = vmul.f32 %v753, %v983
        %v1034 = vmul.f32 %v758, %v985
        %v1035 = vmul.f32 %v761, %v987
        %v1036 = vmul.f32 %v766, %v989
        %v1037 = vmul.f32 %v769, %v991
        %v1038 = vmul.f32 %v774, %v993
        %v1039 = vmul.f32 %v777, %v995
        %v1040 = vmul.f32 %v782, %v997
        %v1041 = vmul.f32 %v785, %v999
        %v1042 = vmul.f32 %v790, %v1001
        %v1043 = vmul.f32 %v793, %v1003
        %v1044 = vmul.f32 %v798, %v1005
        %v1045 = vmul.f32 %v801, %v1007
        %v1046 = vmul.f32 %v806, %v1009
        %v1047 = vmul.f32 %v809, %v1011
        %v1048 = vmul.f32 %v814, %v1013
        %v1049 = vmul.f32 %v817, %v1015
        %v1050 = vmul.f32 %v822, %v1017
        %v1051 = vmul.f32 %v825, %v1019
        %v1052 = vpack.c.bf16 %v1021, %v1020
        %v1053 = vpack.c.bf16 %v1023, %v1022
        %v1054 = vpack.c.bf16 %v1025, %v1024
        %v1055 = vpack.c.bf16 %v1027, %v1026
        %v1056 = vpack.c.bf16 %v1029, %v1028
        %v1057 = vpack.c.bf16 %v1031, %v1030
        %v1058 = vpack.c.bf16 %v1033, %v1032
        %v1059 = vpack.c.bf16 %v1035, %v1034
        %v1060 = vpack.c.bf16 %v1037, %v1036
        %v1061 = vpack.c.bf16 %v1039, %v1038
        %v1062 = vpack.c.bf16 %v1041, %v1040
        %v1063 = vpack.c.bf16 %v1043, %v1042
        %v1064 = vpack.c.bf16 %v1045, %v1044
        %v1065 = vpack.c.bf16 %v1047, %v1046
        %v1066 = vpack.c.bf16 %v1049, %v1048
        %v1067 = vpack.c.bf16 %v1051, %v1050
        %v1068 = vld [vmem:[%s3] sm:$0xf]
        %v1069 = vld [vmem:[%s3 + $0x4] sm:$0xf]
        %v1070 = vld [vmem:[%s4] sm:$0x1]
        %v1072 = vlaneseq
        %v1073 = vshrl.u32 %v1072, 7
        %v1074 = vsub.s32 0, %v1073
        %v1075 = vrot.slane %v1070, %v1074
        %v1079 = vunpack.c.l.b16 %v1068
        %v1080 = vunpack.c.l.b16 %v1069
        %v1081 = vpack.c.b16 %v1080, %v1079
        %vm1083 = vcmask 130048
        %v1085 = vsel %vm1083, %v1052, 0
        %v1088 = vsel %vm1083, %v1053, 0
        %v1091 = vsel %vm1083, %v1054, 0
        %v1094 = vsel %vm1083, %v1055, 0
        %v1097 = vsel %vm1083, %v1056, 0
        %v1100 = vsel %vm1083, %v1057, 0
        %v1103 = vsel %vm1083, %v1058, 0
        %v1106 = vsel %vm1083, %v1059, 0
        %v1109 = vsel %vm1083, %v1060, 0
        %v1112 = vsel %vm1083, %v1061, 0
        %v1115 = vsel %vm1083, %v1062, 0
        %v1118 = vsel %vm1083, %v1063, 0
        %v1121 = vsel %vm1083, %v1064, 0
        %v1124 = vsel %vm1083, %v1065, 0
        %v1127 = vsel %vm1083, %v1066, 0
        %v1130 = vsel %vm1083, %v1067, 0
        %1132 = vmatprep.subr.bf16.mxu0 0
        %1133 = vmatpush1.bf16.msra.mxu0 0
        %1134 = vmatprep.subr.bf16.mxu0 0
        %1135 = vmatpush1.bf16.msra.mxu0 0
        %1136 = vmatprep.subr.bf16.mxu0 0
        %1137 = vmatpush1.bf16.msra.mxu0 0
        %1138 = vmatprep.subr.bf16.mxu0 0
        %1139 = vmatpush1.bf16.msra.mxu0 0
        %1140 = vmatprep.subr.bf16.mxu0 0
        %1141 = vmatpush1.bf16.msra.mxu0 0
        %1142 = vmatprep.subr.bf16.mxu0 0
        %1143 = vmatpush1.bf16.msra.mxu0 0
        %1144 = vmatprep.subr.bf16.mxu0 0
        %1145 = vmatpush1.bf16.msra.mxu0 0
        %1146 = vmatprep.subr.bf16.mxu0 0
        %1147 = vmatpush1.bf16.msra.mxu0 %v1081
        %1148 = vmatprep.subr.bf16.mxu0 0
        %1149 = vmatpush2.bf16.msra.mxu0 0
        %1150 = vmatprep.subr.bf16.mxu0 0
        %1151 = vmatpush2.bf16.msra.mxu0 0
        %1152 = vmatprep.subr.bf16.mxu0 0
        %1153 = vmatpush2.bf16.msra.mxu0 0
        %1154 = vmatprep.subr.bf16.mxu0 0
        %1155 = vmatpush2.bf16.msra.mxu0 0
        %1156 = vmatprep.subr.bf16.mxu0 0
        %1157 = vmatpush2.bf16.msra.mxu0 0
        %1158 = vmatprep.subr.bf16.mxu0 0
        %1159 = vmatpush2.bf16.msra.mxu0 0
        %1160 = vmatprep.subr.bf16.mxu0 0
        %1161 = vmatpush2.bf16.msra.mxu0 0
        %1162 = vmatprep.subr.bf16.mxu0 0
        %1163 = vmatpush2.bf16.msra.mxu0 0
        %1164 = vmatprep.mubr.bf16.mxu0 0
        %1165 = vmatmul.mubr.bf16.gmra.mxu0 %v1085
        %v1166 = vpop.f32.mrf.mxu0
        %v1167 = vadd.f32 %v1075, %v1166
        %v1168 = vpop.f32.mrf.mxu0
        %v1169 = vpop.f32.mrf.mxu0
        %v1170 = vadd.f32 %v1075, %v1169
        %v1171 = vpop.f32.mrf.mxu0
        %1172 = vmatprep.mubr.bf16.mxu0 0
        %1173 = vmatmul.mubr.bf16.gmra.mxu0 %v1088
        %v1174 = vpop.f32.mrf.mxu0
        %v1175 = vadd.f32 %v1075, %v1174
        %v1176 = vpop.f32.mrf.mxu0
        %v1177 = vpop.f32.mrf.mxu0
        %v1178 = vadd.f32 %v1075, %v1177
        %v1179 = vpop.f32.mrf.mxu0
        %1180 = vmatprep.mubr.bf16.mxu0 0
        %1181 = vmatmul.mubr.bf16.gmra.mxu0 %v1091
        %v1182 = vpop.f32.mrf.mxu0
        %v1183 = vadd.f32 %v1075, %v1182
        %v1184 = vpop.f32.mrf.mxu0
        %v1185 = vpop.f32.mrf.mxu0
        %v1186 = vadd.f32 %v1075, %v1185
        %v1187 = vpop.f32.mrf.mxu0
        %1188 = vmatprep.mubr.bf16.mxu0 0
        %1189 = vmatmul.mubr.bf16.gmra.mxu0 %v1094
        %v1190 = vpop.f32.mrf.mxu0
        %v1191 = vadd.f32 %v1075, %v1190
        %v1192 = vpop.f32.mrf.mxu0
        %v1193 = vpop.f32.mrf.mxu0
        %v1194 = vadd.f32 %v1075, %v1193
        %v1195 = vpop.f32.mrf.mxu0
        %1196 = vmatprep.mubr.bf16.mxu0 0
        %1197 = vmatmul.mubr.bf16.gmra.mxu0 %v1097
        %v1198 = vpop.f32.mrf.mxu0
        %v1199 = vadd.f32 %v1075, %v1198
        %v1200 = vpop.f32.mrf.mxu0
        %v1201 = vpop.f32.mrf.mxu0
        %v1202 = vadd.f32 %v1075, %v1201
        %v1203 = vpop.f32.mrf.mxu0
        %1204 = vmatprep.mubr.bf16.mxu0 0
        %1205 = vmatmul.mubr.bf16.gmra.mxu0 %v1100
        %v1206 = vpop.f32.mrf.mxu0
        %v1207 = vadd.f32 %v1075, %v1206
        %v1208 = vpop.f32.mrf.mxu0
        %v1209 = vpop.f32.mrf.mxu0
        %v1210 = vadd.f32 %v1075, %v1209
        %v1211 = vpop.f32.mrf.mxu0
        %1212 = vmatprep.mubr.bf16.mxu0 0
        %1213 = vmatmul.mubr.bf16.gmra.mxu0 %v1103
        %v1214 = vpop.f32.mrf.mxu0
        %v1215 = vadd.f32 %v1075, %v1214
        %v1216 = vpop.f32.mrf.mxu0
        %v1217 = vpop.f32.mrf.mxu0
        %v1218 = vadd.f32 %v1075, %v1217
        %v1219 = vpop.f32.mrf.mxu0
        %1220 = vmatprep.mubr.bf16.mxu0 0
        %1221 = vmatmul.mubr.bf16.gmra.mxu0 %v1106
        %v1222 = vpop.f32.mrf.mxu0
        %v1223 = vadd.f32 %v1075, %v1222
        %v1224 = vpop.f32.mrf.mxu0
        %v1225 = vpop.f32.mrf.mxu0
        %v1226 = vadd.f32 %v1075, %v1225
        %v1227 = vpop.f32.mrf.mxu0
        %1228 = vmatprep.mubr.bf16.mxu0 0
        %1229 = vmatmul.mubr.bf16.gmra.mxu0 %v1109
        %v1230 = vpop.f32.mrf.mxu0
        %v1231 = vadd.f32 %v1075, %v1230
        %v1232 = vpop.f32.mrf.mxu0
        %v1233 = vpop.f32.mrf.mxu0
        %v1234 = vadd.f32 %v1075, %v1233
        %v1235 = vpop.f32.mrf.mxu0
        %1236 = vmatprep.mubr.bf16.mxu0 0
        %1237 = vmatmul.mubr.bf16.gmra.mxu0 %v1112
        %v1238 = vpop.f32.mrf.mxu0
        %v1239 = vadd.f32 %v1075, %v1238
        %v1240 = vpop.f32.mrf.mxu0
        %v1241 = vpop.f32.mrf.mxu0
        %v1242 = vadd.f32 %v1075, %v1241
        %v1243 = vpop.f32.mrf.mxu0
        %1244 = vmatprep.mubr.bf16.mxu0 0
        %1245 = vmatmul.mubr.bf16.gmra.mxu0 %v1115
        %v1246 = vpop.f32.mrf.mxu0
        %v1247 = vadd.f32 %v1075, %v1246
        %v1248 = vpop.f32.mrf.mxu0
        %v1249 = vpop.f32.mrf.mxu0
        %v1250 = vadd.f32 %v1075, %v1249
        %v1251 = vpop.f32.mrf.mxu0
        %1252 = vmatprep.mubr.bf16.mxu0 0
        %1253 = vmatmul.mubr.bf16.gmra.mxu0 %v1118
        %v1254 = vpop.f32.mrf.mxu0
        %v1255 = vadd.f32 %v1075, %v1254
        %v1256 = vpop.f32.mrf.mxu0
        %v1257 = vpop.f32.mrf.mxu0
        %v1258 = vadd.f32 %v1075, %v1257
        %v1259 = vpop.f32.mrf.mxu0
        %1260 = vmatprep.mubr.bf16.mxu0 0
        %1261 = vmatmul.mubr.bf16.gmra.mxu0 %v1121
        %v1262 = vpop.f32.mrf.mxu0
        %v1263 = vadd.f32 %v1075, %v1262
        %v1264 = vpop.f32.mrf.mxu0
        %v1265 = vpop.f32.mrf.mxu0
        %v1266 = vadd.f32 %v1075, %v1265
        %v1267 = vpop.f32.mrf.mxu0
        %1268 = vmatprep.mubr.bf16.mxu0 0
        %1269 = vmatmul.mubr.bf16.gmra.mxu0 %v1124
        %v1270 = vpop.f32.mrf.mxu0
        %v1271 = vadd.f32 %v1075, %v1270
        %v1272 = vpop.f32.mrf.mxu0
        %v1273 = vpop.f32.mrf.mxu0
        %v1274 = vadd.f32 %v1075, %v1273
        %v1275 = vpop.f32.mrf.mxu0
        %1276 = vmatprep.mubr.bf16.mxu0 0
        %1277 = vmatmul.mubr.bf16.gmra.mxu0 %v1127
        %v1278 = vpop.f32.mrf.mxu0
        %v1279 = vadd.f32 %v1075, %v1278
        %v1280 = vpop.f32.mrf.mxu0
        %v1281 = vpop.f32.mrf.mxu0
        %v1282 = vadd.f32 %v1075, %v1281
        %v1283 = vpop.f32.mrf.mxu0
        %1284 = vmatprep.mubr.bf16.mxu0 0
        %1285 = vmatmul.mubr.bf16.gmra.mxu0 %v1130
        %v1286 = vpop.f32.mrf.mxu0
        %v1287 = vadd.f32 %v1075, %v1286
        %v1288 = vpop.f32.mrf.mxu0
        %v1289 = vpop.f32.mrf.mxu0
        %v1290 = vadd.f32 %v1075, %v1289
        %v1291 = vpop.f32.mrf.mxu0
        %1292 = vdwg.mxu0
        %v1293 = vxor.u32 %v1167, 2147483648
        %v1294 = vxor.u32 %v1170, 2147483648
        %v1295 = vxor.u32 %v1175, 2147483648
        %v1296 = vxor.u32 %v1178, 2147483648
        %v1297 = vxor.u32 %v1183, 2147483648
        %v1298 = vxor.u32 %v1186, 2147483648
        %v1299 = vxor.u32 %v1191, 2147483648
        %v1300 = vxor.u32 %v1194, 2147483648
        %v1301 = vxor.u32 %v1199, 2147483648
        %v1302 = vxor.u32 %v1202, 2147483648
        %v1303 = vxor.u32 %v1207, 2147483648
        %v1304 = vxor.u32 %v1210, 2147483648
        %v1305 = vxor.u32 %v1215, 2147483648
        %v1306 = vxor.u32 %v1218, 2147483648
        %v1307 = vxor.u32 %v1223, 2147483648
        %v1308 = vxor.u32 %v1226, 2147483648
        %v1309 = vxor.u32 %v1231, 2147483648
        %v1310 = vxor.u32 %v1234, 2147483648
        %v1311 = vxor.u32 %v1239, 2147483648
        %v1312 = vxor.u32 %v1242, 2147483648
        %v1313 = vxor.u32 %v1247, 2147483648
        %v1314 = vxor.u32 %v1250, 2147483648
        %v1315 = vxor.u32 %v1255, 2147483648
        %v1316 = vxor.u32 %v1258, 2147483648
        %v1317 = vxor.u32 %v1263, 2147483648
        %v1318 = vxor.u32 %v1266, 2147483648
        %v1319 = vxor.u32 %v1271, 2147483648
        %v1320 = vxor.u32 %v1274, 2147483648
        %v1321 = vxor.u32 %v1279, 2147483648
        %v1322 = vxor.u32 %v1282, 2147483648
        %v1323 = vxor.u32 %v1287, 2147483648
        %v1324 = vxor.u32 %v1290, 2147483648
        %v1325 = vmul.f32 %v1293, 1.442695
        %v1326 = vpow.pop %v1325
        %v1327 = vmul.f32 %v1294, 1.442695
        %v1328 = vpow.pop %v1327
        %v1329 = vmul.f32 %v1295, 1.442695
        %v1330 = vpow.pop %v1329
        %v1331 = vmul.f32 %v1296, 1.442695
        %v1332 = vpow.pop %v1331
        %v1333 = vmul.f32 %v1297, 1.442695
        %v1334 = vpow.pop %v1333
        %v1335 = vmul.f32 %v1298, 1.442695
        %v1336 = vpow.pop %v1335
        %v1337 = vmul.f32 %v1299, 1.442695
        %v1338 = vpow.pop %v1337
        %v1339 = vmul.f32 %v1300, 1.442695
        %v1340 = vpow.pop %v1339
        %v1341 = vmul.f32 %v1301, 1.442695
        %v1342 = vpow.pop %v1341
        %v1343 = vmul.f32 %v1302, 1.442695
        %v1344 = vpow.pop %v1343
        %v1345 = vmul.f32 %v1303, 1.442695
        %v1346 = vpow.pop %v1345
        %v1347 = vmul.f32 %v1304, 1.442695
        %v1348 = vpow.pop %v1347
        %v1349 = vmul.f32 %v1305, 1.442695
        %v1350 = vpow.pop %v1349
        %v1351 = vmul.f32 %v1306, 1.442695
        %v1352 = vpow.pop %v1351
        %v1353 = vmul.f32 %v1307, 1.442695
        %v1354 = vpow.pop %v1353
        %v1355 = vmul.f32 %v1308, 1.442695
        %v1356 = vpow.pop %v1355
        %v1357 = vmul.f32 %v1309, 1.442695
        %v1358 = vpow.pop %v1357
        %v1359 = vmul.f32 %v1310, 1.442695
        %v1360 = vpow.pop %v1359
        %v1361 = vmul.f32 %v1311, 1.442695
        %v1362 = vpow.pop %v1361
        %v1363 = vmul.f32 %v1312, 1.442695
        %v1364 = vpow.pop %v1363
        %v1365 = vmul.f32 %v1313, 1.442695
        %v1366 = vpow.pop %v1365
        %v1367 = vmul.f32 %v1314, 1.442695
        %v1368 = vpow.pop %v1367
        %v1369 = vmul.f32 %v1315, 1.442695
        %v1370 = vpow.pop %v1369
        %v1371 = vmul.f32 %v1316, 1.442695
        %v1372 = vpow.pop %v1371
        %v1373 = vmul.f32 %v1317, 1.442695
        %v1374 = vpow.pop %v1373
        %v1375 = vmul.f32 %v1318, 1.442695
        %v1376 = vpow.pop %v1375
        %v1377 = vmul.f32 %v1319, 1.442695
        %v1378 = vpow.pop %v1377
        %v1379 = vmul.f32 %v1320, 1.442695
        %v1380 = vpow.pop %v1379
        %v1381 = vmul.f32 %v1321, 1.442695
        %v1382 = vpow.pop %v1381
        %v1383 = vmul.f32 %v1322, 1.442695
        %v1384 = vpow.pop %v1383
        %v1385 = vmul.f32 %v1323, 1.442695
        %v1386 = vpow.pop %v1385
        %v1387 = vmul.f32 %v1324, 1.442695
        %v1388 = vpow.pop %v1387
        %v1389 = vadd.f32 %v1326, 1.0
        %v1390 = vadd.f32 %v1328, 1.0
        %v1391 = vadd.f32 %v1330, 1.0
        %v1392 = vadd.f32 %v1332, 1.0
        %v1393 = vadd.f32 %v1334, 1.0
        %v1394 = vadd.f32 %v1336, 1.0
        %v1395 = vadd.f32 %v1338, 1.0
        %v1396 = vadd.f32 %v1340, 1.0
        %v1397 = vadd.f32 %v1342, 1.0
        %v1398 = vadd.f32 %v1344, 1.0
        %v1399 = vadd.f32 %v1346, 1.0
        %v1400 = vadd.f32 %v1348, 1.0
        %v1401 = vadd.f32 %v1350, 1.0
        %v1402 = vadd.f32 %v1352, 1.0
        %v1403 = vadd.f32 %v1354, 1.0
        %v1404 = vadd.f32 %v1356, 1.0
        %v1405 = vadd.f32 %v1358, 1.0
        %v1406 = vadd.f32 %v1360, 1.0
        %v1407 = vadd.f32 %v1362, 1.0
        %v1408 = vadd.f32 %v1364, 1.0
        %v1409 = vadd.f32 %v1366, 1.0
        %v1410 = vadd.f32 %v1368, 1.0
        %v1411 = vadd.f32 %v1370, 1.0
        %v1412 = vadd.f32 %v1372, 1.0
        %v1413 = vadd.f32 %v1374, 1.0
        %v1414 = vadd.f32 %v1376, 1.0
        %v1415 = vadd.f32 %v1378, 1.0
        %v1416 = vadd.f32 %v1380, 1.0
        %v1417 = vadd.f32 %v1382, 1.0
        %v1418 = vadd.f32 %v1384, 1.0
        %v1419 = vadd.f32 %v1386, 1.0
        %v1420 = vadd.f32 %v1388, 1.0
        %v1421 = vrcp.pop %v1389
        %v1422 = vmul.f32 1.0, %v1421
        %v1423 = vrcp.pop %v1390
        %v1424 = vmul.f32 1.0, %v1423
        %v1425 = vrcp.pop %v1391
        %v1426 = vmul.f32 1.0, %v1425
        %v1427 = vrcp.pop %v1392
        %v1428 = vmul.f32 1.0, %v1427
        %v1429 = vrcp.pop %v1393
        %v1430 = vmul.f32 1.0, %v1429
        %v1431 = vrcp.pop %v1394
        %v1432 = vmul.f32 1.0, %v1431
        %v1433 = vrcp.pop %v1395
        %v1434 = vmul.f32 1.0, %v1433
        %v1435 = vrcp.pop %v1396
        %v1436 = vmul.f32 1.0, %v1435
        %v1437 = vrcp.pop %v1397
        %v1438 = vmul.f32 1.0, %v1437
        %v1439 = vrcp.pop %v1398
        %v1440 = vmul.f32 1.0, %v1439
        %v1441 = vrcp.pop %v1399
        %v1442 = vmul.f32 1.0, %v1441
        %v1443 = vrcp.pop %v1400
        %v1444 = vmul.f32 1.0, %v1443
        %v1445 = vrcp.pop %v1401
        %v1446 = vmul.f32 1.0, %v1445
        %v1447 = vrcp.pop %v1402
        %v1448 = vmul.f32 1.0, %v1447
        %v1449 = vrcp.pop %v1403
        %v1450 = vmul.f32 1.0, %v1449
        %v1451 = vrcp.pop %v1404
        %v1452 = vmul.f32 1.0, %v1451
        %v1453 = vrcp.pop %v1405
        %v1454 = vmul.f32 1.0, %v1453
        %v1455 = vrcp.pop %v1406
        %v1456 = vmul.f32 1.0, %v1455
        %v1457 = vrcp.pop %v1407
        %v1458 = vmul.f32 1.0, %v1457
        %v1459 = vrcp.pop %v1408
        %v1460 = vmul.f32 1.0, %v1459
        %v1461 = vrcp.pop %v1409
        %v1462 = vmul.f32 1.0, %v1461
        %v1463 = vrcp.pop %v1410
        %v1464 = vmul.f32 1.0, %v1463
        %v1465 = vrcp.pop %v1411
        %v1466 = vmul.f32 1.0, %v1465
        %v1467 = vrcp.pop %v1412
        %v1468 = vmul.f32 1.0, %v1467
        %v1469 = vrcp.pop %v1413
        %v1470 = vmul.f32 1.0, %v1469
        %v1471 = vrcp.pop %v1414
        %v1472 = vmul.f32 1.0, %v1471
        %v1473 = vrcp.pop %v1415
        %v1474 = vmul.f32 1.0, %v1473
        %v1475 = vrcp.pop %v1416
        %v1476 = vmul.f32 1.0, %v1475
        %v1477 = vrcp.pop %v1417
        %v1478 = vmul.f32 1.0, %v1477
        %v1479 = vrcp.pop %v1418
        %v1480 = vmul.f32 1.0, %v1479
        %v1481 = vrcp.pop %v1419
        %v1482 = vmul.f32 1.0, %v1481
        %v1483 = vrcp.pop %v1420
        %v1484 = vmul.f32 1.0, %v1483
        %v1485 = vmul.f32 %v1167, %v1422
        %v1486 = vmul.f32 %v1170, %v1424
        %v1487 = vmul.f32 %v1175, %v1426
        %v1488 = vmul.f32 %v1178, %v1428
        %v1489 = vmul.f32 %v1183, %v1430
        %v1490 = vmul.f32 %v1186, %v1432
        %v1491 = vmul.f32 %v1191, %v1434
        %v1492 = vmul.f32 %v1194, %v1436
        %v1493 = vmul.f32 %v1199, %v1438
        %v1494 = vmul.f32 %v1202, %v1440
        %v1495 = vmul.f32 %v1207, %v1442
        %v1496 = vmul.f32 %v1210, %v1444
        %v1497 = vmul.f32 %v1215, %v1446
        %v1498 = vmul.f32 %v1218, %v1448
        %v1499 = vmul.f32 %v1223, %v1450
        %v1500 = vmul.f32 %v1226, %v1452
        %v1501 = vmul.f32 %v1231, %v1454
        %v1502 = vmul.f32 %v1234, %v1456
        %v1503 = vmul.f32 %v1239, %v1458
        %v1504 = vmul.f32 %v1242, %v1460
        %v1505 = vmul.f32 %v1247, %v1462
        %v1506 = vmul.f32 %v1250, %v1464
        %v1507 = vmul.f32 %v1255, %v1466
        %v1508 = vmul.f32 %v1258, %v1468
        %v1509 = vmul.f32 %v1263, %v1470
        %v1510 = vmul.f32 %v1266, %v1472
        %v1511 = vmul.f32 %v1271, %v1474
        %v1512 = vmul.f32 %v1274, %v1476
        %v1513 = vmul.f32 %v1279, %v1478
        %v1514 = vmul.f32 %v1282, %v1480
        %v1515 = vmul.f32 %v1287, %v1482
        %v1516 = vmul.f32 %v1290, %v1484
        %vm1517 = vcmask 523264
        %1518 = vst.msk [vmem:[#allocation2] sm:$0xff] %vm1517, 0.0
        %1519 = vst.msk [vmem:[#allocation2 + $0x8] sm:$0xff] %vm1517, 0.0
        %vm1520 = vcmask 517120
        %1521 = vst.msk [vmem:[#allocation2 + $0x10] sm:$0x3] %vm1520, 0.0
        %1522 = vst.msk [vmem:[#allocation2 + $0x18] sm:$0xff] %vm1517, 0.0
        %1523 = vst.msk [vmem:[#allocation2 + $0x20] sm:$0xff] %vm1517, 0.0
        %1524 = vst.msk [vmem:[#allocation2 + $0x28] sm:$0x3] %vm1520, 0.0
        %1525 = vst.msk [vmem:[#allocation2 + $0x30] sm:$0xff] %vm1517, 0.0
        %1526 = vst.msk [vmem:[#allocation2 + $0x38] sm:$0xff] %vm1517, 0.0
        %1527 = vst.msk [vmem:[#allocation2 + $0x40] sm:$0x3] %vm1520, 0.0
        %1528 = vst.msk [vmem:[#allocation2 + $0x48] sm:$0xff] %vm1517, 0.0
        %1529 = vst.msk [vmem:[#allocation2 + $0x50] sm:$0xff] %vm1517, 0.0
        %1530 = vst.msk [vmem:[#allocation2 + $0x58] sm:$0x3] %vm1520, 0.0
        %1531 = vst.msk [vmem:[#allocation2 + $0x60] sm:$0xff] %vm1517, 0.0
        %1532 = vst.msk [vmem:[#allocation2 + $0x68] sm:$0xff] %vm1517, 0.0
        %1533 = vst.msk [vmem:[#allocation2 + $0x70] sm:$0x3] %vm1520, 0.0
        %1534 = vst.msk [vmem:[#allocation2 + $0x78] sm:$0xff] %vm1517, 0.0
        %1535 = vst.msk [vmem:[#allocation2 + $0x80] sm:$0xff] %vm1517, 0.0
        %1536 = vst.msk [vmem:[#allocation2 + $0x88] sm:$0x3] %vm1520, 0.0
        %1537 = vst.msk [vmem:[#allocation2 + $0x90] sm:$0xff] %vm1517, 0.0
        %1538 = vst.msk [vmem:[#allocation2 + $0x98] sm:$0xff] %vm1517, 0.0
        %1539 = vst.msk [vmem:[#allocation2 + $0xa0] sm:$0x3] %vm1520, 0.0
        %1540 = vst.msk [vmem:[#allocation2 + $0xa8] sm:$0xff] %vm1517, 0.0
        %1541 = vst.msk [vmem:[#allocation2 + $0xb0] sm:$0xff] %vm1517, 0.0
        %1542 = vst.msk [vmem:[#allocation2 + $0xb8] sm:$0x3] %vm1520, 0.0
        %1543 = vst.msk [vmem:[#allocation2 + $0xc0] sm:$0xff] %vm1517, 0.0
        %1544 = vst.msk [vmem:[#allocation2 + $0xc8] sm:$0xff] %vm1517, 0.0
        %1545 = vst.msk [vmem:[#allocation2 + $0xd0] sm:$0x3] %vm1520, 0.0
        %1546 = vst.msk [vmem:[#allocation2 + $0xd8] sm:$0xff] %vm1517, 0.0
        %1547 = vst.msk [vmem:[#allocation2 + $0xe0] sm:$0xff] %vm1517, 0.0
        %1548 = vst.msk [vmem:[#allocation2 + $0xe8] sm:$0x3] %vm1520, 0.0
        %1549 = vst.msk [vmem:[#allocation2 + $0xf0] sm:$0xff] %vm1517, 0.0
        %1550 = vst.msk [vmem:[#allocation2 + $0xf8] sm:$0xff] %vm1517, 0.0
        %1551 = vst.msk [vmem:[#allocation2 + $0x100] sm:$0x3] %vm1520, 0.0
        %1552 = vst.msk [vmem:[#allocation2 + $0x108] sm:$0xff] %vm1517, 0.0
        %1553 = vst.msk [vmem:[#allocation2 + $0x110] sm:$0xff] %vm1517, 0.0
        %1554 = vst.msk [vmem:[#allocation2 + $0x118] sm:$0x3] %vm1520, 0.0
        %1555 = vst.msk [vmem:[#allocation2 + $0x120] sm:$0xff] %vm1517, 0.0
        %1556 = vst.msk [vmem:[#allocation2 + $0x128] sm:$0xff] %vm1517, 0.0
        %1557 = vst.msk [vmem:[#allocation2 + $0x130] sm:$0x3] %vm1520, 0.0
        %1558 = vst.msk [vmem:[#allocation2 + $0x138] sm:$0xff] %vm1517, 0.0
        %1559 = vst.msk [vmem:[#allocation2 + $0x140] sm:$0xff] %vm1517, 0.0
        %1560 = vst.msk [vmem:[#allocation2 + $0x148] sm:$0x3] %vm1520, 0.0
        %1561 = vst.msk [vmem:[#allocation2 + $0x150] sm:$0xff] %vm1517, 0.0
        %1562 = vst.msk [vmem:[#allocation2 + $0x158] sm:$0xff] %vm1517, 0.0
        %1563 = vst.msk [vmem:[#allocation2 + $0x160] sm:$0x3] %vm1520, 0.0
        %1564 = vst.msk [vmem:[#allocation2 + $0x168] sm:$0xff] %vm1517, 0.0
        %1565 = vst.msk [vmem:[#allocation2 + $0x170] sm:$0xff] %vm1517, 0.0
        %1566 = vst.msk [vmem:[#allocation2 + $0x178] sm:$0x3] %vm1520, 0.0
        %1567 = vst.msk [vmem:[#allocation2 + $0x180] sm:$0xff] %vm1517, 0.0
        %1568 = vst.msk [vmem:[#allocation2 + $0x188] sm:$0xff] %vm1517, 0.0
        %1569 = vst.msk [vmem:[#allocation2 + $0x190] sm:$0x3] %vm1520, 0.0
        %1570 = vst.msk [vmem:[#allocation2 + $0x198] sm:$0xff] %vm1517, 0.0
        %1571 = vst.msk [vmem:[#allocation2 + $0x1a0] sm:$0xff] %vm1517, 0.0
        %1572 = vst.msk [vmem:[#allocation2 + $0x1a8] sm:$0x3] %vm1520, 0.0
        %s1573 = scalar_lea.vmem [#allocation2], 24
        %1574 = vst.msk [vmem:[%s1573 + $0x1] sm:$0xff] %vm1517, %v1485
        %1575 = vst.msk [vmem:[%s1573 + $0x9] sm:$0xff] %vm1517, %v1486
        %1576 = vst.msk [vmem:[%s1573 + $0x19] sm:$0xff] %vm1517, %v1487
        %1577 = vst.msk [vmem:[%s1573 + $0x21] sm:$0xff] %vm1517, %v1488
        %1578 = vst.msk [vmem:[%s1573 + $0x31] sm:$0xff] %vm1517, %v1489
        %1579 = vst.msk [vmem:[%s1573 + $0x39] sm:$0xff] %vm1517, %v1490
        %1580 = vst.msk [vmem:[%s1573 + $0x49] sm:$0xff] %vm1517, %v1491
        %1581 = vst.msk [vmem:[%s1573 + $0x51] sm:$0xff] %vm1517, %v1492
        %1582 = vst.msk [vmem:[%s1573 + $0x61] sm:$0xff] %vm1517, %v1493
        %1583 = vst.msk [vmem:[%s1573 + $0x69] sm:$0xff] %vm1517, %v1494
        %1584 = vst.msk [vmem:[%s1573 + $0x79] sm:$0xff] %vm1517, %v1495
        %1585 = vst.msk [vmem:[%s1573 + $0x81] sm:$0xff] %vm1517, %v1496
        %1586 = vst.msk [vmem:[%s1573 + $0x91] sm:$0xff] %vm1517, %v1497
        %1587 = vst.msk [vmem:[%s1573 + $0x99] sm:$0xff] %vm1517, %v1498
        %1588 = vst.msk [vmem:[%s1573 + $0xa9] sm:$0xff] %vm1517, %v1499
        %1589 = vst.msk [vmem:[%s1573 + $0xb1] sm:$0xff] %vm1517, %v1500
        %1590 = vst.msk [vmem:[%s1573 + $0xc1] sm:$0xff] %vm1517, %v1501
        %1591 = vst.msk [vmem:[%s1573 + $0xc9] sm:$0xff] %vm1517, %v1502
        %1592 = vst.msk [vmem:[%s1573 + $0xd9] sm:$0xff] %vm1517, %v1503
        %1593 = vst.msk [vmem:[%s1573 + $0xe1] sm:$0xff] %vm1517, %v1504
        %1594 = vst.msk [vmem:[%s1573 + $0xf1] sm:$0xff] %vm1517, %v1505
        %1595 = vst.msk [vmem:[%s1573 + $0xf9] sm:$0xff] %vm1517, %v1506
        %1596 = vst.msk [vmem:[%s1573 + $0x109] sm:$0xff] %vm1517, %v1507
        %1597 = vst.msk [vmem:[%s1573 + $0x111] sm:$0xff] %vm1517, %v1508
        %1598 = vst.msk [vmem:[%s1573 + $0x121] sm:$0xff] %vm1517, %v1509
        %1599 = vst.msk [vmem:[%s1573 + $0x129] sm:$0xff] %vm1517, %v1510
        %1600 = vst.msk [vmem:[%s1573 + $0x139] sm:$0xff] %vm1517, %v1511
        %1601 = vst.msk [vmem:[%s1573 + $0x141] sm:$0xff] %vm1517, %v1512
        %1602 = vst.msk [vmem:[%s1573 + $0x151] sm:$0xff] %vm1517, %v1513
        %1603 = vst.msk [vmem:[%s1573 + $0x159] sm:$0xff] %vm1517, %v1514
        %1604 = vst.msk [vmem:[%s1573 + $0x169] sm:$0xff] %vm1517, %v1515
        %1605 = vst.msk [vmem:[%s1573 + $0x171] sm:$0xff] %vm1517, %v1516
        %v1606 = vld [vmem:[#allocation2] sm:$0xff]
        %v1607 = vld [vmem:[#allocation2 + $0x8] sm:$0xff]
        %v1608 = vld [vmem:[#allocation2 + $0x10] sm:$0x3]
        %v1609 = vld [vmem:[#allocation2 + $0x18] sm:$0xff]
        %v1610 = vld [vmem:[#allocation2 + $0x20] sm:$0xff]
        %v1611 = vld [vmem:[#allocation2 + $0x28] sm:$0x3]
        %v1612 = vld [vmem:[#allocation2 + $0x30] sm:$0xff]
        %v1613 = vld [vmem:[#allocation2 + $0x38] sm:$0xff]
        %v1614 = vld [vmem:[#allocation2 + $0x40] sm:$0x3]
        %v1615 = vld [vmem:[#allocation2 + $0x48] sm:$0xff]
        %v1616 = vld [vmem:[#allocation2 + $0x50] sm:$0xff]
        %v1617 = vld [vmem:[#allocation2 + $0x58] sm:$0x3]
        %v1618 = vld [vmem:[#allocation2 + $0x60] sm:$0xff]
        %v1619 = vld [vmem:[#allocation2 + $0x68] sm:$0xff]
        %v1620 = vld [vmem:[#allocation2 + $0x70] sm:$0x3]
        %v1621 = vld [vmem:[#allocation2 + $0x78] sm:$0xff]
        %v1622 = vld [vmem:[#allocation2 + $0x80] sm:$0xff]
        %v1623 = vld [vmem:[#allocation2 + $0x88] sm:$0x3]
        %v1624 = vld [vmem:[#allocation2 + $0x90] sm:$0xff]
        %v1625 = vld [vmem:[#allocation2 + $0x98] sm:$0xff]
        %v1626 = vld [vmem:[#allocation2 + $0xa0] sm:$0x3]
        %v1627 = vld [vmem:[#allocation2 + $0xa8] sm:$0xff]
        %v1628 = vld [vmem:[#allocation2 + $0xb0] sm:$0xff]
        %v1629 = vld [vmem:[#allocation2 + $0xb8] sm:$0x3]
        %v1630 = vld [vmem:[#allocation2 + $0xc0] sm:$0xff]
        %v1631 = vld [vmem:[#allocation2 + $0xc8] sm:$0xff]
        %v1632 = vld [vmem:[#allocation2 + $0xd0] sm:$0x3]
        %v1633 = vld [vmem:[#allocation2 + $0xd8] sm:$0xff]
        %v1634 = vld [vmem:[#allocation2 + $0xe0] sm:$0xff]
        %v1635 = vld [vmem:[#allocation2 + $0xe8] sm:$0x3]
        %v1636 = vld [vmem:[#allocation2 + $0xf0] sm:$0xff]
        %v1637 = vld [vmem:[#allocation2 + $0xf8] sm:$0xff]
        %v1638 = vld [vmem:[#allocation2 + $0x100] sm:$0x3]
        %v1639 = vld [vmem:[#allocation2 + $0x108] sm:$0xff]
        %v1640 = vld [vmem:[#allocation2 + $0x110] sm:$0xff]
        %v1641 = vld [vmem:[#allocation2 + $0x118] sm:$0x3]
        %v1642 = vld [vmem:[#allocation2 + $0x120] sm:$0xff]
        %v1643 = vld [vmem:[#allocation2 + $0x128] sm:$0xff]
        %v1644 = vld [vmem:[#allocation2 + $0x130] sm:$0x3]
        %v1645 = vld [vmem:[#allocation2 + $0x138] sm:$0xff]
        %v1646 = vld [vmem:[#allocation2 + $0x140] sm:$0xff]
        %v1647 = vld [vmem:[#allocation2 + $0x148] sm:$0x3]
        %v1648 = vld [vmem:[#allocation2 + $0x150] sm:$0xff]
        %v1649 = vld [vmem:[#allocation2 + $0x158] sm:$0xff]
        %v1650 = vld [vmem:[#allocation2 + $0x160] sm:$0x3]
        %v1651 = vld [vmem:[#allocation2 + $0x168] sm:$0xff]
        %v1652 = vld [vmem:[#allocation2 + $0x170] sm:$0xff]
        %v1653 = vld [vmem:[#allocation2 + $0x178] sm:$0x3]
        %v1654 = vld [vmem:[#allocation2 + $0x180] sm:$0xff]
        %v1655 = vld [vmem:[#allocation2 + $0x188] sm:$0xff]
        %v1656 = vld [vmem:[#allocation2 + $0x190] sm:$0x3]
        %v1657 = vld [vmem:[#allocation2 + $0x198] sm:$0xff]
        %v1658 = vld [vmem:[#allocation2 + $0x1a0] sm:$0xff]
        %v1659 = vld [vmem:[#allocation2 + $0x1a8] sm:$0x3]
        %v1660 = vld [vmem:[%s5] sm:$0x7]
        %v1661 = vld [vmem:[%s5 + $0x4] sm:$0x7]
        %v1662 = vld [vmem:[%s5 + $0x8] sm:$0x7]
        %v1663 = vlaneseq
        %v1664 = vshrl.u32 %v1663, 7
        %v1665 = vsub.s32 0, %v1664
        %v1666 = vrot.slane %v1660, %v1665
        %v1667 = vmul.f32 %v1606, %v1666
        %v1668 = vmul.f32 %v1607, %v1666
        %v1669 = vmul.f32 %v1609, %v1666
        %v1670 = vmul.f32 %v1610, %v1666
        %v1671 = vmul.f32 %v1612, %v1666
        %v1672 = vmul.f32 %v1613, %v1666
        %v1673 = vmul.f32 %v1615, %v1666
        %v1674 = vmul.f32 %v1616, %v1666
        %v1675 = vmul.f32 %v1618, %v1666
        %v1676 = vmul.f32 %v1619, %v1666
        %v1677 = vmul.f32 %v1621, %v1666
        %v1678 = vmul.f32 %v1622, %v1666
        %v1679 = vmul.f32 %v1624, %v1666
        %v1680 = vmul.f32 %v1625, %v1666
        %v1681 = vmul.f32 %v1627, %v1666
        %v1682 = vmul.f32 %v1628, %v1666
        %v1683 = vmul.f32 %v1630, %v1666
        %v1684 = vmul.f32 %v1631, %v1666
        %v1685 = vmul.f32 %v1633, %v1666
        %v1686 = vmul.f32 %v1634, %v1666
        %v1687 = vmul.f32 %v1636, %v1666
        %v1688 = vmul.f32 %v1637, %v1666
        %v1689 = vmul.f32 %v1639, %v1666
        %v1690 = vmul.f32 %v1640, %v1666
        %v1691 = vmul.f32 %v1642, %v1666
        %v1692 = vmul.f32 %v1643, %v1666
        %v1693 = vmul.f32 %v1645, %v1666
        %v1694 = vmul.f32 %v1646, %v1666
        %v1695 = vmul.f32 %v1648, %v1666
        %v1696 = vmul.f32 %v1649, %v1666
        %v1697 = vmul.f32 %v1651, %v1666
        %v1698 = vmul.f32 %v1652, %v1666
        %v1699 = vadd.f32 %v1667, 0.0
        %v1700 = vadd.f32 %v1668, 0.0
        %v1701 = vadd.f32 %v1669, 0.0
        %v1702 = vadd.f32 %v1670, 0.0
        %v1703 = vadd.f32 %v1671, 0.0
        %v1704 = vadd.f32 %v1672, 0.0
        %v1705 = vadd.f32 %v1673, 0.0
        %v1706 = vadd.f32 %v1674, 0.0
        %v1707 = vadd.f32 %v1675, 0.0
        %v1708 = vadd.f32 %v1676, 0.0
        %v1709 = vadd.f32 %v1677, 0.0
        %v1710 = vadd.f32 %v1678, 0.0
        %v1711 = vadd.f32 %v1679, 0.0
        %v1712 = vadd.f32 %v1680, 0.0
        %v1713 = vadd.f32 %v1681, 0.0
        %v1714 = vadd.f32 %v1682, 0.0
        %v1715 = vadd.f32 %v1683, 0.0
        %v1716 = vadd.f32 %v1684, 0.0
        %v1717 = vadd.f32 %v1685, 0.0
        %v1718 = vadd.f32 %v1686, 0.0
        %v1719 = vadd.f32 %v1687, 0.0
        %v1720 = vadd.f32 %v1688, 0.0
        %v1721 = vadd.f32 %v1689, 0.0
        %v1722 = vadd.f32 %v1690, 0.0
        %v1723 = vadd.f32 %v1691, 0.0
        %v1724 = vadd.f32 %v1692, 0.0
        %v1725 = vadd.f32 %v1693, 0.0
        %v1726 = vadd.f32 %v1694, 0.0
        %v1727 = vadd.f32 %v1695, 0.0
        %v1728 = vadd.f32 %v1696, 0.0
        %v1729 = vadd.f32 %v1697, 0.0
        %v1730 = vadd.f32 %v1698, 0.0
        %v1731 = vlaneseq
        %v1732 = vshrl.u32 %v1731, 7
        %v1733 = vsub.s32 1, %v1732
        %v1734 = vrot.slane %v1660, %v1733
        %v1735 = vmul.f32 %v1606, %v1734
        %v1736 = vmul.f32 %v1607, %v1734
        %v1737 = vmul.f32 %v1608, %v1734
        %v1738 = vmul.f32 %v1609, %v1734
        %v1739 = vmul.f32 %v1610, %v1734
        %v1740 = vmul.f32 %v1611, %v1734
        %v1741 = vmul.f32 %v1612, %v1734
        %v1742 = vmul.f32 %v1613, %v1734
        %v1743 = vmul.f32 %v1614, %v1734
        %v1744 = vmul.f32 %v1615, %v1734
        %v1745 = vmul.f32 %v1616, %v1734
        %v1746 = vmul.f32 %v1617, %v1734
        %v1747 = vmul.f32 %v1618, %v1734
        %v1748 = vmul.f32 %v1619, %v1734
        %v1749 = vmul.f32 %v1620, %v1734
        %v1750 = vmul.f32 %v1621, %v1734
        %v1751 = vmul.f32 %v1622, %v1734
        %v1752 = vmul.f32 %v1623, %v1734
        %v1753 = vmul.f32 %v1624, %v1734
        %v1754 = vmul.f32 %v1625, %v1734
        %v1755 = vmul.f32 %v1626, %v1734
        %v1756 = vmul.f32 %v1627, %v1734
        %v1757 = vmul.f32 %v1628, %v1734
        %v1758 = vmul.f32 %v1629, %v1734
        %v1759 = vmul.f32 %v1630, %v1734
        %v1760 = vmul.f32 %v1631, %v1734
        %v1761 = vmul.f32 %v1632, %v1734
        %v1762 = vmul.f32 %v1633, %v1734
        %v1763 = vmul.f32 %v1634, %v1734
        %v1764 = vmul.f32 %v1635, %v1734
        %v1765 = vmul.f32 %v1636, %v1734
        %v1766 = vmul.f32 %v1637, %v1734
        %v1767 = vmul.f32 %v1638, %v1734
        %v1768 = vmul.f32 %v1639, %v1734
        %v1769 = vmul.f32 %v1640, %v1734
        %v1770 = vmul.f32 %v1641, %v1734
        %v1771 = vmul.f32 %v1642, %v1734
        %v1772 = vmul.f32 %v1643, %v1734
        %v1773 = vmul.f32 %v1644, %v1734
        %v1774 = vmul.f32 %v1645, %v1734
        %v1775 = vmul.f32 %v1646, %v1734
        %v1776 = vmul.f32 %v1647, %v1734
        %v1777 = vmul.f32 %v1648, %v1734
        %v1778 = vmul.f32 %v1649, %v1734
        %v1779 = vmul.f32 %v1650, %v1734
        %v1780 = vmul.f32 %v1651, %v1734
        %v1781 = vmul.f32 %v1652, %v1734
        %v1782 = vmul.f32 %v1653, %v1734
        %vm1831 = vcmask 1046528
        %v1832 = vrot.slane %v1735, 1
        %v1833 = vrot.slane %v1736, 1
        %v1834 = vsel %vm1831, %v1832, %v1833
        %v1835 = vrot.slane %v1737, 1
        %v1836 = vsel %vm1831, %v1833, %v1835
        %v1837 = vrot.slane %v1738, 1
        %v1838 = vrot.slane %v1739, 1
        %v1839 = vsel %vm1831, %v1837, %v1838
        %v1840 = vrot.slane %v1740, 1
        %v1841 = vsel %vm1831, %v1838, %v1840
        %v1842 = vrot.slane %v1741, 1
        %v1843 = vrot.slane %v1742, 1
        %v1844 = vsel %vm1831, %v1842, %v1843
        %v1845 = vrot.slane %v1743, 1
        %v1846 = vsel %vm1831, %v1843, %v1845
        %v1847 = vrot.slane %v1744, 1
        %v1848 = vrot.slane %v1745, 1
        %v1849 = vsel %vm1831, %v1847, %v1848
        %v1850 = vrot.slane %v1746, 1
        %v1851 = vsel %vm1831, %v1848, %v1850
        %v1852 = vrot.slane %v1747, 1
        %v1853 = vrot.slane %v1748, 1
        %v1854 = vsel %vm1831, %v1852, %v1853
        %v1855 = vrot.slane %v1749, 1
        %v1856 = vsel %vm1831, %v1853, %v1855
        %v1857 = vrot.slane %v1750, 1
        %v1858 = vrot.slane %v1751, 1
        %v1859 = vsel %vm1831, %v1857, %v1858
        %v1860 = vrot.slane %v1752, 1
        %v1861 = vsel %vm1831, %v1858, %v1860
        %v1862 = vrot.slane %v1753, 1
        %v1863 = vrot.slane %v1754, 1
        %v1864 = vsel %vm1831, %v1862, %v1863
        %v1865 = vrot.slane %v1755, 1
        %v1866 = vsel %vm1831, %v1863, %v1865
        %v1867 = vrot.slane %v1756, 1
        %v1868 = vrot.slane %v1757, 1
        %v1869 = vsel %vm1831, %v1867, %v1868
        %v1870 = vrot.slane %v1758, 1
        %v1871 = vsel %vm1831, %v1868, %v1870
        %v1872 = vrot.slane %v1759, 1
        %v1873 = vrot.slane %v1760, 1
        %v1874 = vsel %vm1831, %v1872, %v1873
        %v1875 = vrot.slane %v1761, 1
        %v1876 = vsel %vm1831, %v1873, %v1875
        %v1877 = vrot.slane %v1762, 1
        %v1878 = vrot.slane %v1763, 1
        %v1879 = vsel %vm1831, %v1877, %v1878
        %v1880 = vrot.slane %v1764, 1
        %v1881 = vsel %vm1831, %v1878, %v1880
        %v1882 = vrot.slane %v1765, 1
        %v1883 = vrot.slane %v1766, 1
        %v1884 = vsel %vm1831, %v1882, %v1883
        %v1885 = vrot.slane %v1767, 1
        %v1886 = vsel %vm1831, %v1883, %v1885
        %v1887 = vrot.slane %v1768, 1
        %v1888 = vrot.slane %v1769, 1
        %v1889 = vsel %vm1831, %v1887, %v1888
        %v1890 = vrot.slane %v1770, 1
        %v1891 = vsel %vm1831, %v1888, %v1890
        %v1892 = vrot.slane %v1771, 1
        %v1893 = vrot.slane %v1772, 1
        %v1894 = vsel %vm1831, %v1892, %v1893
        %v1895 = vrot.slane %v1773, 1
        %v1896 = vsel %vm1831, %v1893, %v1895
        %v1897 = vrot.slane %v1774, 1
        %v1898 = vrot.slane %v1775, 1
        %v1899 = vsel %vm1831, %v1897, %v1898
        %v1900 = vrot.slane %v1776, 1
        %v1901 = vsel %vm1831, %v1898, %v1900
        %v1902 = vrot.slane %v1777, 1
        %v1903 = vrot.slane %v1778, 1
        %v1904 = vsel %vm1831, %v1902, %v1903
        %v1905 = vrot.slane %v1779, 1
        %v1906 = vsel %vm1831, %v1903, %v1905
        %v1907 = vrot.slane %v1780, 1
        %v1908 = vrot.slane %v1781, 1
        %v1909 = vsel %vm1831, %v1907, %v1908
        %v1910 = vrot.slane %v1782, 1
        %v1911 = vsel %vm1831, %v1908, %v1910
        %v1944 = vadd.f32 %v1699, %v1834
        %v1945 = vadd.f32 %v1700, %v1836
        %v1946 = vadd.f32 %v1701, %v1839
        %v1947 = vadd.f32 %v1702, %v1841
        %v1948 = vadd.f32 %v1703, %v1844
        %v1949 = vadd.f32 %v1704, %v1846
        %v1950 = vadd.f32 %v1705, %v1849
        %v1951 = vadd.f32 %v1706, %v1851
        %v1952 = vadd.f32 %v1707, %v1854
        %v1953 = vadd.f32 %v1708, %v1856
        %v1954 = vadd.f32 %v1709, %v1859
        %v1955 = vadd.f32 %v1710, %v1861
        %v1956 = vadd.f32 %v1711, %v1864
        %v1957 = vadd.f32 %v1712, %v1866
        %v1958 = vadd.f32 %v1713, %v1869
        %v1959 = vadd.f32 %v1714, %v1871
        %v1960 = vadd.f32 %v1715, %v1874
        %v1961 = vadd.f32 %v1716, %v1876
        %v1962 = vadd.f32 %v1717, %v1879
        %v1963 = vadd.f32 %v1718, %v1881
        %v1964 = vadd.f32 %v1719, %v1884
        %v1965 = vadd.f32 %v1720, %v1886
        %v1966 = vadd.f32 %v1721, %v1889
        %v1967 = vadd.f32 %v1722, %v1891
        %v1968 = vadd.f32 %v1723, %v1894
        %v1969 = vadd.f32 %v1724, %v1896
        %v1970 = vadd.f32 %v1725, %v1899
        %v1971 = vadd.f32 %v1726, %v1901
        %v1972 = vadd.f32 %v1727, %v1904
        %v1973 = vadd.f32 %v1728, %v1906
        %v1974 = vadd.f32 %v1729, %v1909
        %v1975 = vadd.f32 %v1730, %v1911
        %v1976 = vlaneseq
        %v1977 = vshrl.u32 %v1976, 7
        %v1978 = vsub.s32 2, %v1977
        %v1979 = vrot.slane %v1660, %v1978
        %v1980 = vmul.f32 %v1606, %v1979
        %v1981 = vmul.f32 %v1607, %v1979
        %v1982 = vmul.f32 %v1608, %v1979
        %v1983 = vmul.f32 %v1609, %v1979
        %v1984 = vmul.f32 %v1610, %v1979
        %v1985 = vmul.f32 %v1611, %v1979
        %v1986 = vmul.f32 %v1612, %v1979
        %v1987 = vmul.f32 %v1613, %v1979
        %v1988 = vmul.f32 %v1614, %v1979
        %v1989 = vmul.f32 %v1615, %v1979
        %v1990 = vmul.f32 %v1616, %v1979
        %v1991 = vmul.f32 %v1617, %v1979
        %v1992 = vmul.f32 %v1618, %v1979
        %v1993 = vmul.f32 %v1619, %v1979
        %v1994 = vmul.f32 %v1620, %v1979
        %v1995 = vmul.f32 %v1621, %v1979
        %v1996 = vmul.f32 %v1622, %v1979
        %v1997 = vmul.f32 %v1623, %v1979
        %v1998 = vmul.f32 %v1624, %v1979
        %v1999 = vmul.f32 %v1625, %v1979
        %v2000 = vmul.f32 %v1626, %v1979
        %v2001 = vmul.f32 %v1627, %v1979
        %v2002 = vmul.f32 %v1628, %v1979
        %v2003 = vmul.f32 %v1629, %v1979
        %v2004 = vmul.f32 %v1630, %v1979
        %v2005 = vmul.f32 %v1631, %v1979
        %v2006 = vmul.f32 %v1632, %v1979
        %v2007 = vmul.f32 %v1633, %v1979
        %v2008 = vmul.f32 %v1634, %v1979
        %v2009 = vmul.f32 %v1635, %v1979
        %v2010 = vmul.f32 %v1636, %v1979
        %v2011 = vmul.f32 %v1637, %v1979
        %v2012 = vmul.f32 %v1638, %v1979
        %v2013 = vmul.f32 %v1639, %v1979
        %v2014 = vmul.f32 %v1640, %v1979
        %v2015 = vmul.f32 %v1641, %v1979
        %v2016 = vmul.f32 %v1642, %v1979
        %v2017 = vmul.f32 %v1643, %v1979
        %v2018 = vmul.f32 %v1644, %v1979
        %v2019 = vmul.f32 %v1645, %v1979
        %v2020 = vmul.f32 %v1646, %v1979
        %v2021 = vmul.f32 %v1647, %v1979
        %v2022 = vmul.f32 %v1648, %v1979
        %v2023 = vmul.f32 %v1649, %v1979
        %v2024 = vmul.f32 %v1650, %v1979
        %v2025 = vmul.f32 %v1651, %v1979
        %v2026 = vmul.f32 %v1652, %v1979
        %v2027 = vmul.f32 %v1653, %v1979
        %vm2076 = vcmask 1045504
        %v2077 = vrot.slane %v1980, 2
        %v2078 = vrot.slane %v1981, 2
        %v2079 = vsel %vm2076, %v2077, %v2078
        %v2080 = vrot.slane %v1982, 2
        %v2081 = vsel %vm2076, %v2078, %v2080
        %v2082 = vrot.slane %v1983, 2
        %v2083 = vrot.slane %v1984, 2
        %v2084 = vsel %vm2076, %v2082, %v2083
        %v2085 = vrot.slane %v1985, 2
        %v2086 = vsel %vm2076, %v2083, %v2085
        %v2087 = vrot.slane %v1986, 2
        %v2088 = vrot.slane %v1987, 2
        %v2089 = vsel %vm2076, %v2087, %v2088
        %v2090 = vrot.slane %v1988, 2
        %v2091 = vsel %vm2076, %v2088, %v2090
        %v2092 = vrot.slane %v1989, 2
        %v2093 = vrot.slane %v1990, 2
        %v2094 = vsel %vm2076, %v2092, %v2093
        %v2095 = vrot.slane %v1991, 2
        %v2096 = vsel %vm2076, %v2093, %v2095
        %v2097 = vrot.slane %v1992, 2
        %v2098 = vrot.slane %v1993, 2
        %v2099 = vsel %vm2076, %v2097, %v2098
        %v2100 = vrot.slane %v1994, 2
        %v2101 = vsel %vm2076, %v2098, %v2100
        %v2102 = vrot.slane %v1995, 2
        %v2103 = vrot.slane %v1996, 2
        %v2104 = vsel %vm2076, %v2102, %v2103
        %v2105 = vrot.slane %v1997, 2
        %v2106 = vsel %vm2076, %v2103, %v2105
        %v2107 = vrot.slane %v1998, 2
        %v2108 = vrot.slane %v1999, 2
        %v2109 = vsel %vm2076, %v2107, %v2108
        %v2110 = vrot.slane %v2000, 2
        %v2111 = vsel %vm2076, %v2108, %v2110
        %v2112 = vrot.slane %v2001, 2
        %v2113 = vrot.slane %v2002, 2
        %v2114 = vsel %vm2076, %v2112, %v2113
        %v2115 = vrot.slane %v2003, 2
        %v2116 = vsel %vm2076, %v2113, %v2115
        %v2117 = vrot.slane %v2004, 2
        %v2118 = vrot.slane %v2005, 2
        %v2119 = vsel %vm2076, %v2117, %v2118
        %v2120 = vrot.slane %v2006, 2
        %v2121 = vsel %vm2076, %v2118, %v2120
        %v2122 = vrot.slane %v2007, 2
        %v2123 = vrot.slane %v2008, 2
        %v2124 = vsel %vm2076, %v2122, %v2123
        %v2125 = vrot.slane %v2009, 2
        %v2126 = vsel %vm2076, %v2123, %v2125
        %v2127 = vrot.slane %v2010, 2
        %v2128 = vrot.slane %v2011, 2
        %v2129 = vsel %vm2076, %v2127, %v2128
        %v2130 = vrot.slane %v2012, 2
        %v2131 = vsel %vm2076, %v2128, %v2130
        %v2132 = vrot.slane %v2013, 2
        %v2133 = vrot.slane %v2014, 2
        %v2134 = vsel %vm2076, %v2132, %v2133
        %v2135 = vrot.slane %v2015, 2
        %v2136 = vsel %vm2076, %v2133, %v2135
        %v2137 = vrot.slane %v2016, 2
        %v2138 = vrot.slane %v2017, 2
        %v2139 = vsel %vm2076, %v2137, %v2138
        %v2140 = vrot.slane %v2018, 2
        %v2141 = vsel %vm2076, %v2138, %v2140
        %v2142 = vrot.slane %v2019, 2
        %v2143 = vrot.slane %v2020, 2
        %v2144 = vsel %vm2076, %v2142, %v2143
        %v2145 = vrot.slane %v2021, 2
        %v2146 = vsel %vm2076, %v2143, %v2145
        %v2147 = vrot.slane %v2022, 2
        %v2148 = vrot.slane %v2023, 2
        %v2149 = vsel %vm2076, %v2147, %v2148
        %v2150 = vrot.slane %v2024, 2
        %v2151 = vsel %vm2076, %v2148, %v2150
        %v2152 = vrot.slane %v2025, 2
        %v2153 = vrot.slane %v2026, 2
        %v2154 = vsel %vm2076, %v2152, %v2153
        %v2155 = vrot.slane %v2027, 2
        %v2156 = vsel %vm2076, %v2153, %v2155
        %v2189 = vadd.f32 %v1944, %v2079
        %v2190 = vadd.f32 %v1945, %v2081
        %v2191 = vadd.f32 %v1946, %v2084
        %v2192 = vadd.f32 %v1947, %v2086
        %v2193 = vadd.f32 %v1948, %v2089
        %v2194 = vadd.f32 %v1949, %v2091
        %v2195 = vadd.f32 %v1950, %v2094
        %v2196 = vadd.f32 %v1951, %v2096
        %v2197 = vadd.f32 %v1952, %v2099
        %v2198 = vadd.f32 %v1953, %v2101
        %v2199 = vadd.f32 %v1954, %v2104
        %v2200 = vadd.f32 %v1955, %v2106
        %v2201 = vadd.f32 %v1956, %v2109
        %v2202 = vadd.f32 %v1957, %v2111
        %v2203 = vadd.f32 %v1958, %v2114
        %v2204 = vadd.f32 %v1959, %v2116
        %v2205 = vadd.f32 %v1960, %v2119
        %v2206 = vadd.f32 %v1961, %v2121
        %v2207 = vadd.f32 %v1962, %v2124
        %v2208 = vadd.f32 %v1963, %v2126
        %v2209 = vadd.f32 %v1964, %v2129
        %v2210 = vadd.f32 %v1965, %v2131
        %v2211 = vadd.f32 %v1966, %v2134
        %v2212 = vadd.f32 %v1967, %v2136
        %v2213 = vadd.f32 %v1968, %v2139
        %v2214 = vadd.f32 %v1969, %v2141
        %v2215 = vadd.f32 %v1970, %v2144
        %v2216 = vadd.f32 %v1971, %v2146
        %v2217 = vadd.f32 %v1972, %v2149
        %v2218 = vadd.f32 %v1973, %v2151
        %v2219 = vadd.f32 %v1974, %v2154
        %v2220 = vadd.f32 %v1975, %v2156
        %v2221 = vlaneseq
        %v2222 = vshrl.u32 %v2221, 7
        %v2223 = vsub.s32 0, %v2222
        %v2224 = vrot.slane %v1661, %v2223
        %v2225 = vmul.f32 %v1609, %v2224
        %v2226 = vmul.f32 %v1610, %v2224
        %v2227 = vmul.f32 %v1612, %v2224
        %v2228 = vmul.f32 %v1613, %v2224
        %v2229 = vmul.f32 %v1615, %v2224
        %v2230 = vmul.f32 %v1616, %v2224
        %v2231 = vmul.f32 %v1618, %v2224
        %v2232 = vmul.f32 %v1619, %v2224
        %v2233 = vmul.f32 %v1621, %v2224
        %v2234 = vmul.f32 %v1622, %v2224
        %v2235 = vmul.f32 %v1624, %v2224
        %v2236 = vmul.f32 %v1625, %v2224
        %v2237 = vmul.f32 %v1627, %v2224
        %v2238 = vmul.f32 %v1628, %v2224
        %v2239 = vmul.f32 %v1630, %v2224
        %v2240 = vmul.f32 %v1631, %v2224
        %v2241 = vmul.f32 %v1633, %v2224
        %v2242 = vmul.f32 %v1634, %v2224
        %v2243 = vmul.f32 %v1636, %v2224
        %v2244 = vmul.f32 %v1637, %v2224
        %v2245 = vmul.f32 %v1639, %v2224
        %v2246 = vmul.f32 %v1640, %v2224
        %v2247 = vmul.f32 %v1642, %v2224
        %v2248 = vmul.f32 %v1643, %v2224
        %v2249 = vmul.f32 %v1645, %v2224
        %v2250 = vmul.f32 %v1646, %v2224
        %v2251 = vmul.f32 %v1648, %v2224
        %v2252 = vmul.f32 %v1649, %v2224
        %v2253 = vmul.f32 %v1651, %v2224
        %v2254 = vmul.f32 %v1652, %v2224
        %v2255 = vmul.f32 %v1654, %v2224
        %v2256 = vmul.f32 %v1655, %v2224
        %v2257 = vadd.f32 %v2189, %v2225
        %v2258 = vadd.f32 %v2190, %v2226
        %v2259 = vadd.f32 %v2191, %v2227
        %v2260 = vadd.f32 %v2192, %v2228
        %v2261 = vadd.f32 %v2193, %v2229
        %v2262 = vadd.f32 %v2194, %v2230
        %v2263 = vadd.f32 %v2195, %v2231
        %v2264 = vadd.f32 %v2196, %v2232
        %v2265 = vadd.f32 %v2197, %v2233
        %v2266 = vadd.f32 %v2198, %v2234
        %v2267 = vadd.f32 %v2199, %v2235
        %v2268 = vadd.f32 %v2200, %v2236
        %v2269 = vadd.f32 %v2201, %v2237
        %v2270 = vadd.f32 %v2202, %v2238
        %v2271 = vadd.f32 %v2203, %v2239
        %v2272 = vadd.f32 %v2204, %v2240
        %v2273 = vadd.f32 %v2205, %v2241
        %v2274 = vadd.f32 %v2206, %v2242
        %v2275 = vadd.f32 %v2207, %v2243
        %v2276 = vadd.f32 %v2208, %v2244
        %v2277 = vadd.f32 %v2209, %v2245
        %v2278 = vadd.f32 %v2210, %v2246
        %v2279 = vadd.f32 %v2211, %v2247
        %v2280 = vadd.f32 %v2212, %v2248
        %v2281 = vadd.f32 %v2213, %v2249
        %v2282 = vadd.f32 %v2214, %v2250
        %v2283 = vadd.f32 %v2215, %v2251
        %v2284 = vadd.f32 %v2216, %v2252
        %v2285 = vadd.f32 %v2217, %v2253
        %v2286 = vadd.f32 %v2218, %v2254
        %v2287 = vadd.f32 %v2219, %v2255
        %v2288 = vadd.f32 %v2220, %v2256
        %v2289 = vlaneseq
        %v2290 = vshrl.u32 %v2289, 7
        %v2291 = vsub.s32 1, %v2290
        %v2292 = vrot.slane %v1661, %v2291
        %v2293 = vmul.f32 %v1609, %v2292
        %v2294 = vmul.f32 %v1610, %v2292
        %v2295 = vmul.f32 %v1611, %v2292
        %v2296 = vmul.f32 %v1612, %v2292
        %v2297 = vmul.f32 %v1613, %v2292
        %v2298 = vmul.f32 %v1614, %v2292
        %v2299 = vmul.f32 %v1615, %v2292
        %v2300 = vmul.f32 %v1616, %v2292
        %v2301 = vmul.f32 %v1617, %v2292
        %v2302 = vmul.f32 %v1618, %v2292
        %v2303 = vmul.f32 %v1619, %v2292
        %v2304 = vmul.f32 %v1620, %v2292
        %v2305 = vmul.f32 %v1621, %v2292
        %v2306 = vmul.f32 %v1622, %v2292
        %v2307 = vmul.f32 %v1623, %v2292
        %v2308 = vmul.f32 %v1624, %v2292
        %v2309 = vmul.f32 %v1625, %v2292
        %v2310 = vmul.f32 %v1626, %v2292
        %v2311 = vmul.f32 %v1627, %v2292
        %v2312 = vmul.f32 %v1628, %v2292
        %v2313 = vmul.f32 %v1629, %v2292
        %v2314 = vmul.f32 %v1630, %v2292
        %v2315 = vmul.f32 %v1631, %v2292
        %v2316 = vmul.f32 %v1632, %v2292
        %v2317 = vmul.f32 %v1633, %v2292
        %v2318 = vmul.f32 %v1634, %v2292
        %v2319 = vmul.f32 %v1635, %v2292
        %v2320 = vmul.f32 %v1636, %v2292
        %v2321 = vmul.f32 %v1637, %v2292
        %v2322 = vmul.f32 %v1638, %v2292
        %v2323 = vmul.f32 %v1639, %v2292
        %v2324 = vmul.f32 %v1640, %v2292
        %v2325 = vmul.f32 %v1641, %v2292
        %v2326 = vmul.f32 %v1642, %v2292
        %v2327 = vmul.f32 %v1643, %v2292
        %v2328 = vmul.f32 %v1644, %v2292
        %v2329 = vmul.f32 %v1645, %v2292
        %v2330 = vmul.f32 %v1646, %v2292
        %v2331 = vmul.f32 %v1647, %v2292
        %v2332 = vmul.f32 %v1648, %v2292
        %v2333 = vmul.f32 %v1649, %v2292
        %v2334 = vmul.f32 %v1650, %v2292
        %v2335 = vmul.f32 %v1651, %v2292
        %v2336 = vmul.f32 %v1652, %v2292
        %v2337 = vmul.f32 %v1653, %v2292
        %v2338 = vmul.f32 %v1654, %v2292
        %v2339 = vmul.f32 %v1655, %v2292
        %v2340 = vmul.f32 %v1656, %v2292
        %v2389 = vrot.slane %v2293, 1
        %v2390 = vrot.slane %v2294, 1
        %v2391 = vsel %vm1831, %v2389, %v2390
        %v2392 = vrot.slane %v2295, 1
        %v2393 = vsel %vm1831, %v2390, %v2392
        %v2394 = vrot.slane %v2296, 1
        %v2395 = vrot.slane %v2297, 1
        %v2396 = vsel %vm1831, %v2394, %v2395
        %v2397 = vrot.slane %v2298, 1
        %v2398 = vsel %vm1831, %v2395, %v2397
        %v2399 = vrot.slane %v2299, 1
        %v2400 = vrot.slane %v2300, 1
        %v2401 = vsel %vm1831, %v2399, %v2400
        %v2402 = vrot.slane %v2301, 1
        %v2403 = vsel %vm1831, %v2400, %v2402
        %v2404 = vrot.slane %v2302, 1
        %v2405 = vrot.slane %v2303, 1
        %v2406 = vsel %vm1831, %v2404, %v2405
        %v2407 = vrot.slane %v2304, 1
        %v2408 = vsel %vm1831, %v2405, %v2407
        %v2409 = vrot.slane %v2305, 1
        %v2410 = vrot.slane %v2306, 1
        %v2411 = vsel %vm1831, %v2409, %v2410
        %v2412 = vrot.slane %v2307, 1
        %v2413 = vsel %vm1831, %v2410, %v2412
        %v2414 = vrot.slane %v2308, 1
        %v2415 = vrot.slane %v2309, 1
        %v2416 = vsel %vm1831, %v2414, %v2415
        %v2417 = vrot.slane %v2310, 1
        %v2418 = vsel %vm1831, %v2415, %v2417
        %v2419 = vrot.slane %v2311, 1
        %v2420 = vrot.slane %v2312, 1
        %v2421 = vsel %vm1831, %v2419, %v2420
        %v2422 = vrot.slane %v2313, 1
        %v2423 = vsel %vm1831, %v2420, %v2422
        %v2424 = vrot.slane %v2314, 1
        %v2425 = vrot.slane %v2315, 1
        %v2426 = vsel %vm1831, %v2424, %v2425
        %v2427 = vrot.slane %v2316, 1
        %v2428 = vsel %vm1831, %v2425, %v2427
        %v2429 = vrot.slane %v2317, 1
        %v2430 = vrot.slane %v2318, 1
        %v2431 = vsel %vm1831, %v2429, %v2430
        %v2432 = vrot.slane %v2319, 1
        %v2433 = vsel %vm1831, %v2430, %v2432
        %v2434 = vrot.slane %v2320, 1
        %v2435 = vrot.slane %v2321, 1
        %v2436 = vsel %vm1831, %v2434, %v2435
        %v2437 = vrot.slane %v2322, 1
        %v2438 = vsel %vm1831, %v2435, %v2437
        %v2439 = vrot.slane %v2323, 1
        %v2440 = vrot.slane %v2324, 1
        %v2441 = vsel %vm1831, %v2439, %v2440
        %v2442 = vrot.slane %v2325, 1
        %v2443 = vsel %vm1831, %v2440, %v2442
        %v2444 = vrot.slane %v2326, 1
        %v2445 = vrot.slane %v2327, 1
        %v2446 = vsel %vm1831, %v2444, %v2445
        %v2447 = vrot.slane %v2328, 1
        %v2448 = vsel %vm1831, %v2445, %v2447
        %v2449 = vrot.slane %v2329, 1
        %v2450 = vrot.slane %v2330, 1
        %v2451 = vsel %vm1831, %v2449, %v2450
        %v2452 = vrot.slane %v2331, 1
        %v2453 = vsel %vm1831, %v2450, %v2452
        %v2454 = vrot.slane %v2332, 1
        %v2455 = vrot.slane %v2333, 1
        %v2456 = vsel %vm1831, %v2454, %v2455
        %v2457 = vrot.slane %v2334, 1
        %v2458 = vsel %vm1831, %v2455, %v2457
        %v2459 = vrot.slane %v2335, 1
        %v2460 = vrot.slane %v2336, 1
        %v2461 = vsel %vm1831, %v2459, %v2460
        %v2462 = vrot.slane %v2337, 1
        %v2463 = vsel %vm1831, %v2460, %v2462
        %v2464 = vrot.slane %v2338, 1
        %v2465 = vrot.slane %v2339, 1
        %v2466 = vsel %vm1831, %v2464, %v2465
        %v2467 = vrot.slane %v2340, 1
        %v2468 = vsel %vm1831, %v2465, %v2467
        %v2501 = vadd.f32 %v2257, %v2391
        %v2502 = vadd.f32 %v2258, %v2393
        %v2503 = vadd.f32 %v2259, %v2396
        %v2504 = vadd.f32 %v2260, %v2398
        %v2505 = vadd.f32 %v2261, %v2401
        %v2506 = vadd.f32 %v2262, %v2403
        %v2507 = vadd.f32 %v2263, %v2406
        %v2508 = vadd.f32 %v2264, %v2408
        %v2509 = vadd.f32 %v2265, %v2411
        %v2510 = vadd.f32 %v2266, %v2413
        %v2511 = vadd.f32 %v2267, %v2416
        %v2512 = vadd.f32 %v2268, %v2418
        %v2513 = vadd.f32 %v2269, %v2421
        %v2514 = vadd.f32 %v2270, %v2423
        %v2515 = vadd.f32 %v2271, %v2426
        %v2516 = vadd.f32 %v2272, %v2428
        %v2517 = vadd.f32 %v2273, %v2431
        %v2518 = vadd.f32 %v2274, %v2433
        %v2519 = vadd.f32 %v2275, %v2436
        %v2520 = vadd.f32 %v2276, %v2438
        %v2521 = vadd.f32 %v2277, %v2441
        %v2522 = vadd.f32 %v2278, %v2443
        %v2523 = vadd.f32 %v2279, %v2446
        %v2524 = vadd.f32 %v2280, %v2448
        %v2525 = vadd.f32 %v2281, %v2451
        %v2526 = vadd.f32 %v2282, %v2453
        %v2527 = vadd.f32 %v2283, %v2456
        %v2528 = vadd.f32 %v2284, %v2458
        %v2529 = vadd.f32 %v2285, %v2461
        %v2530 = vadd.f32 %v2286, %v2463
        %v2531 = vadd.f32 %v2287, %v2466
        %v2532 = vadd.f32 %v2288, %v2468
        %v2533 = vlaneseq
        %v2534 = vshrl.u32 %v2533, 7
        %v2535 = vsub.s32 2, %v2534
        %v2536 = vrot.slane %v1661, %v2535
        %v2537 = vmul.f32 %v1609, %v2536
        %v2538 = vmul.f32 %v1610, %v2536
        %v2539 = vmul.f32 %v1611, %v2536
        %v2540 = vmul.f32 %v1612, %v2536
        %v2541 = vmul.f32 %v1613, %v2536
        %v2542 = vmul.f32 %v1614, %v2536
        %v2543 = vmul.f32 %v1615, %v2536
        %v2544 = vmul.f32 %v1616, %v2536
        %v2545 = vmul.f32 %v1617, %v2536
        %v2546 = vmul.f32 %v1618, %v2536
        %v2547 = vmul.f32 %v1619, %v2536
        %v2548 = vmul.f32 %v1620, %v2536
        %v2549 = vmul.f32 %v1621, %v2536
        %v2550 = vmul.f32 %v1622, %v2536
        %v2551 = vmul.f32 %v1623, %v2536
        %v2552 = vmul.f32 %v1624, %v2536
        %v2553 = vmul.f32 %v1625, %v2536
        %v2554 = vmul.f32 %v1626, %v2536
        %v2555 = vmul.f32 %v1627, %v2536
        %v2556 = vmul.f32 %v1628, %v2536
        %v2557 = vmul.f32 %v1629, %v2536
        %v2558 = vmul.f32 %v1630, %v2536
        %v2559 = vmul.f32 %v1631, %v2536
        %v2560 = vmul.f32 %v1632, %v2536
        %v2561 = vmul.f32 %v1633, %v2536
        %v2562 = vmul.f32 %v1634, %v2536
        %v2563 = vmul.f32 %v1635, %v2536
        %v2564 = vmul.f32 %v1636, %v2536
        %v2565 = vmul.f32 %v1637, %v2536
        %v2566 = vmul.f32 %v1638, %v2536
        %v2567 = vmul.f32 %v1639, %v2536
        %v2568 = vmul.f32 %v1640, %v2536
        %v2569 = vmul.f32 %v1641, %v2536
        %v2570 = vmul.f32 %v1642, %v2536
        %v2571 = vmul.f32 %v1643, %v2536
        %v2572 = vmul.f32 %v1644, %v2536
        %v2573 = vmul.f32 %v1645, %v2536
        %v2574 = vmul.f32 %v1646, %v2536
        %v2575 = vmul.f32 %v1647, %v2536
        %v2576 = vmul.f32 %v1648, %v2536
        %v2577 = vmul.f32 %v1649, %v2536
        %v2578 = vmul.f32 %v1650, %v2536
        %v2579 = vmul.f32 %v1651, %v2536
        %v2580 = vmul.f32 %v1652, %v2536
        %v2581 = vmul.f32 %v1653, %v2536
        %v2582 = vmul.f32 %v1654, %v2536
        %v2583 = vmul.f32 %v1655, %v2536
        %v2584 = vmul.f32 %v1656, %v2536
        %v2633 = vrot.slane %v2537, 2
        %v2634 = vrot.slane %v2538, 2
        %v2635 = vsel %vm2076, %v2633, %v2634
        %v2636 = vrot.slane %v2539, 2
        %v2637 = vsel %vm2076, %v2634, %v2636
        %v2638 = vrot.slane %v2540, 2
        %v2639 = vrot.slane %v2541, 2
        %v2640 = vsel %vm2076, %v2638, %v2639
        %v2641 = vrot.slane %v2542, 2
        %v2642 = vsel %vm2076, %v2639, %v2641
        %v2643 = vrot.slane %v2543, 2
        %v2644 = vrot.slane %v2544, 2
        %v2645 = vsel %vm2076, %v2643, %v2644
        %v2646 = vrot.slane %v2545, 2
        %v2647 = vsel %vm2076, %v2644, %v2646
        %v2648 = vrot.slane %v2546, 2
        %v2649 = vrot.slane %v2547, 2
        %v2650 = vsel %vm2076, %v2648, %v2649
        %v2651 = vrot.slane %v2548, 2
        %v2652 = vsel %vm2076, %v2649, %v2651
        %v2653 = vrot.slane %v2549, 2
        %v2654 = vrot.slane %v2550, 2
        %v2655 = vsel %vm2076, %v2653, %v2654
        %v2656 = vrot.slane %v2551, 2
        %v2657 = vsel %vm2076, %v2654, %v2656
        %v2658 = vrot.slane %v2552, 2
        %v2659 = vrot.slane %v2553, 2
        %v2660 = vsel %vm2076, %v2658, %v2659
        %v2661 = vrot.slane %v2554, 2
        %v2662 = vsel %vm2076, %v2659, %v2661
        %v2663 = vrot.slane %v2555, 2
        %v2664 = vrot.slane %v2556, 2
        %v2665 = vsel %vm2076, %v2663, %v2664
        %v2666 = vrot.slane %v2557, 2
        %v2667 = vsel %vm2076, %v2664, %v2666
        %v2668 = vrot.slane %v2558, 2
        %v2669 = vrot.slane %v2559, 2
        %v2670 = vsel %vm2076, %v2668, %v2669
        %v2671 = vrot.slane %v2560, 2
        %v2672 = vsel %vm2076, %v2669, %v2671
        %v2673 = vrot.slane %v2561, 2
        %v2674 = vrot.slane %v2562, 2
        %v2675 = vsel %vm2076, %v2673, %v2674
        %v2676 = vrot.slane %v2563, 2
        %v2677 = vsel %vm2076, %v2674, %v2676
        %v2678 = vrot.slane %v2564, 2
        %v2679 = vrot.slane %v2565, 2
        %v2680 = vsel %vm2076, %v2678, %v2679
        %v2681 = vrot.slane %v2566, 2
        %v2682 = vsel %vm2076, %v2679, %v2681
        %v2683 = vrot.slane %v2567, 2
        %v2684 = vrot.slane %v2568, 2
        %v2685 = vsel %vm2076, %v2683, %v2684
        %v2686 = vrot.slane %v2569, 2
        %v2687 = vsel %vm2076, %v2684, %v2686
        %v2688 = vrot.slane %v2570, 2
        %v2689 = vrot.slane %v2571, 2
        %v2690 = vsel %vm2076, %v2688, %v2689
        %v2691 = vrot.slane %v2572, 2
        %v2692 = vsel %vm2076, %v2689, %v2691
        %v2693 = vrot.slane %v2573, 2
        %v2694 = vrot.slane %v2574, 2
        %v2695 = vsel %vm2076, %v2693, %v2694
        %v2696 = vrot.slane %v2575, 2
        %v2697 = vsel %vm2076, %v2694, %v2696
        %v2698 = vrot.slane %v2576, 2
        %v2699 = vrot.slane %v2577, 2
        %v2700 = vsel %vm2076, %v2698, %v2699
        %v2701 = vrot.slane %v2578, 2
        %v2702 = vsel %vm2076, %v2699, %v2701
        %v2703 = vrot.slane %v2579, 2
        %v2704 = vrot.slane %v2580, 2
        %v2705 = vsel %vm2076, %v2703, %v2704
        %v2706 = vrot.slane %v2581, 2
        %v2707 = vsel %vm2076, %v2704, %v2706
        %v2708 = vrot.slane %v2582, 2
        %v2709 = vrot.slane %v2583, 2
        %v2710 = vsel %vm2076, %v2708, %v2709
        %v2711 = vrot.slane %v2584, 2
        %v2712 = vsel %vm2076, %v2709, %v2711
        %v2745 = vadd.f32 %v2501, %v2635
        %v2746 = vadd.f32 %v2502, %v2637
        %v2747 = vadd.f32 %v2503, %v2640
        %v2748 = vadd.f32 %v2504, %v2642
        %v2749 = vadd.f32 %v2505, %v2645
        %v2750 = vadd.f32 %v2506, %v2647
        %v2751 = vadd.f32 %v2507, %v2650
        %v2752 = vadd.f32 %v2508, %v2652
        %v2753 = vadd.f32 %v2509, %v2655
        %v2754 = vadd.f32 %v2510, %v2657
        %v2755 = vadd.f32 %v2511, %v2660
        %v2756 = vadd.f32 %v2512, %v2662
        %v2757 = vadd.f32 %v2513, %v2665
        %v2758 = vadd.f32 %v2514, %v2667
        %v2759 = vadd.f32 %v2515, %v2670
        %v2760 = vadd.f32 %v2516, %v2672
        %v2761 = vadd.f32 %v2517, %v2675
        %v2762 = vadd.f32 %v2518, %v2677
        %v2763 = vadd.f32 %v2519, %v2680
        %v2764 = vadd.f32 %v2520, %v2682
        %v2765 = vadd.f32 %v2521, %v2685
        %v2766 = vadd.f32 %v2522, %v2687
        %v2767 = vadd.f32 %v2523, %v2690
        %v2768 = vadd.f32 %v2524, %v2692
        %v2769 = vadd.f32 %v2525, %v2695
        %v2770 = vadd.f32 %v2526, %v2697
        %v2771 = vadd.f32 %v2527, %v2700
        %v2772 = vadd.f32 %v2528, %v2702
        %v2773 = vadd.f32 %v2529, %v2705
        %v2774 = vadd.f32 %v2530, %v2707
        %v2775 = vadd.f32 %v2531, %v2710
        %v2776 = vadd.f32 %v2532, %v2712
        %v2777 = vlaneseq
        %v2778 = vshrl.u32 %v2777, 7
        %v2779 = vsub.s32 0, %v2778
        %v2780 = vrot.slane %v1662, %v2779
        %v2781 = vmul.f32 %v1612, %v2780
        %v2782 = vmul.f32 %v1613, %v2780
        %v2783 = vmul.f32 %v1615, %v2780
        %v2784 = vmul.f32 %v1616, %v2780
        %v2785 = vmul.f32 %v1618, %v2780
        %v2786 = vmul.f32 %v1619, %v2780
        %v2787 = vmul.f32 %v1621, %v2780
        %v2788 = vmul.f32 %v1622, %v2780
        %v2789 = vmul.f32 %v1624, %v2780
        %v2790 = vmul.f32 %v1625, %v2780
        %v2791 = vmul.f32 %v1627, %v2780
        %v2792 = vmul.f32 %v1628, %v2780
        %v2793 = vmul.f32 %v1630, %v2780
        %v2794 = vmul.f32 %v1631, %v2780
        %v2795 = vmul.f32 %v1633, %v2780
        %v2796 = vmul.f32 %v1634, %v2780
        %v2797 = vmul.f32 %v1636, %v2780
        %v2798 = vmul.f32 %v1637, %v2780
        %v2799 = vmul.f32 %v1639, %v2780
        %v2800 = vmul.f32 %v1640, %v2780
        %v2801 = vmul.f32 %v1642, %v2780
        %v2802 = vmul.f32 %v1643, %v2780
        %v2803 = vmul.f32 %v1645, %v2780
        %v2804 = vmul.f32 %v1646, %v2780
        %v2805 = vmul.f32 %v1648, %v2780
        %v2806 = vmul.f32 %v1649, %v2780
        %v2807 = vmul.f32 %v1651, %v2780
        %v2808 = vmul.f32 %v1652, %v2780
        %v2809 = vmul.f32 %v1654, %v2780
        %v2810 = vmul.f32 %v1655, %v2780
        %v2811 = vmul.f32 %v1657, %v2780
        %v2812 = vmul.f32 %v1658, %v2780
        %v2813 = vadd.f32 %v2745, %v2781
        %v2814 = vadd.f32 %v2746, %v2782
        %v2815 = vadd.f32 %v2747, %v2783
        %v2816 = vadd.f32 %v2748, %v2784
        %v2817 = vadd.f32 %v2749, %v2785
        %v2818 = vadd.f32 %v2750, %v2786
        %v2819 = vadd.f32 %v2751, %v2787
        %v2820 = vadd.f32 %v2752, %v2788
        %v2821 = vadd.f32 %v2753, %v2789
        %v2822 = vadd.f32 %v2754, %v2790
        %v2823 = vadd.f32 %v2755, %v2791
        %v2824 = vadd.f32 %v2756, %v2792
        %v2825 = vadd.f32 %v2757, %v2793
        %v2826 = vadd.f32 %v2758, %v2794
        %v2827 = vadd.f32 %v2759, %v2795
        %v2828 = vadd.f32 %v2760, %v2796
        %v2829 = vadd.f32 %v2761, %v2797
        %v2830 = vadd.f32 %v2762, %v2798
        %v2831 = vadd.f32 %v2763, %v2799
        %v2832 = vadd.f32 %v2764, %v2800
        %v2833 = vadd.f32 %v2765, %v2801
        %v2834 = vadd.f32 %v2766, %v2802
        %v2835 = vadd.f32 %v2767, %v2803
        %v2836 = vadd.f32 %v2768, %v2804
        %v2837 = vadd.f32 %v2769, %v2805
        %v2838 = vadd.f32 %v2770, %v2806
        %v2839 = vadd.f32 %v2771, %v2807
        %v2840 = vadd.f32 %v2772, %v2808
        %v2841 = vadd.f32 %v2773, %v2809
        %v2842 = vadd.f32 %v2774, %v2810
        %v2843 = vadd.f32 %v2775, %v2811
        %v2844 = vadd.f32 %v2776, %v2812
        %v2845 = vlaneseq
        %v2846 = vshrl.u32 %v2845, 7
        %v2847 = vsub.s32 1, %v2846
        %v2848 = vrot.slane %v1662, %v2847
        %v2849 = vmul.f32 %v1612, %v2848
        %v2850 = vmul.f32 %v1613, %v2848
        %v2851 = vmul.f32 %v1614, %v2848
        %v2852 = vmul.f32 %v1615, %v2848
        %v2853 = vmul.f32 %v1616, %v2848
        %v2854 = vmul.f32 %v1617, %v2848
        %v2855 = vmul.f32 %v1618, %v2848
        %v2856 = vmul.f32 %v1619, %v2848
        %v2857 = vmul.f32 %v1620, %v2848
        %v2858 = vmul.f32 %v1621, %v2848
        %v2859 = vmul.f32 %v1622, %v2848
        %v2860 = vmul.f32 %v1623, %v2848
        %v2861 = vmul.f32 %v1624, %v2848
        %v2862 = vmul.f32 %v1625, %v2848
        %v2863 = vmul.f32 %v1626, %v2848
        %v2864 = vmul.f32 %v1627, %v2848
        %v2865 = vmul.f32 %v1628, %v2848
        %v2866 = vmul.f32 %v1629, %v2848
        %v2867 = vmul.f32 %v1630, %v2848
        %v2868 = vmul.f32 %v1631, %v2848
        %v2869 = vmul.f32 %v1632, %v2848
        %v2870 = vmul.f32 %v1633, %v2848
        %v2871 = vmul.f32 %v1634, %v2848
        %v2872 = vmul.f32 %v1635, %v2848
        %v2873 = vmul.f32 %v1636, %v2848
        %v2874 = vmul.f32 %v1637, %v2848
        %v2875 = vmul.f32 %v1638, %v2848
        %v2876 = vmul.f32 %v1639, %v2848
        %v2877 = vmul.f32 %v1640, %v2848
        %v2878 = vmul.f32 %v1641, %v2848
        %v2879 = vmul.f32 %v1642, %v2848
        %v2880 = vmul.f32 %v1643, %v2848
        %v2881 = vmul.f32 %v1644, %v2848
        %v2882 = vmul.f32 %v1645, %v2848
        %v2883 = vmul.f32 %v1646, %v2848
        %v2884 = vmul.f32 %v1647, %v2848
        %v2885 = vmul.f32 %v1648, %v2848
        %v2886 = vmul.f32 %v1649, %v2848
        %v2887 = vmul.f32 %v1650, %v2848
        %v2888 = vmul.f32 %v1651, %v2848
        %v2889 = vmul.f32 %v1652, %v2848
        %v2890 = vmul.f32 %v1653, %v2848
        %v2891 = vmul.f32 %v1654, %v2848
        %v2892 = vmul.f32 %v1655, %v2848
        %v2893 = vmul.f32 %v1656, %v2848
        %v2894 = vmul.f32 %v1657, %v2848
        %v2895 = vmul.f32 %v1658, %v2848
        %v2896 = vmul.f32 %v1659, %v2848
        %v2945 = vrot.slane %v2849, 1
        %v2946 = vrot.slane %v2850, 1
        %v2947 = vsel %vm1831, %v2945, %v2946
        %v2948 = vrot.slane %v2851, 1
        %v2949 = vsel %vm1831, %v2946, %v2948
        %v2950 = vrot.slane %v2852, 1
        %v2951 = vrot.slane %v2853, 1
        %v2952 = vsel %vm1831, %v2950, %v2951
        %v2953 = vrot.slane %v2854, 1
        %v2954 = vsel %vm1831, %v2951, %v2953
        %v2955 = vrot.slane %v2855, 1
        %v2956 = vrot.slane %v2856, 1
        %v2957 = vsel %vm1831, %v2955, %v2956
        %v2958 = vrot.slane %v2857, 1
        %v2959 = vsel %vm1831, %v2956, %v2958
        %v2960 = vrot.slane %v2858, 1
        %v2961 = vrot.slane %v2859, 1
        %v2962 = vsel %vm1831, %v2960, %v2961
        %v2963 = vrot.slane %v2860, 1
        %v2964 = vsel %vm1831, %v2961, %v2963
        %v2965 = vrot.slane %v2861, 1
        %v2966 = vrot.slane %v2862, 1
        %v2967 = vsel %vm1831, %v2965, %v2966
        %v2968 = vrot.slane %v2863, 1
        %v2969 = vsel %vm1831, %v2966, %v2968
        %v2970 = vrot.slane %v2864, 1
        %v2971 = vrot.slane %v2865, 1
        %v2972 = vsel %vm1831, %v2970, %v2971
        %v2973 = vrot.slane %v2866, 1
        %v2974 = vsel %vm1831, %v2971, %v2973
        %v2975 = vrot.slane %v2867, 1
        %v2976 = vrot.slane %v2868, 1
        %v2977 = vsel %vm1831, %v2975, %v2976
        %v2978 = vrot.slane %v2869, 1
        %v2979 = vsel %vm1831, %v2976, %v2978
        %v2980 = vrot.slane %v2870, 1
        %v2981 = vrot.slane %v2871, 1
        %v2982 = vsel %vm1831, %v2980, %v2981
        %v2983 = vrot.slane %v2872, 1
        %v2984 = vsel %vm1831, %v2981, %v2983
        %v2985 = vrot.slane %v2873, 1
        %v2986 = vrot.slane %v2874, 1
        %v2987 = vsel %vm1831, %v2985, %v2986
        %v2988 = vrot.slane %v2875, 1
        %v2989 = vsel %vm1831, %v2986, %v2988
        %v2990 = vrot.slane %v2876, 1
        %v2991 = vrot.slane %v2877, 1
        %v2992 = vsel %vm1831, %v2990, %v2991
        %v2993 = vrot.slane %v2878, 1
        %v2994 = vsel %vm1831, %v2991, %v2993
        %v2995 = vrot.slane %v2879, 1
        %v2996 = vrot.slane %v2880, 1
        %v2997 = vsel %vm1831, %v2995, %v2996
        %v2998 = vrot.slane %v2881, 1
        %v2999 = vsel %vm1831, %v2996, %v2998
        %v3000 = vrot.slane %v2882, 1
        %v3001 = vrot.slane %v2883, 1
        %v3002 = vsel %vm1831, %v3000, %v3001
        %v3003 = vrot.slane %v2884, 1
        %v3004 = vsel %vm1831, %v3001, %v3003
        %v3005 = vrot.slane %v2885, 1
        %v3006 = vrot.slane %v2886, 1
        %v3007 = vsel %vm1831, %v3005, %v3006
        %v3008 = vrot.slane %v2887, 1
        %v3009 = vsel %vm1831, %v3006, %v3008
        %v3010 = vrot.slane %v2888, 1
        %v3011 = vrot.slane %v2889, 1
        %v3012 = vsel %vm1831, %v3010, %v3011
        %v3013 = vrot.slane %v2890, 1
        %v3014 = vsel %vm1831, %v3011, %v3013
        %v3015 = vrot.slane %v2891, 1
        %v3016 = vrot.slane %v2892, 1
        %v3017 = vsel %vm1831, %v3015, %v3016
        %v3018 = vrot.slane %v2893, 1
        %v3019 = vsel %vm1831, %v3016, %v3018
        %v3020 = vrot.slane %v2894, 1
        %v3021 = vrot.slane %v2895, 1
        %v3022 = vsel %vm1831, %v3020, %v3021
        %v3023 = vrot.slane %v2896, 1
        %v3024 = vsel %vm1831, %v3021, %v3023
        %v3057 = vadd.f32 %v2813, %v2947
        %v3058 = vadd.f32 %v2814, %v2949
        %v3059 = vadd.f32 %v2815, %v2952
        %v3060 = vadd.f32 %v2816, %v2954
        %v3061 = vadd.f32 %v2817, %v2957
        %v3062 = vadd.f32 %v2818, %v2959
        %v3063 = vadd.f32 %v2819, %v2962
        %v3064 = vadd.f32 %v2820, %v2964
        %v3065 = vadd.f32 %v2821, %v2967
        %v3066 = vadd.f32 %v2822, %v2969
        %v3067 = vadd.f32 %v2823, %v2972
        %v3068 = vadd.f32 %v2824, %v2974
        %v3069 = vadd.f32 %v2825, %v2977
        %v3070 = vadd.f32 %v2826, %v2979
        %v3071 = vadd.f32 %v2827, %v2982
        %v3072 = vadd.f32 %v2828, %v2984
        %v3073 = vadd.f32 %v2829, %v2987
        %v3074 = vadd.f32 %v2830, %v2989
        %v3075 = vadd.f32 %v2831, %v2992
        %v3076 = vadd.f32 %v2832, %v2994
        %v3077 = vadd.f32 %v2833, %v2997
        %v3078 = vadd.f32 %v2834, %v2999
        %v3079 = vadd.f32 %v2835, %v3002
        %v3080 = vadd.f32 %v2836, %v3004
        %v3081 = vadd.f32 %v2837, %v3007
        %v3082 = vadd.f32 %v2838, %v3009
        %v3083 = vadd.f32 %v2839, %v3012
        %v3084 = vadd.f32 %v2840, %v3014
        %v3085 = vadd.f32 %v2841, %v3017
        %v3086 = vadd.f32 %v2842, %v3019
        %v3087 = vadd.f32 %v2843, %v3022
        %v3088 = vadd.f32 %v2844, %v3024
        %v3089 = vlaneseq
        %v3090 = vshrl.u32 %v3089, 7
        %v3091 = vsub.s32 2, %v3090
        %v3092 = vrot.slane %v1662, %v3091
        %v3093 = vmul.f32 %v1612, %v3092
        %v3094 = vmul.f32 %v1613, %v3092
        %v3095 = vmul.f32 %v1614, %v3092
        %v3096 = vmul.f32 %v1615, %v3092
        %v3097 = vmul.f32 %v1616, %v3092
        %v3098 = vmul.f32 %v1617, %v3092
        %v3099 = vmul.f32 %v1618, %v3092
        %v3100 = vmul.f32 %v1619, %v3092
        %v3101 = vmul.f32 %v1620, %v3092
        %v3102 = vmul.f32 %v1621, %v3092
        %v3103 = vmul.f32 %v1622, %v3092
        %v3104 = vmul.f32 %v1623, %v3092
        %v3105 = vmul.f32 %v1624, %v3092
        %v3106 = vmul.f32 %v1625, %v3092
        %v3107 = vmul.f32 %v1626, %v3092
        %v3108 = vmul.f32 %v1627, %v3092
        %v3109 = vmul.f32 %v1628, %v3092
        %v3110 = vmul.f32 %v1629, %v3092
        %v3111 = vmul.f32 %v1630, %v3092
        %v3112 = vmul.f32 %v1631, %v3092
        %v3113 = vmul.f32 %v1632, %v3092
        %v3114 = vmul.f32 %v1633, %v3092
        %v3115 = vmul.f32 %v1634, %v3092
        %v3116 = vmul.f32 %v1635, %v3092
        %v3117 = vmul.f32 %v1636, %v3092
        %v3118 = vmul.f32 %v1637, %v3092
        %v3119 = vmul.f32 %v1638, %v3092
        %v3120 = vmul.f32 %v1639, %v3092
        %v3121 = vmul.f32 %v1640, %v3092
        %v3122 = vmul.f32 %v1641, %v3092
        %v3123 = vmul.f32 %v1642, %v3092
        %v3124 = vmul.f32 %v1643, %v3092
        %v3125 = vmul.f32 %v1644, %v3092
        %v3126 = vmul.f32 %v1645, %v3092
        %v3127 = vmul.f32 %v1646, %v3092
        %v3128 = vmul.f32 %v1647, %v3092
        %v3129 = vmul.f32 %v1648, %v3092
        %v3130 = vmul.f32 %v1649, %v3092
        %v3131 = vmul.f32 %v1650, %v3092
        %v3132 = vmul.f32 %v1651, %v3092
        %v3133 = vmul.f32 %v1652, %v3092
        %v3134 = vmul.f32 %v1653, %v3092
        %v3135 = vmul.f32 %v1654, %v3092
        %v3136 = vmul.f32 %v1655, %v3092
        %v3137 = vmul.f32 %v1656, %v3092
        %v3138 = vmul.f32 %v1657, %v3092
        %v3139 = vmul.f32 %v1658, %v3092
        %v3140 = vmul.f32 %v1659, %v3092
        %v3189 = vrot.slane %v3093, 2
        %v3190 = vrot.slane %v3094, 2
        %v3191 = vsel %vm2076, %v3189, %v3190
        %v3192 = vrot.slane %v3095, 2
        %v3193 = vsel %vm2076, %v3190, %v3192
        %v3194 = vrot.slane %v3096, 2
        %v3195 = vrot.slane %v3097, 2
        %v3196 = vsel %vm2076, %v3194, %v3195
        %v3197 = vrot.slane %v3098, 2
        %v3198 = vsel %vm2076, %v3195, %v3197
        %v3199 = vrot.slane %v3099, 2
        %v3200 = vrot.slane %v3100, 2
        %v3201 = vsel %vm2076, %v3199, %v3200
        %v3202 = vrot.slane %v3101, 2
        %v3203 = vsel %vm2076, %v3200, %v3202
        %v3204 = vrot.slane %v3102, 2
        %v3205 = vrot.slane %v3103, 2
        %v3206 = vsel %vm2076, %v3204, %v3205
        %v3207 = vrot.slane %v3104, 2
        %v3208 = vsel %vm2076, %v3205, %v3207
        %v3209 = vrot.slane %v3105, 2
        %v3210 = vrot.slane %v3106, 2
        %v3211 = vsel %vm2076, %v3209, %v3210
        %v3212 = vrot.slane %v3107, 2
        %v3213 = vsel %vm2076, %v3210, %v3212
        %v3214 = vrot.slane %v3108, 2
        %v3215 = vrot.slane %v3109, 2
        %v3216 = vsel %vm2076, %v3214, %v3215
        %v3217 = vrot.slane %v3110, 2
        %v3218 = vsel %vm2076, %v3215, %v3217
        %v3219 = vrot.slane %v3111, 2
        %v3220 = vrot.slane %v3112, 2
        %v3221 = vsel %vm2076, %v3219, %v3220
        %v3222 = vrot.slane %v3113, 2
        %v3223 = vsel %vm2076, %v3220, %v3222
        %v3224 = vrot.slane %v3114, 2
        %v3225 = vrot.slane %v3115, 2
        %v3226 = vsel %vm2076, %v3224, %v3225
        %v3227 = vrot.slane %v3116, 2
        %v3228 = vsel %vm2076, %v3225, %v3227
        %v3229 = vrot.slane %v3117, 2
        %v3230 = vrot.slane %v3118, 2
        %v3231 = vsel %vm2076, %v3229, %v3230
        %v3232 = vrot.slane %v3119, 2
        %v3233 = vsel %vm2076, %v3230, %v3232
        %v3234 = vrot.slane %v3120, 2
        %v3235 = vrot.slane %v3121, 2
        %v3236 = vsel %vm2076, %v3234, %v3235
        %v3237 = vrot.slane %v3122, 2
        %v3238 = vsel %vm2076, %v3235, %v3237
        %v3239 = vrot.slane %v3123, 2
        %v3240 = vrot.slane %v3124, 2
        %v3241 = vsel %vm2076, %v3239, %v3240
        %v3242 = vrot.slane %v3125, 2
        %v3243 = vsel %vm2076, %v3240, %v3242
        %v3244 = vrot.slane %v3126, 2
        %v3245 = vrot.slane %v3127, 2
        %v3246 = vsel %vm2076, %v3244, %v3245
        %v3247 = vrot.slane %v3128, 2
        %v3248 = vsel %vm2076, %v3245, %v3247
        %v3249 = vrot.slane %v3129, 2
        %v3250 = vrot.slane %v3130, 2
        %v3251 = vsel %vm2076, %v3249, %v3250
        %v3252 = vrot.slane %v3131, 2
        %v3253 = vsel %vm2076, %v3250, %v3252
        %v3254 = vrot.slane %v3132, 2
        %v3255 = vrot.slane %v3133, 2
        %v3256 = vsel %vm2076, %v3254, %v3255
        %v3257 = vrot.slane %v3134, 2
        %v3258 = vsel %vm2076, %v3255, %v3257
        %v3259 = vrot.slane %v3135, 2
        %v3260 = vrot.slane %v3136, 2
        %v3261 = vsel %vm2076, %v3259, %v3260
        %v3262 = vrot.slane %v3137, 2
        %v3263 = vsel %vm2076, %v3260, %v3262
        %v3264 = vrot.slane %v3138, 2
        %v3265 = vrot.slane %v3139, 2
        %v3266 = vsel %vm2076, %v3264, %v3265
        %v3267 = vrot.slane %v3140, 2
        %v3268 = vsel %vm2076, %v3265, %v3267
        %v3301 = vadd.f32 %v3057, %v3191
        %v3302 = vadd.f32 %v3058, %v3193
        %v3303 = vadd.f32 %v3059, %v3196
        %v3304 = vadd.f32 %v3060, %v3198
        %v3305 = vadd.f32 %v3061, %v3201
        %v3306 = vadd.f32 %v3062, %v3203
        %v3307 = vadd.f32 %v3063, %v3206
        %v3308 = vadd.f32 %v3064, %v3208
        %v3309 = vadd.f32 %v3065, %v3211
        %v3310 = vadd.f32 %v3066, %v3213
        %v3311 = vadd.f32 %v3067, %v3216
        %v3312 = vadd.f32 %v3068, %v3218
        %v3313 = vadd.f32 %v3069, %v3221
        %v3314 = vadd.f32 %v3070, %v3223
        %v3315 = vadd.f32 %v3071, %v3226
        %v3316 = vadd.f32 %v3072, %v3228
        %v3317 = vadd.f32 %v3073, %v3231
        %v3318 = vadd.f32 %v3074, %v3233
        %v3319 = vadd.f32 %v3075, %v3236
        %v3320 = vadd.f32 %v3076, %v3238
        %v3321 = vadd.f32 %v3077, %v3241
        %v3322 = vadd.f32 %v3078, %v3243
        %v3323 = vadd.f32 %v3079, %v3246
        %v3324 = vadd.f32 %v3080, %v3248
        %v3325 = vadd.f32 %v3081, %v3251
        %v3326 = vadd.f32 %v3082, %v3253
        %v3327 = vadd.f32 %v3083, %v3256
        %v3328 = vadd.f32 %v3084, %v3258
        %v3329 = vadd.f32 %v3085, %v3261
        %v3330 = vadd.f32 %v3086, %v3263
        %v3331 = vadd.f32 %v3087, %v3266
        %v3332 = vadd.f32 %v3088, %v3268
        %v3333 = vld [vmem:[%s6] sm:$0x1]
        %v3335 = vlaneseq
        %v3336 = vshrl.u32 %v3335, 7
        %v3337 = vsub.s32 0, %v3336
        %v3338 = vrot.slane %v3333, %v3337
        %v3340 = vadd.f32 %v3301, %v3338
        %v3341 = vadd.f32 %v3302, %v3338
        %v3342 = vadd.f32 %v3303, %v3338
        %v3343 = vadd.f32 %v3304, %v3338
        %v3344 = vadd.f32 %v3305, %v3338
        %v3345 = vadd.f32 %v3306, %v3338
        %v3346 = vadd.f32 %v3307, %v3338
        %v3347 = vadd.f32 %v3308, %v3338
        %v3348 = vadd.f32 %v3309, %v3338
        %v3349 = vadd.f32 %v3310, %v3338
        %v3350 = vadd.f32 %v3311, %v3338
        %v3351 = vadd.f32 %v3312, %v3338
        %v3352 = vadd.f32 %v3313, %v3338
        %v3353 = vadd.f32 %v3314, %v3338
        %v3354 = vadd.f32 %v3315, %v3338
        %v3355 = vadd.f32 %v3316, %v3338
        %v3356 = vadd.f32 %v3317, %v3338
        %v3357 = vadd.f32 %v3318, %v3338
        %v3358 = vadd.f32 %v3319, %v3338
        %v3359 = vadd.f32 %v3320, %v3338
        %v3360 = vadd.f32 %v3321, %v3338
        %v3361 = vadd.f32 %v3322, %v3338
        %v3362 = vadd.f32 %v3323, %v3338
        %v3363 = vadd.f32 %v3324, %v3338
        %v3364 = vadd.f32 %v3325, %v3338
        %v3365 = vadd.f32 %v3326, %v3338
        %v3366 = vadd.f32 %v3327, %v3338
        %v3367 = vadd.f32 %v3328, %v3338
        %v3368 = vadd.f32 %v3329, %v3338
        %v3369 = vadd.f32 %v3330, %v3338
        %v3370 = vadd.f32 %v3331, %v3338
        %v3371 = vadd.f32 %v3332, %v3338
        %v3372 = vxor.u32 %v3340, 2147483648
        %v3373 = vxor.u32 %v3341, 2147483648
        %v3374 = vxor.u32 %v3342, 2147483648
        %v3375 = vxor.u32 %v3343, 2147483648
        %v3376 = vxor.u32 %v3344, 2147483648
        %v3377 = vxor.u32 %v3345, 2147483648
        %v3378 = vxor.u32 %v3346, 2147483648
        %v3379 = vxor.u32 %v3347, 2147483648
        %v3380 = vxor.u32 %v3348, 2147483648
        %v3381 = vxor.u32 %v3349, 2147483648
        %v3382 = vxor.u32 %v3350, 2147483648
        %v3383 = vxor.u32 %v3351, 2147483648
        %v3384 = vxor.u32 %v3352, 2147483648
        %v3385 = vxor.u32 %v3353, 2147483648
        %v3386 = vxor.u32 %v3354, 2147483648
        %v3387 = vxor.u32 %v3355, 2147483648
        %v3388 = vxor.u32 %v3356, 2147483648
        %v3389 = vxor.u32 %v3357, 2147483648
        %v3390 = vxor.u32 %v3358, 2147483648
        %v3391 = vxor.u32 %v3359, 2147483648
        %v3392 = vxor.u32 %v3360, 2147483648
        %v3393 = vxor.u32 %v3361, 2147483648
        %v3394 = vxor.u32 %v3362, 2147483648
        %v3395 = vxor.u32 %v3363, 2147483648
        %v3396 = vxor.u32 %v3364, 2147483648
        %v3397 = vxor.u32 %v3365, 2147483648
        %v3398 = vxor.u32 %v3366, 2147483648
        %v3399 = vxor.u32 %v3367, 2147483648
        %v3400 = vxor.u32 %v3368, 2147483648
        %v3401 = vxor.u32 %v3369, 2147483648
        %v3402 = vxor.u32 %v3370, 2147483648
        %v3403 = vxor.u32 %v3371, 2147483648
        %v3404 = vmul.f32 %v3372, 1.442695
        %v3405 = vpow.pop %v3404
        %v3406 = vmul.f32 %v3373, 1.442695
        %v3407 = vpow.pop %v3406
        %v3408 = vmul.f32 %v3374, 1.442695
        %v3409 = vpow.pop %v3408
        %v3410 = vmul.f32 %v3375, 1.442695
        %v3411 = vpow.pop %v3410
        %v3412 = vmul.f32 %v3376, 1.442695
        %v3413 = vpow.pop %v3412
        %v3414 = vmul.f32 %v3377, 1.442695
        %v3415 = vpow.pop %v3414
        %v3416 = vmul.f32 %v3378, 1.442695
        %v3417 = vpow.pop %v3416
        %v3418 = vmul.f32 %v3379, 1.442695
        %v3419 = vpow.pop %v3418
        %v3420 = vmul.f32 %v3380, 1.442695
        %v3421 = vpow.pop %v3420
        %v3422 = vmul.f32 %v3381, 1.442695
        %v3423 = vpow.pop %v3422
        %v3424 = vmul.f32 %v3382, 1.442695
        %v3425 = vpow.pop %v3424
        %v3426 = vmul.f32 %v3383, 1.442695
        %v3427 = vpow.pop %v3426
        %v3428 = vmul.f32 %v3384, 1.442695
        %v3429 = vpow.pop %v3428
        %v3430 = vmul.f32 %v3385, 1.442695
        %v3431 = vpow.pop %v3430
        %v3432 = vmul.f32 %v3386, 1.442695
        %v3433 = vpow.pop %v3432
        %v3434 = vmul.f32 %v3387, 1.442695
        %v3435 = vpow.pop %v3434
        %v3436 = vmul.f32 %v3388, 1.442695
        %v3437 = vpow.pop %v3436
        %v3438 = vmul.f32 %v3389, 1.442695
        %v3439 = vpow.pop %v3438
        %v3440 = vmul.f32 %v3390, 1.442695
        %v3441 = vpow.pop %v3440
        %v3442 = vmul.f32 %v3391, 1.442695
        %v3443 = vpow.pop %v3442
        %v3444 = vmul.f32 %v3392, 1.442695
        %v3445 = vpow.pop %v3444
        %v3446 = vmul.f32 %v3393, 1.442695
        %v3447 = vpow.pop %v3446
        %v3448 = vmul.f32 %v3394, 1.442695
        %v3449 = vpow.pop %v3448
        %v3450 = vmul.f32 %v3395, 1.442695
        %v3451 = vpow.pop %v3450
        %v3452 = vmul.f32 %v3396, 1.442695
        %v3453 = vpow.pop %v3452
        %v3454 = vmul.f32 %v3397, 1.442695
        %v3455 = vpow.pop %v3454
        %v3456 = vmul.f32 %v3398, 1.442695
        %v3457 = vpow.pop %v3456
        %v3458 = vmul.f32 %v3399, 1.442695
        %v3459 = vpow.pop %v3458
        %v3460 = vmul.f32 %v3400, 1.442695
        %v3461 = vpow.pop %v3460
        %v3462 = vmul.f32 %v3401, 1.442695
        %v3463 = vpow.pop %v3462
        %v3464 = vmul.f32 %v3402, 1.442695
        %v3465 = vpow.pop %v3464
        %v3466 = vmul.f32 %v3403, 1.442695
        %v3467 = vpow.pop %v3466
        %v3468 = vadd.f32 %v3405, 1.0
        %v3469 = vadd.f32 %v3407, 1.0
        %v3470 = vadd.f32 %v3409, 1.0
        %v3471 = vadd.f32 %v3411, 1.0
        %v3472 = vadd.f32 %v3413, 1.0
        %v3473 = vadd.f32 %v3415, 1.0
        %v3474 = vadd.f32 %v3417, 1.0
        %v3475 = vadd.f32 %v3419, 1.0
        %v3476 = vadd.f32 %v3421, 1.0
        %v3477 = vadd.f32 %v3423, 1.0
        %v3478 = vadd.f32 %v3425, 1.0
        %v3479 = vadd.f32 %v3427, 1.0
        %v3480 = vadd.f32 %v3429, 1.0
        %v3481 = vadd.f32 %v3431, 1.0
        %v3482 = vadd.f32 %v3433, 1.0
        %v3483 = vadd.f32 %v3435, 1.0
        %v3484 = vadd.f32 %v3437, 1.0
        %v3485 = vadd.f32 %v3439, 1.0
        %v3486 = vadd.f32 %v3441, 1.0
        %v3487 = vadd.f32 %v3443, 1.0
        %v3488 = vadd.f32 %v3445, 1.0
        %v3489 = vadd.f32 %v3447, 1.0
        %v3490 = vadd.f32 %v3449, 1.0
        %v3491 = vadd.f32 %v3451, 1.0
        %v3492 = vadd.f32 %v3453, 1.0
        %v3493 = vadd.f32 %v3455, 1.0
        %v3494 = vadd.f32 %v3457, 1.0
        %v3495 = vadd.f32 %v3459, 1.0
        %v3496 = vadd.f32 %v3461, 1.0
        %v3497 = vadd.f32 %v3463, 1.0
        %v3498 = vadd.f32 %v3465, 1.0
        %v3499 = vadd.f32 %v3467, 1.0
        %v3500 = vrcp.pop %v3468
        %v3501 = vmul.f32 1.0, %v3500
        %v3502 = vrcp.pop %v3469
        %v3503 = vmul.f32 1.0, %v3502
        %v3504 = vrcp.pop %v3470
        %v3505 = vmul.f32 1.0, %v3504
        %v3506 = vrcp.pop %v3471
        %v3507 = vmul.f32 1.0, %v3506
        %v3508 = vrcp.pop %v3472
        %v3509 = vmul.f32 1.0, %v3508
        %v3510 = vrcp.pop %v3473
        %v3511 = vmul.f32 1.0, %v3510
        %v3512 = vrcp.pop %v3474
        %v3513 = vmul.f32 1.0, %v3512
        %v3514 = vrcp.pop %v3475
        %v3515 = vmul.f32 1.0, %v3514
        %v3516 = vrcp.pop %v3476
        %v3517 = vmul.f32 1.0, %v3516
        %v3518 = vrcp.pop %v3477
        %v3519 = vmul.f32 1.0, %v3518
        %v3520 = vrcp.pop %v3478
        %v3521 = vmul.f32 1.0, %v3520
        %v3522 = vrcp.pop %v3479
        %v3523 = vmul.f32 1.0, %v3522
        %v3524 = vrcp.pop %v3480
        %v3525 = vmul.f32 1.0, %v3524
        %v3526 = vrcp.pop %v3481
        %v3527 = vmul.f32 1.0, %v3526
        %v3528 = vrcp.pop %v3482
        %v3529 = vmul.f32 1.0, %v3528
        %v3530 = vrcp.pop %v3483
        %v3531 = vmul.f32 1.0, %v3530
        %v3532 = vrcp.pop %v3484
        %v3533 = vmul.f32 1.0, %v3532
        %v3534 = vrcp.pop %v3485
        %v3535 = vmul.f32 1.0, %v3534
        %v3536 = vrcp.pop %v3486
        %v3537 = vmul.f32 1.0, %v3536
        %v3538 = vrcp.pop %v3487
        %v3539 = vmul.f32 1.0, %v3538
        %v3540 = vrcp.pop %v3488
        %v3541 = vmul.f32 1.0, %v3540
        %v3542 = vrcp.pop %v3489
        %v3543 = vmul.f32 1.0, %v3542
        %v3544 = vrcp.pop %v3490
        %v3545 = vmul.f32 1.0, %v3544
        %v3546 = vrcp.pop %v3491
        %v3547 = vmul.f32 1.0, %v3546
        %v3548 = vrcp.pop %v3492
        %v3549 = vmul.f32 1.0, %v3548
        %v3550 = vrcp.pop %v3493
        %v3551 = vmul.f32 1.0, %v3550
        %v3552 = vrcp.pop %v3494
        %v3553 = vmul.f32 1.0, %v3552
        %v3554 = vrcp.pop %v3495
        %v3555 = vmul.f32 1.0, %v3554
        %v3556 = vrcp.pop %v3496
        %v3557 = vmul.f32 1.0, %v3556
        %v3558 = vrcp.pop %v3497
        %v3559 = vmul.f32 1.0, %v3558
        %v3560 = vrcp.pop %v3498
        %v3561 = vmul.f32 1.0, %v3560
        %v3562 = vrcp.pop %v3499
        %v3563 = vmul.f32 1.0, %v3562
        %v3564 = vmul.f32 %v3340, %v3501
        %v3565 = vmul.f32 %v3341, %v3503
        %v3566 = vmul.f32 %v3342, %v3505
        %v3567 = vmul.f32 %v3343, %v3507
        %v3568 = vmul.f32 %v3344, %v3509
        %v3569 = vmul.f32 %v3345, %v3511
        %v3570 = vmul.f32 %v3346, %v3513
        %v3571 = vmul.f32 %v3347, %v3515
        %v3572 = vmul.f32 %v3348, %v3517
        %v3573 = vmul.f32 %v3349, %v3519
        %v3574 = vmul.f32 %v3350, %v3521
        %v3575 = vmul.f32 %v3351, %v3523
        %v3576 = vmul.f32 %v3352, %v3525
        %v3577 = vmul.f32 %v3353, %v3527
        %v3578 = vmul.f32 %v3354, %v3529
        %v3579 = vmul.f32 %v3355, %v3531
        %v3580 = vmul.f32 %v3356, %v3533
        %v3581 = vmul.f32 %v3357, %v3535
        %v3582 = vmul.f32 %v3358, %v3537
        %v3583 = vmul.f32 %v3359, %v3539
        %v3584 = vmul.f32 %v3360, %v3541
        %v3585 = vmul.f32 %v3361, %v3543
        %v3586 = vmul.f32 %v3362, %v3545
        %v3587 = vmul.f32 %v3363, %v3547
        %v3588 = vmul.f32 %v3364, %v3549
        %v3589 = vmul.f32 %v3365, %v3551
        %v3590 = vmul.f32 %v3366, %v3553
        %v3591 = vmul.f32 %v3367, %v3555
        %v3592 = vmul.f32 %v3368, %v3557
        %v3593 = vmul.f32 %v3369, %v3559
        %v3594 = vmul.f32 %v3370, %v3561
        %v3595 = vmul.f32 %v3371, %v3563
        %v3596 = vsel %vm1517, %v3564, 0.0
        %v3597 = vsel %vm1517, %v3565, 0.0
        %v3598 = vadd.f32 %v3596, %v3597
        %v3599 = vsel %vm1517, %v3566, 0.0
        %v3600 = vadd.f32 %v3598, %v3599
        %v3601 = vsel %vm1517, %v3567, 0.0
        %v3602 = vadd.f32 %v3600, %v3601
        %v3603 = vsel %vm1517, %v3568, 0.0
        %v3604 = vadd.f32 %v3602, %v3603
        %v3605 = vsel %vm1517, %v3569, 0.0
        %v3606 = vadd.f32 %v3604, %v3605
        %v3607 = vsel %vm1517, %v3570, 0.0
        %v3608 = vadd.f32 %v3606, %v3607
        %v3609 = vsel %vm1517, %v3571, 0.0
        %v3610 = vadd.f32 %v3608, %v3609
        %v3611 = vsel %vm1517, %v3572, 0.0
        %v3612 = vadd.f32 %v3610, %v3611
        %v3613 = vsel %vm1517, %v3573, 0.0
        %v3614 = vadd.f32 %v3612, %v3613
        %v3615 = vsel %vm1517, %v3574, 0.0
        %v3616 = vadd.f32 %v3614, %v3615
        %v3617 = vsel %vm1517, %v3575, 0.0
        %v3618 = vadd.f32 %v3616, %v3617
        %v3619 = vsel %vm1517, %v3576, 0.0
        %v3620 = vadd.f32 %v3618, %v3619
        %v3621 = vsel %vm1517, %v3577, 0.0
        %v3622 = vadd.f32 %v3620, %v3621
        %v3623 = vsel %vm1517, %v3578, 0.0
        %v3624 = vadd.f32 %v3622, %v3623
        %v3625 = vsel %vm1517, %v3579, 0.0
        %v3626 = vadd.f32 %v3624, %v3625
        %v3627 = vsel %vm1517, %v3580, 0.0
        %v3628 = vadd.f32 %v3626, %v3627
        %v3629 = vsel %vm1517, %v3581, 0.0
        %v3630 = vadd.f32 %v3628, %v3629
        %v3631 = vsel %vm1517, %v3582, 0.0
        %v3632 = vadd.f32 %v3630, %v3631
        %v3633 = vsel %vm1517, %v3583, 0.0
        %v3634 = vadd.f32 %v3632, %v3633
        %v3635 = vsel %vm1517, %v3584, 0.0
        %v3636 = vadd.f32 %v3634, %v3635
        %v3637 = vsel %vm1517, %v3585, 0.0
        %v3638 = vadd.f32 %v3636, %v3637
        %v3639 = vsel %vm1517, %v3586, 0.0
        %v3640 = vadd.f32 %v3638, %v3639
        %v3641 = vsel %vm1517, %v3587, 0.0
        %v3642 = vadd.f32 %v3640, %v3641
        %v3643 = vsel %vm1517, %v3588, 0.0
        %v3644 = vadd.f32 %v3642, %v3643
        %v3645 = vsel %vm1517, %v3589, 0.0
        %v3646 = vadd.f32 %v3644, %v3645
        %v3647 = vsel %vm1517, %v3590, 0.0
        %v3648 = vadd.f32 %v3646, %v3647
        %v3649 = vsel %vm1517, %v3591, 0.0
        %v3650 = vadd.f32 %v3648, %v3649
        %v3651 = vsel %vm1517, %v3592, 0.0
        %v3652 = vadd.f32 %v3650, %v3651
        %v3653 = vsel %vm1517, %v3593, 0.0
        %v3654 = vadd.f32 %v3652, %v3653
        %v3655 = vsel %vm1517, %v3594, 0.0
        %v3656 = vadd.f32 %v3654, %v3655
        %v3657 = vsel %vm1517, %v3595, 0.0
        %v3658 = vadd.f32 %v3656, %v3657
        %v3659 = vrot.slane %v3658, 4
        %v3660 = vadd.f32 %v3658, %v3659
        %v3661 = vrot.slane %v3660, 2
        %v3662 = vadd.f32 %v3660, %v3661
        %v3663 = vrot.slane %v3662, 1
        %v3664 = vadd.f32 %v3662, %v3663
        %v3665 = vrcp.pop 256.0
        %v3666 = vmul.f32 %v3664, %v3665
        %v3667 = vld [vmem:[%s7] sm:$0xff]
        %v3668 = vld [vmem:[%s7 + $0x8] sm:$0xff]
        %v3669 = vld [vmem:[%s7 + $0x10] sm:$0xff]
        %v3670 = vld [vmem:[%s7 + $0x18] sm:$0xff]
        %v3671 = vld [vmem:[%s7 + $0x20] sm:$0xff]
        %v3672 = vld [vmem:[%s7 + $0x28] sm:$0xff]
        %v3673 = vld [vmem:[%s7 + $0x30] sm:$0xff]
        %v3674 = vld [vmem:[%s7 + $0x38] sm:$0xff]
        %v3675 = vld [vmem:[%s8] sm:$0x1]
        %v3677 = vsel %vm1517, %v3666, 0
        %3679 = vmatprep.subr.mxu0 0.0
        %3680 = vmatpush1.msra.mxu0 0.0
        %3681 = vmatprep.subr.mxu0 0.0
        %3682 = vmatpush1.msra.mxu0 0.0
        %3683 = vmatprep.subr.mxu0 0.0
        %3684 = vmatpush1.msra.mxu0 0.0
        %3685 = vmatprep.subr.mxu0 0.0
        %3686 = vmatpush1.msra.mxu0 0.0
        %3687 = vmatprep.subr.mxu0 0.0
        %3688 = vmatpush1.msra.mxu0 0.0
        %3689 = vmatprep.subr.mxu0 0.0
        %3690 = vmatpush1.msra.mxu0 0.0
        %3691 = vmatprep.subr.mxu0 0.0
        %3692 = vmatpush1.msra.mxu0 0.0
        %3693 = vmatprep.subr.mxu0 0.0
        %3694 = vmatpush1.msra.mxu0 0.0
        %3695 = vmatprep.subr.mxu0 0.0
        %3696 = vmatpush1.msra.mxu0 %v3674
        %3697 = vmatprep.subr.mxu0 0.0
        %3698 = vmatpush1.msra.mxu0 %v3673
        %3699 = vmatprep.subr.mxu0 0.0
        %3700 = vmatpush1.msra.mxu0 %v3672
        %3701 = vmatprep.subr.mxu0 0.0
        %3702 = vmatpush1.msra.mxu0 %v3671
        %3703 = vmatprep.subr.mxu0 0.0
        %3704 = vmatpush1.msra.mxu0 %v3670
        %3705 = vmatprep.subr.mxu0 0.0
        %3706 = vmatpush1.msra.mxu0 %v3669
        %3707 = vmatprep.subr.mxu0 0.0
        %3708 = vmatpush1.msra.mxu0 %v3668
        %3709 = vmatprep.subr.mxu0 0.0
        %3710 = vmatpush1.msra.mxu0 %v3667
        %3711 = vmatprep.subr.mxu0 0.0
        %3712 = vmatpush2.msra.mxu0 0.0
        %3713 = vmatprep.subr.mxu0 0.0
        %3714 = vmatpush2.msra.mxu0 0.0
        %3715 = vmatprep.subr.mxu0 0.0
        %3716 = vmatpush2.msra.mxu0 0.0
        %3717 = vmatprep.subr.mxu0 0.0
        %3718 = vmatpush2.msra.mxu0 0.0
        %3719 = vmatprep.subr.mxu0 0.0
        %3720 = vmatpush2.msra.mxu0 0.0
        %3721 = vmatprep.subr.mxu0 0.0
        %3722 = vmatpush2.msra.mxu0 0.0
        %3723 = vmatprep.subr.mxu0 0.0
        %3724 = vmatpush2.msra.mxu0 0.0
        %3725 = vmatprep.subr.mxu0 0.0
        %3726 = vmatpush2.msra.mxu0 0.0
        %3727 = vmatprep.subr.mxu0 0.0
        %3728 = vmatpush2.msra.mxu0 0.0
        %3729 = vmatprep.subr.mxu0 0.0
        %3730 = vmatpush2.msra.mxu0 0.0
        %3731 = vmatprep.subr.mxu0 0.0
        %3732 = vmatpush2.msra.mxu0 0.0
        %3733 = vmatprep.subr.mxu0 0.0
        %3734 = vmatpush2.msra.mxu0 0.0
        %3735 = vmatprep.subr.mxu0 0.0
        %3736 = vmatpush2.msra.mxu0 0.0
        %3737 = vmatprep.subr.mxu0 0.0
        %3738 = vmatpush2.msra.mxu0 0.0
        %3739 = vmatprep.subr.mxu0 0.0
        %3740 = vmatpush2.msra.mxu0 0.0
        %3741 = vmatprep.subr.mxu0 0.0
        %3742 = vmatpush2.msra.mxu0 0.0
        %3743 = vmatprep.mubr.f32.mxu0 0.0
        %3744 = vmatmul.mubr.f32.gmra.mxu0 %v3677
        %v3745 = vpop.f32.mrf.mxu0
        %v3746 = vadd.f32 %v3675, %v3745
        %v3747 = vpop.f32.mrf.mxu0
        %3748 = vdwg.mxu0
        %v3749 = vxor.u32 %v3746, 2147483648
        %v3750 = vmul.f32 %v3749, 1.442695
        %v3751 = vpow.pop %v3750
        %v3752 = vadd.f32 %v3751, 1.0
        %v3753 = vrcp.pop %v3752
        %v3754 = vmul.f32 1.0, %v3753
        %v3755 = vmul.f32 %v3746, %v3754
        %v3756 = vld [vmem:[%s9] sm:$0xff]
        %v3757 = vld [vmem:[%s9 + $0x8] sm:$0xff]
        %v3758 = vld [vmem:[%s10] sm:$0x1]
        %v3760 = vsel %vm1083, %v3755, 0
        %3762 = vmatprep.subr.mxu0 0.0
        %3763 = vmatpush1.msra.mxu0 0.0
        %3764 = vmatprep.subr.mxu0 0.0
        %3765 = vmatpush1.msra.mxu0 0.0
        %3766 = vmatprep.subr.mxu0 0.0
        %3767 = vmatpush1.msra.mxu0 0.0
        %3768 = vmatprep.subr.mxu0 0.0
        %3769 = vmatpush1.msra.mxu0 0.0
        %3770 = vmatprep.subr.mxu0 0.0
        %3771 = vmatpush1.msra.mxu0 0.0
        %3772 = vmatprep.subr.mxu0 0.0
        %3773 = vmatpush1.msra.mxu0 0.0
        %3774 = vmatprep.subr.mxu0 0.0
        %3775 = vmatpush1.msra.mxu0 0.0
        %3776 = vmatprep.subr.mxu0 0.0
        %3777 = vmatpush1.msra.mxu0 0.0
        %3778 = vmatprep.subr.mxu0 0.0
        %3779 = vmatpush1.msra.mxu0 0.0
        %3780 = vmatprep.subr.mxu0 0.0
        %3781 = vmatpush1.msra.mxu0 0.0
        %3782 = vmatprep.subr.mxu0 0.0
        %3783 = vmatpush1.msra.mxu0 0.0
        %3784 = vmatprep.subr.mxu0 0.0
        %3785 = vmatpush1.msra.mxu0 0.0
        %3786 = vmatprep.subr.mxu0 0.0
        %3787 = vmatpush1.msra.mxu0 0.0
        %3788 = vmatprep.subr.mxu0 0.0
        %3789 = vmatpush1.msra.mxu0 0.0
        %3790 = vmatprep.subr.mxu0 0.0
        %3791 = vmatpush1.msra.mxu0 %v3757
        %3792 = vmatprep.subr.mxu0 0.0
        %3793 = vmatpush1.msra.mxu0 %v3756
        %3794 = vmatprep.subr.mxu0 0.0
        %3795 = vmatpush2.msra.mxu0 0.0
        %3796 = vmatprep.subr.mxu0 0.0
        %3797 = vmatpush2.msra.mxu0 0.0
        %3798 = vmatprep.subr.mxu0 0.0
        %3799 = vmatpush2.msra.mxu0 0.0
        %3800 = vmatprep.subr.mxu0 0.0
        %3801 = vmatpush2.msra.mxu0 0.0
        %3802 = vmatprep.subr.mxu0 0.0
        %3803 = vmatpush2.msra.mxu0 0.0
        %3804 = vmatprep.subr.mxu0 0.0
        %3805 = vmatpush2.msra.mxu0 0.0
        %3806 = vmatprep.subr.mxu0 0.0
        %3807 = vmatpush2.msra.mxu0 0.0
        %3808 = vmatprep.subr.mxu0 0.0
        %3809 = vmatpush2.msra.mxu0 0.0
        %3810 = vmatprep.subr.mxu0 0.0
        %3811 = vmatpush2.msra.mxu0 0.0
        %3812 = vmatprep.subr.mxu0 0.0
        %3813 = vmatpush2.msra.mxu0 0.0
        %3814 = vmatprep.subr.mxu0 0.0
        %3815 = vmatpush2.msra.mxu0 0.0
        %3816 = vmatprep.subr.mxu0 0.0
        %3817 = vmatpush2.msra.mxu0 0.0
        %3818 = vmatprep.subr.mxu0 0.0
        %3819 = vmatpush2.msra.mxu0 0.0
        %3820 = vmatprep.subr.mxu0 0.0
        %3821 = vmatpush2.msra.mxu0 0.0
        %3822 = vmatprep.subr.mxu0 0.0
        %3823 = vmatpush2.msra.mxu0 0.0
        %3824 = vmatprep.subr.mxu0 0.0
        %3825 = vmatpush2.msra.mxu0 0.0
        %3826 = vmatprep.mubr.f32.mxu0 0.0
        %3827 = vmatmul.mubr.f32.gmra.mxu0 %v3760
        %v3828 = vpop.f32.mrf.mxu0
        %v3829 = vadd.f32 %v3758, %v3828
        %v3830 = vpop.f32.mrf.mxu0
        %3831 = vdwg.mxu0
        %v3832 = vxor.u32 %v3829, 2147483648
        %v3833 = vmul.f32 %v3832, 1.442695
        %v3834 = vpow.pop %v3833
        %v3835 = vadd.f32 %v3834, 1.0
        %v3836 = vrcp.pop %v3835
        %v3837 = vmul.f32 1.0, %v3836
        %v3838 = vlaneseq
        %v3839 = vshrl.u32 %v3838, 7
        %v3840 = vsub.s32 0, %v3839
        %v3841 = vrot.slane %v3837, %v3840
        %v3842 = vmul.f32 %v3564, %v3841
        %v3843 = vmul.f32 %v3565, %v3841
        %v3844 = vmul.f32 %v3566, %v3841
        %v3845 = vmul.f32 %v3567, %v3841
        %v3846 = vmul.f32 %v3568, %v3841
        %v3847 = vmul.f32 %v3569, %v3841
        %v3848 = vmul.f32 %v3570, %v3841
        %v3849 = vmul.f32 %v3571, %v3841
        %v3850 = vmul.f32 %v3572, %v3841
        %v3851 = vmul.f32 %v3573, %v3841
        %v3852 = vmul.f32 %v3574, %v3841
        %v3853 = vmul.f32 %v3575, %v3841
        %v3854 = vmul.f32 %v3576, %v3841
        %v3855 = vmul.f32 %v3577, %v3841
        %v3856 = vmul.f32 %v3578, %v3841
        %v3857 = vmul.f32 %v3579, %v3841
        %v3858 = vmul.f32 %v3580, %v3841
        %v3859 = vmul.f32 %v3581, %v3841
        %v3860 = vmul.f32 %v3582, %v3841
        %v3861 = vmul.f32 %v3583, %v3841
        %v3862 = vmul.f32 %v3584, %v3841
        %v3863 = vmul.f32 %v3585, %v3841
        %v3864 = vmul.f32 %v3586, %v3841
        %v3865 = vmul.f32 %v3587, %v3841
        %v3866 = vmul.f32 %v3588, %v3841
        %v3867 = vmul.f32 %v3589, %v3841
        %v3868 = vmul.f32 %v3590, %v3841
        %v3869 = vmul.f32 %v3591, %v3841
        %v3870 = vmul.f32 %v3592, %v3841
        %v3871 = vmul.f32 %v3593, %v3841
        %v3872 = vmul.f32 %v3594, %v3841
        %v3873 = vmul.f32 %v3595, %v3841
        %v3874 = vpack.c.bf16 %v3843, %v3842
        %v3875 = vpack.c.bf16 %v3845, %v3844
        %v3876 = vpack.c.bf16 %v3847, %v3846
        %v3877 = vpack.c.bf16 %v3849, %v3848
        %v3878 = vpack.c.bf16 %v3851, %v3850
        %v3879 = vpack.c.bf16 %v3853, %v3852
        %v3880 = vpack.c.bf16 %v3855, %v3854
        %v3881 = vpack.c.bf16 %v3857, %v3856
        %v3882 = vpack.c.bf16 %v3859, %v3858
        %v3883 = vpack.c.bf16 %v3861, %v3860
        %v3884 = vpack.c.bf16 %v3863, %v3862
        %v3885 = vpack.c.bf16 %v3865, %v3864
        %v3886 = vpack.c.bf16 %v3867, %v3866
        %v3887 = vpack.c.bf16 %v3869, %v3868
        %v3888 = vpack.c.bf16 %v3871, %v3870
        %v3889 = vpack.c.bf16 %v3873, %v3872
        %v3890 = vld [vmem:[%s11] sm:$0xf]
        %v3891 = vld [vmem:[%s11 + $0x4] sm:$0xf]
        %v3892 = vld [vmem:[%s11 + $0x8] sm:$0xf]
        %v3893 = vld [vmem:[%s11 + $0xc] sm:$0xf]
        %v3894 = vld [vmem:[%s11 + $0x10] sm:$0xf]
        %v3895 = vld [vmem:[%s11 + $0x14] sm:$0xf]
        %v3896 = vld [vmem:[%s11 + $0x18] sm:$0xf]
        %v3897 = vld [vmem:[%s11 + $0x1c] sm:$0xf]
        %v3898 = vld [vmem:[%s12] sm:$0x1]
        %v3900 = vlaneseq
        %v3901 = vshrl.u32 %v3900, 7
        %v3902 = vsub.s32 0, %v3901
        %v3903 = vrot.slane %v3898, %v3902
        %v3913 = vunpack.c.l.b16 %v3890
        %v3914 = vunpack.c.l.b16 %v3891
        %v3915 = vunpack.c.l.b16 %v3892
        %v3916 = vunpack.c.l.b16 %v3893
        %v3917 = vunpack.c.l.b16 %v3894
        %v3918 = vunpack.c.l.b16 %v3895
        %v3919 = vunpack.c.l.b16 %v3896
        %v3920 = vunpack.c.l.b16 %v3897
        %v3921 = vpack.c.b16 %v3914, %v3913
        %v3922 = vpack.c.b16 %v3916, %v3915
        %v3923 = vpack.c.b16 %v3918, %v3917
        %v3924 = vpack.c.b16 %v3920, %v3919
        %v3930 = vsel %vm1517, %v3874, 0
        %v3933 = vsel %vm1517, %v3875, 0
        %v3936 = vsel %vm1517, %v3876, 0
        %v3939 = vsel %vm1517, %v3877, 0
        %v3942 = vsel %vm1517, %v3878, 0
        %v3945 = vsel %vm1517, %v3879, 0
        %v3948 = vsel %vm1517, %v3880, 0
        %v3951 = vsel %vm1517, %v3881, 0
        %v3954 = vsel %vm1517, %v3882, 0
        %v3957 = vsel %vm1517, %v3883, 0
        %v3960 = vsel %vm1517, %v3884, 0
        %v3963 = vsel %vm1517, %v3885, 0
        %v3966 = vsel %vm1517, %v3886, 0
        %v3969 = vsel %vm1517, %v3887, 0
        %v3972 = vsel %vm1517, %v3888, 0
        %v3975 = vsel %vm1517, %v3889, 0
        %3977 = vmatprep.subr.bf16.mxu0 0
        %3978 = vmatpush1.bf16.msra.mxu0 0
        %3979 = vmatprep.subr.bf16.mxu0 0
        %3980 = vmatpush1.bf16.msra.mxu0 0
        %3981 = vmatprep.subr.bf16.mxu0 0
        %3982 = vmatpush1.bf16.msra.mxu0 0
        %3983 = vmatprep.subr.bf16.mxu0 0
        %3984 = vmatpush1.bf16.msra.mxu0 0
        %3985 = vmatprep.subr.bf16.mxu0 0
        %3986 = vmatpush1.bf16.msra.mxu0 %v3924
        %3987 = vmatprep.subr.bf16.mxu0 0
        %3988 = vmatpush1.bf16.msra.mxu0 %v3923
        %3989 = vmatprep.subr.bf16.mxu0 0
        %3990 = vmatpush1.bf16.msra.mxu0 %v3922
        %3991 = vmatprep.subr.bf16.mxu0 0
        %3992 = vmatpush1.bf16.msra.mxu0 %v3921
        %3993 = vmatprep.subr.bf16.mxu0 0
        %3994 = vmatpush2.bf16.msra.mxu0 0
        %3995 = vmatprep.subr.bf16.mxu0 0
        %3996 = vmatpush2.bf16.msra.mxu0 0
        %3997 = vmatprep.subr.bf16.mxu0 0
        %3998 = vmatpush2.bf16.msra.mxu0 0
        %3999 = vmatprep.subr.bf16.mxu0 0
        %4000 = vmatpush2.bf16.msra.mxu0 0
        %4001 = vmatprep.subr.bf16.mxu0 0
        %4002 = vmatpush2.bf16.msra.mxu0 0
        %4003 = vmatprep.subr.bf16.mxu0 0
        %4004 = vmatpush2.bf16.msra.mxu0 0
        %4005 = vmatprep.subr.bf16.mxu0 0
        %4006 = vmatpush2.bf16.msra.mxu0 0
        %4007 = vmatprep.subr.bf16.mxu0 0
        %4008 = vmatpush2.bf16.msra.mxu0 0
        %4009 = vmatprep.mubr.bf16.mxu0 0
        %4010 = vmatmul.mubr.bf16.gmra.mxu0 %v3930
        %v4011 = vpop.f32.mrf.mxu0
        %v4012 = vadd.f32 %v3903, %v4011
        %v4013 = vpop.f32.mrf.mxu0
        %v4014 = vpop.f32.mrf.mxu0
        %v4015 = vadd.f32 %v3903, %v4014
        %v4016 = vpop.f32.mrf.mxu0
        %4017 = vmatprep.mubr.bf16.mxu0 0
        %4018 = vmatmul.mubr.bf16.gmra.mxu0 %v3933
        %v4019 = vpop.f32.mrf.mxu0
        %v4020 = vadd.f32 %v3903, %v4019
        %v4021 = vpop.f32.mrf.mxu0
        %v4022 = vpop.f32.mrf.mxu0
        %v4023 = vadd.f32 %v3903, %v4022
        %v4024 = vpop.f32.mrf.mxu0
        %4025 = vmatprep.mubr.bf16.mxu0 0
        %4026 = vmatmul.mubr.bf16.gmra.mxu0 %v3936
        %v4027 = vpop.f32.mrf.mxu0
        %v4028 = vadd.f32 %v3903, %v4027
        %v4029 = vpop.f32.mrf.mxu0
        %v4030 = vpop.f32.mrf.mxu0
        %v4031 = vadd.f32 %v3903, %v4030
        %v4032 = vpop.f32.mrf.mxu0
        %4033 = vmatprep.mubr.bf16.mxu0 0
        %4034 = vmatmul.mubr.bf16.gmra.mxu0 %v3939
        %v4035 = vpop.f32.mrf.mxu0
        %v4036 = vadd.f32 %v3903, %v4035
        %v4037 = vpop.f32.mrf.mxu0
        %v4038 = vpop.f32.mrf.mxu0
        %v4039 = vadd.f32 %v3903, %v4038
        %v4040 = vpop.f32.mrf.mxu0
        %4041 = vmatprep.mubr.bf16.mxu0 0
        %4042 = vmatmul.mubr.bf16.gmra.mxu0 %v3942
        %v4043 = vpop.f32.mrf.mxu0
        %v4044 = vadd.f32 %v3903, %v4043
        %v4045 = vpop.f32.mrf.mxu0
        %v4046 = vpop.f32.mrf.mxu0
        %v4047 = vadd.f32 %v3903, %v4046
        %v4048 = vpop.f32.mrf.mxu0
        %4049 = vmatprep.mubr.bf16.mxu0 0
        %4050 = vmatmul.mubr.bf16.gmra.mxu0 %v3945
        %v4051 = vpop.f32.mrf.mxu0
        %v4052 = vadd.f32 %v3903, %v4051
        %v4053 = vpop.f32.mrf.mxu0
        %v4054 = vpop.f32.mrf.mxu0
        %v4055 = vadd.f32 %v3903, %v4054
        %v4056 = vpop.f32.mrf.mxu0
        %4057 = vmatprep.mubr.bf16.mxu0 0
        %4058 = vmatmul.mubr.bf16.gmra.mxu0 %v3948
        %v4059 = vpop.f32.mrf.mxu0
        %v4060 = vadd.f32 %v3903, %v4059
        %v4061 = vpop.f32.mrf.mxu0
        %v4062 = vpop.f32.mrf.mxu0
        %v4063 = vadd.f32 %v3903, %v4062
        %v4064 = vpop.f32.mrf.mxu0
        %4065 = vmatprep.mubr.bf16.mxu0 0
        %4066 = vmatmul.mubr.bf16.gmra.mxu0 %v3951
        %v4067 = vpop.f32.mrf.mxu0
        %v4068 = vadd.f32 %v3903, %v4067
        %v4069 = vpop.f32.mrf.mxu0
        %v4070 = vpop.f32.mrf.mxu0
        %v4071 = vadd.f32 %v3903, %v4070
        %v4072 = vpop.f32.mrf.mxu0
        %4073 = vmatprep.mubr.bf16.mxu0 0
        %4074 = vmatmul.mubr.bf16.gmra.mxu0 %v3954
        %v4075 = vpop.f32.mrf.mxu0
        %v4076 = vadd.f32 %v3903, %v4075
        %v4077 = vpop.f32.mrf.mxu0
        %v4078 = vpop.f32.mrf.mxu0
        %v4079 = vadd.f32 %v3903, %v4078
        %v4080 = vpop.f32.mrf.mxu0
        %4081 = vmatprep.mubr.bf16.mxu0 0
        %4082 = vmatmul.mubr.bf16.gmra.mxu0 %v3957
        %v4083 = vpop.f32.mrf.mxu0
        %v4084 = vadd.f32 %v3903, %v4083
        %v4085 = vpop.f32.mrf.mxu0
        %v4086 = vpop.f32.mrf.mxu0
        %v4087 = vadd.f32 %v3903, %v4086
        %v4088 = vpop.f32.mrf.mxu0
        %4089 = vmatprep.mubr.bf16.mxu0 0
        %4090 = vmatmul.mubr.bf16.gmra.mxu0 %v3960
        %v4091 = vpop.f32.mrf.mxu0
        %v4092 = vadd.f32 %v3903, %v4091
        %v4093 = vpop.f32.mrf.mxu0
        %v4094 = vpop.f32.mrf.mxu0
        %v4095 = vadd.f32 %v3903, %v4094
        %v4096 = vpop.f32.mrf.mxu0
        %4097 = vmatprep.mubr.bf16.mxu0 0
        %4098 = vmatmul.mubr.bf16.gmra.mxu0 %v3963
        %v4099 = vpop.f32.mrf.mxu0
        %v4100 = vadd.f32 %v3903, %v4099
        %v4101 = vpop.f32.mrf.mxu0
        %v4102 = vpop.f32.mrf.mxu0
        %v4103 = vadd.f32 %v3903, %v4102
        %v4104 = vpop.f32.mrf.mxu0
        %4105 = vmatprep.mubr.bf16.mxu0 0
        %4106 = vmatmul.mubr.bf16.gmra.mxu0 %v3966
        %v4107 = vpop.f32.mrf.mxu0
        %v4108 = vadd.f32 %v3903, %v4107
        %v4109 = vpop.f32.mrf.mxu0
        %v4110 = vpop.f32.mrf.mxu0
        %v4111 = vadd.f32 %v3903, %v4110
        %v4112 = vpop.f32.mrf.mxu0
        %4113 = vmatprep.mubr.bf16.mxu0 0
        %4114 = vmatmul.mubr.bf16.gmra.mxu0 %v3969
        %v4115 = vpop.f32.mrf.mxu0
        %v4116 = vadd.f32 %v3903, %v4115
        %v4117 = vpop.f32.mrf.mxu0
        %v4118 = vpop.f32.mrf.mxu0
        %v4119 = vadd.f32 %v3903, %v4118
        %v4120 = vpop.f32.mrf.mxu0
        %4121 = vmatprep.mubr.bf16.mxu0 0
        %4122 = vmatmul.mubr.bf16.gmra.mxu0 %v3972
        %v4123 = vpop.f32.mrf.mxu0
        %v4124 = vadd.f32 %v3903, %v4123
        %v4125 = vpop.f32.mrf.mxu0
        %v4126 = vpop.f32.mrf.mxu0
        %v4127 = vadd.f32 %v3903, %v4126
        %v4128 = vpop.f32.mrf.mxu0
        %4129 = vmatprep.mubr.bf16.mxu0 0
        %4130 = vmatmul.mubr.bf16.gmra.mxu0 %v3975
        %v4131 = vpop.f32.mrf.mxu0
        %v4132 = vadd.f32 %v3903, %v4131
        %v4133 = vpop.f32.mrf.mxu0
        %v4134 = vpop.f32.mrf.mxu0
        %v4135 = vadd.f32 %v3903, %v4134
        %v4136 = vpop.f32.mrf.mxu0
        %4137 = vdwg.mxu0
        %v4138 = vxor.u32 %v4012, 2147483648
        %v4139 = vxor.u32 %v4015, 2147483648
        %v4140 = vxor.u32 %v4020, 2147483648
        %v4141 = vxor.u32 %v4023, 2147483648
        %v4142 = vxor.u32 %v4028, 2147483648
        %v4143 = vxor.u32 %v4031, 2147483648
        %v4144 = vxor.u32 %v4036, 2147483648
        %v4145 = vxor.u32 %v4039, 2147483648
        %v4146 = vxor.u32 %v4044, 2147483648
        %v4147 = vxor.u32 %v4047, 2147483648
        %v4148 = vxor.u32 %v4052, 2147483648
        %v4149 = vxor.u32 %v4055, 2147483648
        %v4150 = vxor.u32 %v4060, 2147483648
        %v4151 = vxor.u32 %v4063, 2147483648
        %v4152 = vxor.u32 %v4068, 2147483648
        %v4153 = vxor.u32 %v4071, 2147483648
        %v4154 = vxor.u32 %v4076, 2147483648
        %v4155 = vxor.u32 %v4079, 2147483648
        %v4156 = vxor.u32 %v4084, 2147483648
        %v4157 = vxor.u32 %v4087, 2147483648
        %v4158 = vxor.u32 %v4092, 2147483648
        %v4159 = vxor.u32 %v4095, 2147483648
        %v4160 = vxor.u32 %v4100, 2147483648
        %v4161 = vxor.u32 %v4103, 2147483648
        %v4162 = vxor.u32 %v4108, 2147483648
        %v4163 = vxor.u32 %v4111, 2147483648
        %v4164 = vxor.u32 %v4116, 2147483648
        %v4165 = vxor.u32 %v4119, 2147483648
        %v4166 = vxor.u32 %v4124, 2147483648
        %v4167 = vxor.u32 %v4127, 2147483648
        %v4168 = vxor.u32 %v4132, 2147483648
        %v4169 = vxor.u32 %v4135, 2147483648
        %v4170 = vmul.f32 %v4138, 1.442695
        %v4171 = vpow.pop %v4170
        %v4172 = vmul.f32 %v4139, 1.442695
        %v4173 = vpow.pop %v4172
        %v4174 = vmul.f32 %v4140, 1.442695
        %v4175 = vpow.pop %v4174
        %v4176 = vmul.f32 %v4141, 1.442695
        %v4177 = vpow.pop %v4176
        %v4178 = vmul.f32 %v4142, 1.442695
        %v4179 = vpow.pop %v4178
        %v4180 = vmul.f32 %v4143, 1.442695
        %v4181 = vpow.pop %v4180
        %v4182 = vmul.f32 %v4144, 1.442695
        %v4183 = vpow.pop %v4182
        %v4184 = vmul.f32 %v4145, 1.442695
        %v4185 = vpow.pop %v4184
        %v4186 = vmul.f32 %v4146, 1.442695
        %v4187 = vpow.pop %v4186
        %v4188 = vmul.f32 %v4147, 1.442695
        %v4189 = vpow.pop %v4188
        %v4190 = vmul.f32 %v4148, 1.442695
        %v4191 = vpow.pop %v4190
        %v4192 = vmul.f32 %v4149, 1.442695
        %v4193 = vpow.pop %v4192
        %v4194 = vmul.f32 %v4150, 1.442695
        %v4195 = vpow.pop %v4194
        %v4196 = vmul.f32 %v4151, 1.442695
        %v4197 = vpow.pop %v4196
        %v4198 = vmul.f32 %v4152, 1.442695
        %v4199 = vpow.pop %v4198
        %v4200 = vmul.f32 %v4153, 1.442695
        %v4201 = vpow.pop %v4200
        %v4202 = vmul.f32 %v4154, 1.442695
        %v4203 = vpow.pop %v4202
        %v4204 = vmul.f32 %v4155, 1.442695
        %v4205 = vpow.pop %v4204
        %v4206 = vmul.f32 %v4156, 1.442695
        %v4207 = vpow.pop %v4206
        %v4208 = vmul.f32 %v4157, 1.442695
        %v4209 = vpow.pop %v4208
        %v4210 = vmul.f32 %v4158, 1.442695
        %v4211 = vpow.pop %v4210
        %v4212 = vmul.f32 %v4159, 1.442695
        %v4213 = vpow.pop %v4212
        %v4214 = vmul.f32 %v4160, 1.442695
        %v4215 = vpow.pop %v4214
        %v4216 = vmul.f32 %v4161, 1.442695
        %v4217 = vpow.pop %v4216
        %v4218 = vmul.f32 %v4162, 1.442695
        %v4219 = vpow.pop %v4218
        %v4220 = vmul.f32 %v4163, 1.442695
        %v4221 = vpow.pop %v4220
        %v4222 = vmul.f32 %v4164, 1.442695
        %v4223 = vpow.pop %v4222
        %v4224 = vmul.f32 %v4165, 1.442695
        %v4225 = vpow.pop %v4224
        %v4226 = vmul.f32 %v4166, 1.442695
        %v4227 = vpow.pop %v4226
        %v4228 = vmul.f32 %v4167, 1.442695
        %v4229 = vpow.pop %v4228
        %v4230 = vmul.f32 %v4168, 1.442695
        %v4231 = vpow.pop %v4230
        %v4232 = vmul.f32 %v4169, 1.442695
        %v4233 = vpow.pop %v4232
        %v4234 = vadd.f32 %v4171, 1.0
        %v4235 = vadd.f32 %v4173, 1.0
        %v4236 = vadd.f32 %v4175, 1.0
        %v4237 = vadd.f32 %v4177, 1.0
        %v4238 = vadd.f32 %v4179, 1.0
        %v4239 = vadd.f32 %v4181, 1.0
        %v4240 = vadd.f32 %v4183, 1.0
        %v4241 = vadd.f32 %v4185, 1.0
        %v4242 = vadd.f32 %v4187, 1.0
        %v4243 = vadd.f32 %v4189, 1.0
        %v4244 = vadd.f32 %v4191, 1.0
        %v4245 = vadd.f32 %v4193, 1.0
        %v4246 = vadd.f32 %v4195, 1.0
        %v4247 = vadd.f32 %v4197, 1.0
        %v4248 = vadd.f32 %v4199, 1.0
        %v4249 = vadd.f32 %v4201, 1.0
        %v4250 = vadd.f32 %v4203, 1.0
        %v4251 = vadd.f32 %v4205, 1.0
        %v4252 = vadd.f32 %v4207, 1.0
        %v4253 = vadd.f32 %v4209, 1.0
        %v4254 = vadd.f32 %v4211, 1.0
        %v4255 = vadd.f32 %v4213, 1.0
        %v4256 = vadd.f32 %v4215, 1.0
        %v4257 = vadd.f32 %v4217, 1.0
        %v4258 = vadd.f32 %v4219, 1.0
        %v4259 = vadd.f32 %v4221, 1.0
        %v4260 = vadd.f32 %v4223, 1.0
        %v4261 = vadd.f32 %v4225, 1.0
        %v4262 = vadd.f32 %v4227, 1.0
        %v4263 = vadd.f32 %v4229, 1.0
        %v4264 = vadd.f32 %v4231, 1.0
        %v4265 = vadd.f32 %v4233, 1.0
        %v4266 = vrcp.pop %v4234
        %v4267 = vmul.f32 1.0, %v4266
        %v4268 = vrcp.pop %v4235
        %v4269 = vmul.f32 1.0, %v4268
        %v4270 = vrcp.pop %v4236
        %v4271 = vmul.f32 1.0, %v4270
        %v4272 = vrcp.pop %v4237
        %v4273 = vmul.f32 1.0, %v4272
        %v4274 = vrcp.pop %v4238
        %v4275 = vmul.f32 1.0, %v4274
        %v4276 = vrcp.pop %v4239
        %v4277 = vmul.f32 1.0, %v4276
        %v4278 = vrcp.pop %v4240
        %v4279 = vmul.f32 1.0, %v4278
        %v4280 = vrcp.pop %v4241
        %v4281 = vmul.f32 1.0, %v4280
        %v4282 = vrcp.pop %v4242
        %v4283 = vmul.f32 1.0, %v4282
        %v4284 = vrcp.pop %v4243
        %v4285 = vmul.f32 1.0, %v4284
        %v4286 = vrcp.pop %v4244
        %v4287 = vmul.f32 1.0, %v4286
        %v4288 = vrcp.pop %v4245
        %v4289 = vmul.f32 1.0, %v4288
        %v4290 = vrcp.pop %v4246
        %v4291 = vmul.f32 1.0, %v4290
        %v4292 = vrcp.pop %v4247
        %v4293 = vmul.f32 1.0, %v4292
        %v4294 = vrcp.pop %v4248
        %v4295 = vmul.f32 1.0, %v4294
        %v4296 = vrcp.pop %v4249
        %v4297 = vmul.f32 1.0, %v4296
        %v4298 = vrcp.pop %v4250
        %v4299 = vmul.f32 1.0, %v4298
        %v4300 = vrcp.pop %v4251
        %v4301 = vmul.f32 1.0, %v4300
        %v4302 = vrcp.pop %v4252
        %v4303 = vmul.f32 1.0, %v4302
        %v4304 = vrcp.pop %v4253
        %v4305 = vmul.f32 1.0, %v4304
        %v4306 = vrcp.pop %v4254
        %v4307 = vmul.f32 1.0, %v4306
        %v4308 = vrcp.pop %v4255
        %v4309 = vmul.f32 1.0, %v4308
        %v4310 = vrcp.pop %v4256
        %v4311 = vmul.f32 1.0, %v4310
        %v4312 = vrcp.pop %v4257
        %v4313 = vmul.f32 1.0, %v4312
        %v4314 = vrcp.pop %v4258
        %v4315 = vmul.f32 1.0, %v4314
        %v4316 = vrcp.pop %v4259
        %v4317 = vmul.f32 1.0, %v4316
        %v4318 = vrcp.pop %v4260
        %v4319 = vmul.f32 1.0, %v4318
        %v4320 = vrcp.pop %v4261
        %v4321 = vmul.f32 1.0, %v4320
        %v4322 = vrcp.pop %v4262
        %v4323 = vmul.f32 1.0, %v4322
        %v4324 = vrcp.pop %v4263
        %v4325 = vmul.f32 1.0, %v4324
        %v4326 = vrcp.pop %v4264
        %v4327 = vmul.f32 1.0, %v4326
        %v4328 = vrcp.pop %v4265
        %v4329 = vmul.f32 1.0, %v4328
        %v4330 = vmul.f32 %v4012, %v4267
        %v4331 = vmul.f32 %v4015, %v4269
        %v4332 = vmul.f32 %v4020, %v4271
        %v4333 = vmul.f32 %v4023, %v4273
        %v4334 = vmul.f32 %v4028, %v4275
        %v4335 = vmul.f32 %v4031, %v4277
        %v4336 = vmul.f32 %v4036, %v4279
        %v4337 = vmul.f32 %v4039, %v4281
        %v4338 = vmul.f32 %v4044, %v4283
        %v4339 = vmul.f32 %v4047, %v4285
        %v4340 = vmul.f32 %v4052, %v4287
        %v4341 = vmul.f32 %v4055, %v4289
        %v4342 = vmul.f32 %v4060, %v4291
        %v4343 = vmul.f32 %v4063, %v4293
        %v4344 = vmul.f32 %v4068, %v4295
        %v4345 = vmul.f32 %v4071, %v4297
        %v4346 = vmul.f32 %v4076, %v4299
        %v4347 = vmul.f32 %v4079, %v4301
        %v4348 = vmul.f32 %v4084, %v4303
        %v4349 = vmul.f32 %v4087, %v4305
        %v4350 = vmul.f32 %v4092, %v4307
        %v4351 = vmul.f32 %v4095, %v4309
        %v4352 = vmul.f32 %v4100, %v4311
        %v4353 = vmul.f32 %v4103, %v4313
        %v4354 = vmul.f32 %v4108, %v4315
        %v4355 = vmul.f32 %v4111, %v4317
        %v4356 = vmul.f32 %v4116, %v4319
        %v4357 = vmul.f32 %v4119, %v4321
        %v4358 = vmul.f32 %v4124, %v4323
        %v4359 = vmul.f32 %v4127, %v4325
        %v4360 = vmul.f32 %v4132, %v4327
        %v4361 = vmul.f32 %v4135, %v4329
        %v4362 = vadd.f32 %v4330, %v4331
        %v4363 = vadd.f32 %v4362, %v4332
        %v4364 = vadd.f32 %v4363, %v4333
        %v4365 = vadd.f32 %v4364, %v4334
        %v4366 = vadd.f32 %v4365, %v4335
        %v4367 = vadd.f32 %v4366, %v4336
        %v4368 = vadd.f32 %v4367, %v4337
        %v4369 = vadd.f32 %v4368, %v4338
        %v4370 = vadd.f32 %v4369, %v4339
        %v4371 = vadd.f32 %v4370, %v4340
        %v4372 = vadd.f32 %v4371, %v4341
        %v4373 = vadd.f32 %v4372, %v4342
        %v4374 = vadd.f32 %v4373, %v4343
        %v4375 = vadd.f32 %v4374, %v4344
        %v4376 = vadd.f32 %v4375, %v4345
        %v4377 = vadd.f32 %v4376, %v4346
        %v4378 = vadd.f32 %v4377, %v4347
        %v4379 = vadd.f32 %v4378, %v4348
        %v4380 = vadd.f32 %v4379, %v4349
        %v4381 = vadd.f32 %v4380, %v4350
        %v4382 = vadd.f32 %v4381, %v4351
        %v4383 = vadd.f32 %v4382, %v4352
        %v4384 = vadd.f32 %v4383, %v4353
        %v4385 = vadd.f32 %v4384, %v4354
        %v4386 = vadd.f32 %v4385, %v4355
        %v4387 = vadd.f32 %v4386, %v4356
        %v4388 = vadd.f32 %v4387, %v4357
        %v4389 = vadd.f32 %v4388, %v4358
        %v4390 = vadd.f32 %v4389, %v4359
        %v4391 = vadd.f32 %v4390, %v4360
        %v4392 = vadd.f32 %v4391, %v4361
        %v4393 = vrot.slane %v4392, 4
        %v4394 = vadd.f32 %v4392, %v4393
        %v4395 = vrot.slane %v4394, 2
        %v4396 = vadd.f32 %v4394, %v4395
        %v4397 = vrot.slane %v4396, 1
        %v4398 = vadd.f32 %v4396, %v4397
        %v4399 = vmul.f32 %v4398, %v3665
        %v4400 = vpack.c.bf16 %v4399, %v4399
        %v4401 = vld [vmem:[%s13] sm:$0xff]
        %v4402 = vld [vmem:[%s13 + $0x8] sm:$0xff]
        %v4403 = vld [vmem:[%s13 + $0x10] sm:$0xff]
        %v4404 = vld [vmem:[%s13 + $0x18] sm:$0xff]
        %v4405 = vld [vmem:[%s13 + $0x20] sm:$0xff]
        %v4406 = vld [vmem:[%s13 + $0x28] sm:$0xff]
        %v4407 = vld [vmem:[%s13 + $0x30] sm:$0xff]
        %v4408 = vld [vmem:[%s13 + $0x38] sm:$0xff]
        %v4409 = vld [vmem:[%s13 + $0x40] sm:$0xff]
        %v4410 = vld [vmem:[%s13 + $0x48] sm:$0xff]
        %v4411 = vld [vmem:[%s13 + $0x50] sm:$0xff]
        %v4412 = vld [vmem:[%s13 + $0x58] sm:$0xff]
        %v4413 = vld [vmem:[%s13 + $0x60] sm:$0xff]
        %v4414 = vld [vmem:[%s13 + $0x68] sm:$0xff]
        %v4415 = vld [vmem:[%s13 + $0x70] sm:$0xff]
        %v4416 = vld [vmem:[%s13 + $0x78] sm:$0xff]
        %v4417 = vld [vmem:[%s13 + $0x80] sm:$0xff]
        %v4418 = vld [vmem:[%s13 + $0x88] sm:$0xff]
        %v4419 = vld [vmem:[%s13 + $0x90] sm:$0xff]
        %v4420 = vld [vmem:[%s13 + $0x98] sm:$0xff]
        %v4421 = vld [vmem:[%s13 + $0xa0] sm:$0xff]
        %v4422 = vld [vmem:[%s13 + $0xa8] sm:$0xff]
        %v4423 = vld [vmem:[%s13 + $0xb0] sm:$0xff]
        %v4424 = vld [vmem:[%s13 + $0xb8] sm:$0xff]
        %v4425 = vld [vmem:[%s13 + $0xc0] sm:$0xff]
        %v4426 = vld [vmem:[%s13 + $0xc8] sm:$0xff]
        %v4427 = vld [vmem:[%s13 + $0xd0] sm:$0xff]
        %v4428 = vld [vmem:[%s13 + $0xd8] sm:$0xff]
        %v4429 = vld [vmem:[%s13 + $0xe0] sm:$0xff]
        %v4430 = vld [vmem:[%s13 + $0xe8] sm:$0xff]
        %v4431 = vld [vmem:[%s13 + $0xf0] sm:$0xff]
        %v4432 = vld [vmem:[%s13 + $0xf8] sm:$0xff]
        %v4433 = vld [vmem:[%s14] sm:$0xf]
        %v4466 = vunpack.c.l.b16 %v4401
        %v4467 = vunpack.c.h.b16 %v4401
        %v4468 = vunpack.c.l.b16 %v4402
        %v4469 = vunpack.c.h.b16 %v4402
        %v4470 = vunpack.c.l.b16 %v4403
        %v4471 = vunpack.c.h.b16 %v4403
        %v4472 = vunpack.c.l.b16 %v4404
        %v4473 = vunpack.c.h.b16 %v4404
        %v4474 = vunpack.c.l.b16 %v4405
        %v4475 = vunpack.c.h.b16 %v4405
        %v4476 = vunpack.c.l.b16 %v4406
        %v4477 = vunpack.c.h.b16 %v4406
        %v4478 = vunpack.c.l.b16 %v4407
        %v4479 = vunpack.c.h.b16 %v4407
        %v4480 = vunpack.c.l.b16 %v4408
        %v4481 = vunpack.c.h.b16 %v4408
        %v4482 = vunpack.c.l.b16 %v4409
        %v4483 = vunpack.c.h.b16 %v4409
        %v4484 = vunpack.c.l.b16 %v4410
        %v4485 = vunpack.c.h.b16 %v4410
        %v4486 = vunpack.c.l.b16 %v4411
        %v4487 = vunpack.c.h.b16 %v4411
        %v4488 = vunpack.c.l.b16 %v4412
        %v4489 = vunpack.c.h.b16 %v4412
        %v4490 = vunpack.c.l.b16 %v4413
        %v4491 = vunpack.c.h.b16 %v4413
        %v4492 = vunpack.c.l.b16 %v4414
        %v4493 = vunpack.c.h.b16 %v4414
        %v4494 = vunpack.c.l.b16 %v4415
        %v4495 = vunpack.c.h.b16 %v4415
        %v4496 = vunpack.c.l.b16 %v4416
        %v4497 = vunpack.c.h.b16 %v4416
        %v4498 = vunpack.c.l.b16 %v4417
        %v4499 = vunpack.c.h.b16 %v4417
        %v4500 = vunpack.c.l.b16 %v4418
        %v4501 = vunpack.c.h.b16 %v4418
        %v4502 = vunpack.c.l.b16 %v4419
        %v4503 = vunpack.c.h.b16 %v4419
        %v4504 = vunpack.c.l.b16 %v4420
        %v4505 = vunpack.c.h.b16 %v4420
        %v4506 = vunpack.c.l.b16 %v4421
        %v4507 = vunpack.c.h.b16 %v4421
        %v4508 = vunpack.c.l.b16 %v4422
        %v4509 = vunpack.c.h.b16 %v4422
        %v4510 = vunpack.c.l.b16 %v4423
        %v4511 = vunpack.c.h.b16 %v4423
        %v4512 = vunpack.c.l.b16 %v4424
        %v4513 = vunpack.c.h.b16 %v4424
        %v4514 = vunpack.c.l.b16 %v4425
        %v4515 = vunpack.c.h.b16 %v4425
        %v4516 = vunpack.c.l.b16 %v4426
        %v4517 = vunpack.c.h.b16 %v4426
        %v4518 = vunpack.c.l.b16 %v4427
        %v4519 = vunpack.c.h.b16 %v4427
        %v4520 = vunpack.c.l.b16 %v4428
        %v4521 = vunpack.c.h.b16 %v4428
        %v4522 = vunpack.c.l.b16 %v4429
        %v4523 = vunpack.c.h.b16 %v4429
        %v4524 = vunpack.c.l.b16 %v4430
        %v4525 = vunpack.c.h.b16 %v4430
        %v4526 = vunpack.c.l.b16 %v4431
        %v4527 = vunpack.c.h.b16 %v4431
        %v4528 = vunpack.c.l.b16 %v4432
        %v4529 = vunpack.c.h.b16 %v4432
        %v4530 = vpack.c.b16 %v4470, %v4466
        %v4531 = vpack.c.b16 %v4471, %v4467
        %v4532 = vpack.c.b16 %v4472, %v4468
        %v4533 = vpack.c.b16 %v4473, %v4469
        %v4534 = vpack.c.b16 %v4478, %v4474
        %v4535 = vpack.c.b16 %v4479, %v4475
        %v4536 = vpack.c.b16 %v4480, %v4476
        %v4537 = vpack.c.b16 %v4481, %v4477
        %v4538 = vpack.c.b16 %v4486, %v4482
        %v4539 = vpack.c.b16 %v4487, %v4483
        %v4540 = vpack.c.b16 %v4488, %v4484
        %v4541 = vpack.c.b16 %v4489, %v4485
        %v4542 = vpack.c.b16 %v4494, %v4490
        %v4543 = vpack.c.b16 %v4495, %v4491
        %v4544 = vpack.c.b16 %v4496, %v4492
        %v4545 = vpack.c.b16 %v4497, %v4493
        %v4546 = vpack.c.b16 %v4502, %v4498
        %v4547 = vpack.c.b16 %v4503, %v4499
        %v4548 = vpack.c.b16 %v4504, %v4500
        %v4549 = vpack.c.b16 %v4505, %v4501
        %v4550 = vpack.c.b16 %v4510, %v4506
        %v4551 = vpack.c.b16 %v4511, %v4507
        %v4552 = vpack.c.b16 %v4512, %v4508
        %v4553 = vpack.c.b16 %v4513, %v4509
        %v4554 = vpack.c.b16 %v4518, %v4514
        %v4555 = vpack.c.b16 %v4519, %v4515
        %v4556 = vpack.c.b16 %v4520, %v4516
        %v4557 = vpack.c.b16 %v4521, %v4517
        %v4558 = vpack.c.b16 %v4526, %v4522
        %v4559 = vpack.c.b16 %v4527, %v4523
        %v4560 = vpack.c.b16 %v4528, %v4524
        %v4561 = vpack.c.b16 %v4529, %v4525
        %v4595 = vlaneseq
        %v4596 = vshrl.u32 %v4595, 7
        %v4597 = vsub.s32 0, %v4596
        %v4598 = vrot.slane %v4433, %v4597
        %v4599 = vlaneseq
        %v4600 = vshrl.u32 %v4599, 7
        %v4601 = vsub.s32 1, %v4600
        %v4602 = vrot.slane %v4433, %v4601
        %v4603 = vlaneseq
        %v4604 = vshrl.u32 %v4603, 7
        %v4605 = vsub.s32 2, %v4604
        %v4606 = vrot.slane %v4433, %v4605
        %v4607 = vlaneseq
        %v4608 = vshrl.u32 %v4607, 7
        %v4609 = vsub.s32 3, %v4608
        %v4610 = vrot.slane %v4433, %v4609
        %4615 = vmatprep.subr.bf16.mxu0 %v4559
        %4616 = vmatpush1.bf16.msra.mxu0 %v4558
        %4617 = vmatprep.subr.bf16.mxu0 %v4555
        %4618 = vmatpush1.bf16.msra.mxu0 %v4554
        %4619 = vmatprep.subr.bf16.mxu0 %v4551
        %4620 = vmatpush1.bf16.msra.mxu0 %v4550
        %4621 = vmatprep.subr.bf16.mxu0 %v4547
        %4622 = vmatpush1.bf16.msra.mxu0 %v4546
        %4623 = vmatprep.subr.bf16.mxu0 %v4543
        %4624 = vmatpush1.bf16.msra.mxu0 %v4542
        %4625 = vmatprep.subr.bf16.mxu0 %v4539
        %4626 = vmatpush1.bf16.msra.mxu0 %v4538
        %4627 = vmatprep.subr.bf16.mxu0 %v4535
        %4628 = vmatpush1.bf16.msra.mxu0 %v4534
        %4629 = vmatprep.subr.bf16.mxu0 %v4531
        %4630 = vmatpush1.bf16.msra.mxu0 %v4530
        %4631 = vmatprep.subr.bf16.mxu0 0
        %4632 = vmatpush2.bf16.msra.mxu0 0
        %4633 = vmatprep.subr.bf16.mxu0 0
        %4634 = vmatpush2.bf16.msra.mxu0 0
        %4635 = vmatprep.subr.bf16.mxu0 0
        %4636 = vmatpush2.bf16.msra.mxu0 0
        %4637 = vmatprep.subr.bf16.mxu0 0
        %4638 = vmatpush2.bf16.msra.mxu0 0
        %4639 = vmatprep.subr.bf16.mxu0 0
        %4640 = vmatpush2.bf16.msra.mxu0 0
        %4641 = vmatprep.subr.bf16.mxu0 0
        %4642 = vmatpush2.bf16.msra.mxu0 0
        %4643 = vmatprep.subr.bf16.mxu0 0
        %4644 = vmatpush2.bf16.msra.mxu0 0
        %4645 = vmatprep.subr.bf16.mxu0 0
        %4646 = vmatpush2.bf16.msra.mxu0 0
        %4647 = vmatprep.mubr.bf16.mxu0 0
        %4648 = vmatmul.mubr.bf16.gmra.mxu0 %v4400
        %v4649 = vpop.f32.mrf.mxu0
        %v4650 = vadd.f32 %v4598, %v4649
        %v4651 = vpop.f32.mrf.mxu0
        %v4652 = vadd.f32 %v4602, %v4651
        %v4653 = vpop.f32.mrf.mxu0
        %v4654 = vpop.f32.mrf.mxu0
        %4655 = vdwg.mxu0
        %4656 = vmatprep.subr.bf16.mxu0 %v4561
        %4657 = vmatpush1.bf16.msra.mxu0 %v4560
        %4658 = vmatprep.subr.bf16.mxu0 %v4557
        %4659 = vmatpush1.bf16.msra.mxu0 %v4556
        %4660 = vmatprep.subr.bf16.mxu0 %v4553
        %4661 = vmatpush1.bf16.msra.mxu0 %v4552
        %4662 = vmatprep.subr.bf16.mxu0 %v4549
        %4663 = vmatpush1.bf16.msra.mxu0 %v4548
        %4664 = vmatprep.subr.bf16.mxu0 %v4545
        %4665 = vmatpush1.bf16.msra.mxu0 %v4544
        %4666 = vmatprep.subr.bf16.mxu0 %v4541
        %4667 = vmatpush1.bf16.msra.mxu0 %v4540
        %4668 = vmatprep.subr.bf16.mxu0 %v4537
        %4669 = vmatpush1.bf16.msra.mxu0 %v4536
        %4670 = vmatprep.subr.bf16.mxu0 %v4533
        %4671 = vmatpush1.bf16.msra.mxu0 %v4532
        %4672 = vmatprep.subr.bf16.mxu0 0
        %4673 = vmatpush2.bf16.msra.mxu0 0
        %4674 = vmatprep.subr.bf16.mxu0 0
        %4675 = vmatpush2.bf16.msra.mxu0 0
        %4676 = vmatprep.subr.bf16.mxu0 0
        %4677 = vmatpush2.bf16.msra.mxu0 0
        %4678 = vmatprep.subr.bf16.mxu0 0
        %4679 = vmatpush2.bf16.msra.mxu0 0
        %4680 = vmatprep.subr.bf16.mxu0 0
        %4681 = vmatpush2.bf16.msra.mxu0 0
        %4682 = vmatprep.subr.bf16.mxu0 0
        %4683 = vmatpush2.bf16.msra.mxu0 0
        %4684 = vmatprep.subr.bf16.mxu0 0
        %4685 = vmatpush2.bf16.msra.mxu0 0
        %4686 = vmatprep.subr.bf16.mxu0 0
        %4687 = vmatpush2.bf16.msra.mxu0 0
        %4688 = vmatprep.mubr.bf16.mxu0 0
        %4689 = vmatmul.mubr.bf16.gmra.mxu0 %v4400
        %v4690 = vpop.f32.mrf.mxu0
        %v4691 = vadd.f32 %v4606, %v4690
        %v4692 = vpop.f32.mrf.mxu0
        %v4693 = vadd.f32 %v4610, %v4692
        %v4694 = vpop.f32.mrf.mxu0
        %v4695 = vpop.f32.mrf.mxu0
        %4696 = vdwg.mxu0
        %v4697 = vmax.f32 %v4650, 0.0
        %v4698 = vmax.f32 %v4652, 0.0
        %v4699 = vmax.f32 %v4691, 0.0
        %v4700 = vmax.f32 %v4693, 0.0
        %v4701 = vpack.c.bf16 %v4697, %v4697
        %v4702 = vpack.c.bf16 %v4698, %v4698
        %v4703 = vpack.c.bf16 %v4699, %v4699
        %v4704 = vpack.c.bf16 %v4700, %v4700
        %v4705 = vld [vmem:[%s15] sm:$0xf]
        %v4706 = vld [vmem:[%s15 + $0x4] sm:$0xf]
        %v4707 = vld [vmem:[%s15 + $0x8] sm:$0xf]
        %v4708 = vld [vmem:[%s15 + $0xc] sm:$0xf]
        %v4709 = vld [vmem:[%s15 + $0x10] sm:$0xf]
        %v4710 = vld [vmem:[%s15 + $0x14] sm:$0xf]
        %v4711 = vld [vmem:[%s15 + $0x18] sm:$0xf]
        %v4712 = vld [vmem:[%s15 + $0x1c] sm:$0xf]
        %v4713 = vld [vmem:[%s15 + $0x20] sm:$0xf]
        %v4714 = vld [vmem:[%s15 + $0x24] sm:$0xf]
        %v4715 = vld [vmem:[%s15 + $0x28] sm:$0xf]
        %v4716 = vld [vmem:[%s15 + $0x2c] sm:$0xf]
        %v4717 = vld [vmem:[%s15 + $0x30] sm:$0xf]
        %v4718 = vld [vmem:[%s15 + $0x34] sm:$0xf]
        %v4719 = vld [vmem:[%s15 + $0x38] sm:$0xf]
        %v4720 = vld [vmem:[%s15 + $0x3c] sm:$0xf]
        %v4721 = vld [vmem:[%s15 + $0x40] sm:$0xf]
        %v4722 = vld [vmem:[%s15 + $0x44] sm:$0xf]
        %v4723 = vld [vmem:[%s15 + $0x48] sm:$0xf]
        %v4724 = vld [vmem:[%s15 + $0x4c] sm:$0xf]
        %v4725 = vld [vmem:[%s15 + $0x50] sm:$0xf]
        %v4726 = vld [vmem:[%s15 + $0x54] sm:$0xf]
        %v4727 = vld [vmem:[%s15 + $0x58] sm:$0xf]
        %v4728 = vld [vmem:[%s15 + $0x5c] sm:$0xf]
        %v4729 = vld [vmem:[%s15 + $0x60] sm:$0xf]
        %v4730 = vld [vmem:[%s15 + $0x64] sm:$0xf]
        %v4731 = vld [vmem:[%s15 + $0x68] sm:$0xf]
        %v4732 = vld [vmem:[%s15 + $0x6c] sm:$0xf]
        %v4733 = vld [vmem:[%s15 + $0x70] sm:$0xf]
        %v4734 = vld [vmem:[%s15 + $0x74] sm:$0xf]
        %v4735 = vld [vmem:[%s15 + $0x78] sm:$0xf]
        %v4736 = vld [vmem:[%s15 + $0x7c] sm:$0xf]
        %v4737 = vld [vmem:[%s15 + $0x80] sm:$0xf]
        %v4738 = vld [vmem:[%s15 + $0x84] sm:$0xf]
        %v4739 = vld [vmem:[%s15 + $0x88] sm:$0xf]
        %v4740 = vld [vmem:[%s15 + $0x8c] sm:$0xf]
        %v4741 = vld [vmem:[%s15 + $0x90] sm:$0xf]
        %v4742 = vld [vmem:[%s15 + $0x94] sm:$0xf]
        %v4743 = vld [vmem:[%s15 + $0x98] sm:$0xf]
        %v4744 = vld [vmem:[%s15 + $0x9c] sm:$0xf]
        %v4745 = vld [vmem:[%s15 + $0xa0] sm:$0xf]
        %v4746 = vld [vmem:[%s15 + $0xa4] sm:$0xf]
        %v4747 = vld [vmem:[%s15 + $0xa8] sm:$0xf]
        %v4748 = vld [vmem:[%s15 + $0xac] sm:$0xf]
        %v4749 = vld [vmem:[%s15 + $0xb0] sm:$0xf]
        %v4750 = vld [vmem:[%s15 + $0xb4] sm:$0xf]
        %v4751 = vld [vmem:[%s15 + $0xb8] sm:$0xf]
        %v4752 = vld [vmem:[%s15 + $0xbc] sm:$0xf]
        %v4753 = vld [vmem:[%s15 + $0xc0] sm:$0xf]
        %v4754 = vld [vmem:[%s15 + $0xc4] sm:$0xf]
        %v4755 = vld [vmem:[%s15 + $0xc8] sm:$0xf]
        %v4756 = vld [vmem:[%s15 + $0xcc] sm:$0xf]
        %v4757 = vld [vmem:[%s15 + $0xd0] sm:$0xf]
        %v4758 = vld [vmem:[%s15 + $0xd4] sm:$0xf]
        %v4759 = vld [vmem:[%s15 + $0xd8] sm:$0xf]
        %v4760 = vld [vmem:[%s15 + $0xdc] sm:$0xf]
        %v4761 = vld [vmem:[%s15 + $0xe0] sm:$0xf]
        %v4762 = vld [vmem:[%s15 + $0xe4] sm:$0xf]
        %v4763 = vld [vmem:[%s15 + $0xe8] sm:$0xf]
        %v4764 = vld [vmem:[%s15 + $0xec] sm:$0xf]
        %v4765 = vld [vmem:[%s15 + $0xf0] sm:$0xf]
        %v4766 = vld [vmem:[%s15 + $0xf4] sm:$0xf]
        %v4767 = vld [vmem:[%s15 + $0xf8] sm:$0xf]
        %v4768 = vld [vmem:[%s15 + $0xfc] sm:$0xf]
        %v4769 = vld [vmem:[%s16] sm:$0x1]
        %v4834 = vunpack.c.l.b16 %v4705
        %v4835 = vunpack.c.l.b16 %v4706
        %v4836 = vunpack.c.l.b16 %v4707
        %v4837 = vunpack.c.l.b16 %v4708
        %v4838 = vunpack.c.l.b16 %v4709
        %v4839 = vunpack.c.l.b16 %v4710
        %v4840 = vunpack.c.l.b16 %v4711
        %v4841 = vunpack.c.l.b16 %v4712
        %v4842 = vunpack.c.l.b16 %v4713
        %v4843 = vunpack.c.l.b16 %v4714
        %v4844 = vunpack.c.l.b16 %v4715
        %v4845 = vunpack.c.l.b16 %v4716
        %v4846 = vunpack.c.l.b16 %v4717
        %v4847 = vunpack.c.l.b16 %v4718
        %v4848 = vunpack.c.l.b16 %v4719
        %v4849 = vunpack.c.l.b16 %v4720
        %v4850 = vunpack.c.l.b16 %v4721
        %v4851 = vunpack.c.l.b16 %v4722
        %v4852 = vunpack.c.l.b16 %v4723
        %v4853 = vunpack.c.l.b16 %v4724
        %v4854 = vunpack.c.l.b16 %v4725
        %v4855 = vunpack.c.l.b16 %v4726
        %v4856 = vunpack.c.l.b16 %v4727
        %v4857 = vunpack.c.l.b16 %v4728
        %v4858 = vunpack.c.l.b16 %v4729
        %v4859 = vunpack.c.l.b16 %v4730
        %v4860 = vunpack.c.l.b16 %v4731
        %v4861 = vunpack.c.l.b16 %v4732
        %v4862 = vunpack.c.l.b16 %v4733
        %v4863 = vunpack.c.l.b16 %v4734
        %v4864 = vunpack.c.l.b16 %v4735
        %v4865 = vunpack.c.l.b16 %v4736
        %v4866 = vunpack.c.l.b16 %v4737
        %v4867 = vunpack.c.l.b16 %v4738
        %v4868 = vunpack.c.l.b16 %v4739
        %v4869 = vunpack.c.l.b16 %v4740
        %v4870 = vunpack.c.l.b16 %v4741
        %v4871 = vunpack.c.l.b16 %v4742
        %v4872 = vunpack.c.l.b16 %v4743
        %v4873 = vunpack.c.l.b16 %v4744
        %v4874 = vunpack.c.l.b16 %v4745
        %v4875 = vunpack.c.l.b16 %v4746
        %v4876 = vunpack.c.l.b16 %v4747
        %v4877 = vunpack.c.l.b16 %v4748
        %v4878 = vunpack.c.l.b16 %v4749
        %v4879 = vunpack.c.l.b16 %v4750
        %v4880 = vunpack.c.l.b16 %v4751
        %v4881 = vunpack.c.l.b16 %v4752
        %v4882 = vunpack.c.l.b16 %v4753
        %v4883 = vunpack.c.l.b16 %v4754
        %v4884 = vunpack.c.l.b16 %v4755
        %v4885 = vunpack.c.l.b16 %v4756
        %v4886 = vunpack.c.l.b16 %v4757
        %v4887 = vunpack.c.l.b16 %v4758
        %v4888 = vunpack.c.l.b16 %v4759
        %v4889 = vunpack.c.l.b16 %v4760
        %v4890 = vunpack.c.l.b16 %v4761
        %v4891 = vunpack.c.l.b16 %v4762
        %v4892 = vunpack.c.l.b16 %v4763
        %v4893 = vunpack.c.l.b16 %v4764
        %v4894 = vunpack.c.l.b16 %v4765
        %v4895 = vunpack.c.l.b16 %v4766
        %v4896 = vunpack.c.l.b16 %v4767
        %v4897 = vunpack.c.l.b16 %v4768
        %v4898 = vpack.c.b16 %v4835, %v4834
        %v4899 = vpack.c.b16 %v4837, %v4836
        %v4900 = vpack.c.b16 %v4839, %v4838
        %v4901 = vpack.c.b16 %v4841, %v4840
        %v4902 = vpack.c.b16 %v4843, %v4842
        %v4903 = vpack.c.b16 %v4845, %v4844
        %v4904 = vpack.c.b16 %v4847, %v4846
        %v4905 = vpack.c.b16 %v4849, %v4848
        %v4906 = vpack.c.b16 %v4851, %v4850
        %v4907 = vpack.c.b16 %v4853, %v4852
        %v4908 = vpack.c.b16 %v4855, %v4854
        %v4909 = vpack.c.b16 %v4857, %v4856
        %v4910 = vpack.c.b16 %v4859, %v4858
        %v4911 = vpack.c.b16 %v4861, %v4860
        %v4912 = vpack.c.b16 %v4863, %v4862
        %v4913 = vpack.c.b16 %v4865, %v4864
        %v4914 = vpack.c.b16 %v4867, %v4866
        %v4915 = vpack.c.b16 %v4869, %v4868
        %v4916 = vpack.c.b16 %v4871, %v4870
        %v4917 = vpack.c.b16 %v4873, %v4872
        %v4918 = vpack.c.b16 %v4875, %v4874
        %v4919 = vpack.c.b16 %v4877, %v4876
        %v4920 = vpack.c.b16 %v4879, %v4878
        %v4921 = vpack.c.b16 %v4881, %v4880
        %v4922 = vpack.c.b16 %v4883, %v4882
        %v4923 = vpack.c.b16 %v4885, %v4884
        %v4924 = vpack.c.b16 %v4887, %v4886
        %v4925 = vpack.c.b16 %v4889, %v4888
        %v4926 = vpack.c.b16 %v4891, %v4890
        %v4927 = vpack.c.b16 %v4893, %v4892
        %v4928 = vpack.c.b16 %v4895, %v4894
        %v4929 = vpack.c.b16 %v4897, %v4896
        %4962 = vmatprep.subr.bf16.mxu0 0
        %4963 = vmatpush1.bf16.msra.mxu0 %v4905
        %4964 = vmatprep.subr.bf16.mxu0 0
        %4965 = vmatpush1.bf16.msra.mxu0 %v4904
        %4966 = vmatprep.subr.bf16.mxu0 0
        %4967 = vmatpush1.bf16.msra.mxu0 %v4903
        %4968 = vmatprep.subr.bf16.mxu0 0
        %4969 = vmatpush1.bf16.msra.mxu0 %v4902
        %4970 = vmatprep.subr.bf16.mxu0 0
        %4971 = vmatpush1.bf16.msra.mxu0 %v4901
        %4972 = vmatprep.subr.bf16.mxu0 0
        %4973 = vmatpush1.bf16.msra.mxu0 %v4900
        %4974 = vmatprep.subr.bf16.mxu0 0
        %4975 = vmatpush1.bf16.msra.mxu0 %v4899
        %4976 = vmatprep.subr.bf16.mxu0 0
        %4977 = vmatpush1.bf16.msra.mxu0 %v4898
        %4978 = vmatprep.subr.bf16.mxu0 0
        %4979 = vmatpush2.bf16.msra.mxu0 %v4913
        %4980 = vmatprep.subr.bf16.mxu0 0
        %4981 = vmatpush2.bf16.msra.mxu0 %v4912
        %4982 = vmatprep.subr.bf16.mxu0 0
        %4983 = vmatpush2.bf16.msra.mxu0 %v4911
        %4984 = vmatprep.subr.bf16.mxu0 0
        %4985 = vmatpush2.bf16.msra.mxu0 %v4910
        %4986 = vmatprep.subr.bf16.mxu0 0
        %4987 = vmatpush2.bf16.msra.mxu0 %v4909
        %4988 = vmatprep.subr.bf16.mxu0 0
        %4989 = vmatpush2.bf16.msra.mxu0 %v4908
        %4990 = vmatprep.subr.bf16.mxu0 0
        %4991 = vmatpush2.bf16.msra.mxu0 %v4907
        %4992 = vmatprep.subr.bf16.mxu0 0
        %4993 = vmatpush2.bf16.msra.mxu0 %v4906
        %4994 = vmatprep.mubr.bf16.mxu0 %v4702
        %4995 = vmatmul.mubr.bf16.gmra.mxu0 %v4701
        %v4996 = vpop.f32.mrf.mxu0
        %v4997 = vadd.f32 %v4769, %v4996
        %v4998 = vpop.f32.mrf.mxu0
        %v4999 = vpop.f32.mrf.mxu0
        %v5000 = vpop.f32.mrf.mxu0
        %5001 = vdwg.mxu0
        %5002 = vmatprep.subr.bf16.mxu0 0
        %5003 = vmatpush1.bf16.msra.mxu0 %v4921
        %5004 = vmatprep.subr.bf16.mxu0 0
        %5005 = vmatpush1.bf16.msra.mxu0 %v4920
        %5006 = vmatprep.subr.bf16.mxu0 0
        %5007 = vmatpush1.bf16.msra.mxu0 %v4919
        %5008 = vmatprep.subr.bf16.mxu0 0
        %5009 = vmatpush1.bf16.msra.mxu0 %v4918
        %5010 = vmatprep.subr.bf16.mxu0 0
        %5011 = vmatpush1.bf16.msra.mxu0 %v4917
        %5012 = vmatprep.subr.bf16.mxu0 0
        %5013 = vmatpush1.bf16.msra.mxu0 %v4916
        %5014 = vmatprep.subr.bf16.mxu0 0
        %5015 = vmatpush1.bf16.msra.mxu0 %v4915
        %5016 = vmatprep.subr.bf16.mxu0 0
        %5017 = vmatpush1.bf16.msra.mxu0 %v4914
        %5018 = vmatprep.subr.bf16.mxu0 0
        %5019 = vmatpush2.bf16.msra.mxu0 %v4929
        %5020 = vmatprep.subr.bf16.mxu0 0
        %5021 = vmatpush2.bf16.msra.mxu0 %v4928
        %5022 = vmatprep.subr.bf16.mxu0 0
        %5023 = vmatpush2.bf16.msra.mxu0 %v4927
        %5024 = vmatprep.subr.bf16.mxu0 0
        %5025 = vmatpush2.bf16.msra.mxu0 %v4926
        %5026 = vmatprep.subr.bf16.mxu0 0
        %5027 = vmatpush2.bf16.msra.mxu0 %v4925
        %5028 = vmatprep.subr.bf16.mxu0 0
        %5029 = vmatpush2.bf16.msra.mxu0 %v4924
        %5030 = vmatprep.subr.bf16.mxu0 0
        %5031 = vmatpush2.bf16.msra.mxu0 %v4923
        %5032 = vmatprep.subr.bf16.mxu0 0
        %5033 = vmatpush2.bf16.msra.mxu0 %v4922
        %5034 = vmatprep.mubr.bf16.mxu0 %v4704
        %5035 = vmatmul.mubr.bf16.gmra.mxu0 %v4703
        %v5036 = vpop.f32.mrf.mxu0
        %v5037 = vadd.f32 %v4997, %v5036
        %v5038 = vpop.f32.mrf.mxu0
        %v5039 = vpop.f32.mrf.mxu0
        %v5040 = vpop.f32.mrf.mxu0
        %5041 = vdwg.mxu0
        %5042 = vst [vmem:[%s540] sm:$0x1] %v5037
        %s5043 = sand.u32 %s401, 1
        %s5044 = scalar_lea.sflag [#allocation4], %s5043
        %s5045 = sand.u32 %s401, 1
        %s5046 = scalar_lea.vmem [#allocation3], %s5045
        // Predicated region
        $region89: #{efficientnet_classifier_forward.1} parent=87 // pred_check
          %p5047 = pneg %p411
        $region90: #{efficientnet_classifier_forward.1} parent=87 // pred_check_branch
          %5049 = sbr.rel (%p5047) target = $region92
        $region91: #{efficientnet_classifier_forward.1} parent=87 // pred_region
          %s5051 = ssub.s32 16, 16
          %5052 = vsyncadd %s5044, %s5051
          %s5053 = smul.addr %s31, 16
          %s5054 = scalar_lea.hbm %s17, %s5053
          %s5056 = sshll.u32 %s5046, 4
          %s5057 = int_to_ptr.vmem [resolvable:$true] %s5056
          %5059 = dma.vmem_to_hbm [thread:$0]  %s5057, 16, %s5054, %s5044
        $region92: #{efficientnet_classifier_forward.1} parent=87 // pred_fallthru
          _
      $region88: #{efficientnet_classifier_forward.1} parent=5 // pred_fallthru
        _
      %p5060 = scmp.le.s32.totalorder 2, %s26
      // Predicated region
      $region93: #{efficientnet_classifier_forward.1} parent=5 // pred_check
        %p5061 = pneg %p5060
      $region94: #{efficientnet_classifier_forward.1} parent=5 // pred_check_branch
        %5063 = sbr.rel (%p5061) target = $region96
      $region95: #{efficientnet_classifier_forward.1} parent=5 // pred_region
        %s5064 = ssub.s32 %s26, 2
        // Predicated region
        $region97: #{efficientnet_classifier_forward.1} parent=95 // pred_check
          %p5065 = pneg %p417
        $region98: #{efficientnet_classifier_forward.1} parent=95 // pred_check_branch
          %5067 = sbr.rel (%p5065) target = $region100
        $region99: #{efficientnet_classifier_forward.1} parent=95 // pred_region
          %s5068 = sand.u32 %s402, 1
          %s5069 = scalar_lea.sflag [#allocation4], %s5068
          %s5070 = sand.u32 %s402, 1
          %s5071 = scalar_lea.vmem [#allocation3], %s5070
          %5072 = dma.done %s5069, 16
        $region100: #{efficientnet_classifier_forward.1} parent=95 // pred_fallthru
          _
      $region96: #{efficientnet_classifier_forward.1} parent=5 // pred_fallthru
        _
    $region6: #{efficientnet_classifier_forward.1} parent=1 // loop_footer
      %s30 = sadd.s32 1, %s26
    $region7: #{efficientnet_classifier_forward.1} parent=1 // loop_footer_branch
      %25 = sbr.rel target = $region3
    $region8: #{efficientnet_classifier_forward.1} parent=1 // loop_exit
      _
    %5073 = vsyncpa [#allocation4], 1
    %s5074 = scalar_lea.sflag [#allocation4], 1
    %5075 = vsyncpa %s5074, 1

</llo_original>
